<compile_context>
chip_gen: v6e
topology: v6e:2x2x1
jax: 0.10.0
libtpu: 0.0.40
codegen_flags: <defaults>
</compile_context>

<pallas_src>
import functools

import jax
import jax.numpy as jnp
import numpy as np
from jax.experimental import pallas as pl
from jax.experimental.pallas import tpu as pltpu


def _round_up(x, m):
    return ((x + m - 1) // m) * m


# ------------------------------ kernel ---------------------------------------


def _gru_encoder_kernel(num_layers, seq_len, batch_p, hid_p, *refs):
    """Multi-layer GRU (embedding pre-folded); writes the final hidden state of every layer.

    refs layout (all VMEM, f32, gate-block-padded):
      x_ref     : (T*Bp, D)     time-major flattened input, batch rows padded to Bp
      wcomb_ref : (D, 3*Hp)     wemb @ wih0, gate g at lanes [g*Hp, g*Hp+H)
      bcomb_ref : (1, 3*Hp)     bemb @ wih0 + b_ih0 + b_hh0[r,z]
      whh0_ref  : (Hp, 3*Hp)    layer-0 hidden->gates
      bhn0_ref  : (1, Hp)       layer-0 b_hn (stays inside the r * (...) term)
      per layer k >= 1 (4 refs):
        wih_ref : (Hp, 3*Hp)    input->gates
        bx_ref  : (1, 3*Hp)     b_ih + b_hh[r,z]
        whh_ref : (Hp, 3*Hp)    hidden->gates
        bhn_ref : (1, Hp)       b_hn
      out_ref   : (L, Bp, Hp)
    """
    T, Bp, Hp, L = seq_len, batch_p, hid_p, num_layers
    x_ref, wcomb_ref, bcomb_ref, whh0_ref, bhn0_ref = refs[:5]
    layer_refs = refs[5:5 + 4 * (L - 1)]
    out_ref = refs[5 + 4 * (L - 1)]

    # Layer-0 input projection for ALL timesteps in one MXU matmul (off the serial chain);
    # embedding, input->gate weights and input-side biases are already folded into wcomb/bcomb.
    gx0_all = (
        jnp.dot(x_ref[...], wcomb_ref[...], preferred_element_type=jnp.float32)
        + bcomb_ref[...]
    )  # (T*Bp, 3*Hp)

    # Load loop-invariant weights once; hoist every broadcast out of the time loop
    # (JAX does not CSE broadcast_in_dim).
    whh = [whh0_ref[...]]
    bhn = [jnp.broadcast_to(bhn0_ref[...], (Bp, Hp))]
    wih = [None]
    bx = [None]
    for k in range(L - 1):
        wih.append(layer_refs[4 * k + 0][...])
        bx.append(jnp.broadcast_to(layer_refs[4 * k + 1][...], (Bp, 3 * Hp)))
        whh.append(layer_refs[4 * k + 2][...])
        bhn.append(jnp.broadcast_to(layer_refs[4 * k + 3][...], (Bp, Hp)))

    def cell(gx, h, w_hh, b_hn):
        gh = jnp.dot(h, w_hh, preferred_element_type=jnp.float32)  # the only matmul on the chain
        r = jax.nn.sigmoid(gx[:, 0 * Hp:1 * Hp] + gh[:, 0 * Hp:1 * Hp])
        z = jax.nn.sigmoid(gx[:, 1 * Hp:2 * Hp] + gh[:, 1 * Hp:2 * Hp])
        n = jnp.tanh(gx[:, 2 * Hp:3 * Hp] + r * (gh[:, 2 * Hp:3 * Hp] + b_hn))
        return (1.0 - z) * n + z * h

    h = [jnp.zeros((Bp, Hp), jnp.float32) for _ in range(L)]
    for t in range(T):  # short fixed trip count -> static unroll (wavefront across layers)
        gx0 = gx0_all[t * Bp:(t + 1) * Bp, :]  # 8-sublane-aligned static slice
        h[0] = cell(gx0, h[0], whh[0], bhn[0])
        for k in range(1, L):
            # Per-step input projection for the next layer (no concat barrier between layers);
            # h[k] @ whh[k] inside `cell` is independent of layer k-1's step t and can overlap.
            gxk = jnp.dot(h[k - 1], wih[k], preferred_element_type=jnp.float32) + bx[k]
            h[k] = cell(gxk, h[k], whh[k], bhn[k])

    # Single lane-dense bulk store (multiple of (8, 128) on the last two dims -> unmasked vst).
    out_ref[...] = jnp.stack(h, axis=0)  # (L, Bp, Hp)


# ------------------------------ wrapper ---------------------------------------


def _prepare_kernel_inputs(encode_input, params):
    """Layout plumbing + weight folding (one-time prep, HIGHEST precision)."""
    B, T, D = encode_input.shape
    L = len(params["layers"])
    H = params["layers"][0]["whh"].shape[0]
    Bp = max(8, _round_up(B, 8))       # sublane-tile batch padding
    Hp = _round_up(H, 128)             # one 128-lane block per gate
    hi = jax.lax.Precision.HIGHEST

    def pad_gate_cols(w):
        # (..., 3H) -> (..., 3*Hp) with gate g occupying lanes [g*Hp, g*Hp + H); rest zero.
        zero = jnp.zeros(w.shape[:-1] + (Hp - H,), w.dtype)
        parts = []
        for g in range(3):
            parts += [w[..., g * H:(g + 1) * H], zero]
        return jnp.concatenate(parts, axis=-1)

    def pad_rows(w):
        return jnp.concatenate(
            [w, jnp.zeros((Hp - w.shape[0], w.shape[1]), w.dtype)], axis=0)

    # Time-major, batch padded to Bp with zero rows, flattened so row t*Bp + b = (t, b).
    x_tm = jnp.transpose(encode_input, (1, 0, 2))        # (T, B, D)
    x_tm = jnp.pad(x_tm, ((0, 0), (0, Bp - B), (0, 0)))  # (T, Bp, D)
    x_tm = x_tm.reshape(T * Bp, D)

    l0 = params["layers"][0]
    # Fold the embedding into layer-0's input projection; fold b_ir/b_iz/b_in + b_hr/b_hz too.
    wcomb = jnp.dot(params["wemb"], l0["wih"], precision=hi)                 # (D, 3H)
    bcomb = (jnp.dot(params["bemb"], l0["wih"], precision=hi)
             + l0["b_ih"]
             + l0["b_hh"].at[:, 2 * H:].set(0.0))                            # (1, 3H)

    inputs = [
        x_tm,
        pad_gate_cols(wcomb),
        pad_gate_cols(bcomb),
        pad_gate_cols(pad_rows(l0["whh"])),
        jnp.pad(l0["b_hh"][:, 2 * H:], ((0, 0), (0, Hp - H))),
    ]
    for lp in params["layers"][1:]:
        bxk = lp["b_ih"] + lp["b_hh"].at[:, 2 * H:].set(0.0)
        inputs += [
            pad_gate_cols(pad_rows(lp["wih"])),
            pad_gate_cols(bxk),
            pad_gate_cols(pad_rows(lp["whh"])),
            jnp.pad(lp["b_hh"][:, 2 * H:], ((0, 0), (0, Hp - H))),
        ]
    return inputs, (L, B, H, Bp, Hp, T)


def encoder_forward(encode_input, params):
    """encode_input: (B, T, input_dim) batch-first, as in the PyTorch module.

    Returns last_hidden of shape (num_layers, B, latent_dim), matching nn.GRU's h_n.
    """
    inputs, (L, B, H, Bp, Hp, T) = _prepare_kernel_inputs(encode_input, params)

    vmem_spec = pl.BlockSpec(memory_space=pltpu.MemorySpace.VMEM)
    kernel = functools.partial(_gru_encoder_kernel, L, T, Bp, Hp)

    out_padded = pl.pallas_call(
        kernel,
        out_shape=jax.ShapeDtypeStruct((L, Bp, Hp), jnp.float32),
        in_specs=[vmem_spec] * len(inputs),
        out_specs=vmem_spec,
    )(*inputs)

    # Padded batch rows / hidden lanes are scratch; only the real ones are returned.
    return out_padded[:, :B, :H]


# ------------------------------ pure-JAX reference ----------------------------


def encoder_reference(encode_input, params):
    B, T, D = encode_input.shape
    H = params["layers"][0]["whh"].shape[0]
    hi = jax.lax.Precision.HIGHEST

    emb = jnp.dot(encode_input, params["wemb"], precision=hi) + params["bemb"]  # (B, T, E)

    seq = emb
    last = []
    for lp in params["layers"]:
        h = jnp.zeros((B, H), jnp.float32)
        outs = []
        for t in range(T):
            xt = seq[:, t, :]
            gi = jnp.dot(xt, lp["wih"], precision=hi) + lp["b_ih"]
            gh = jnp.dot(h, lp["whh"], precision=hi) + lp["b_hh"]
            r = jax.nn.sigmoid(gi[:, 0 * H:1 * H] + gh[:, 0 * H:1 * H])
            z = jax.nn.sigmoid(gi[:, 1 * H:2 * H] + gh[:, 1 * H:2 * H])
            n = jnp.tanh(gi[:, 2 * H:3 * H] + r * gh[:, 2 * H:3 * H])
            h = (1.0 - z) * n + z * h
            outs.append(h)
        seq = jnp.stack(outs, axis=1)  # (B, T, H) feeds the next layer
        last.append(h)
    return jnp.stack(last, axis=0)  # (num_layers, B, H)


# ------------------------------ params ----------------------------------------


def _init_params(key, input_dim, embed_dim, latent_dim, num_layers):
    keys = iter(jax.random.split(key, 2 + 4 * num_layers))
    u = lambda kk, shape, bound: jax.random.uniform(kk, shape, jnp.float32, -bound, bound)

    ke = 1.0 / np.sqrt(input_dim)
    kh = 1.0 / np.sqrt(latent_dim)
    params = {
        "wemb": u(next(keys), (input_dim, embed_dim), ke),
        "bemb": u(next(keys), (1, embed_dim), ke),
        "layers": [],
    }
    in_dim = embed_dim
    H = latent_dim
    for _ in range(num_layers):
        params["layers"].append({
            "wih": u(next(keys), (in_dim, 3 * H), kh),
            "whh": u(next(keys), (H, 3 * H), kh),
            "b_ih": u(next(keys), (1, 3 * H), kh),
            "b_hh": u(next(keys), (1, 3 * H), kh),
        })
        in_dim = H
    return params


# ------------------------------ main ------------------------------------------


if __name__ == "__main__":
    batch, seq_len = 2, 8
    input_dim, embed_dim, latent_dim, num_layers = 16, 32, 32, 2

    root = jax.random.PRNGKey(0)
    k_x, k_p = jax.random.split(root)

    encode_input = jax.random.normal(k_x, (batch, seq_len, input_dim), jnp.float32)
    params = _init_params(k_p, input_dim, embed_dim, latent_dim, num_layers)

    out = encoder_forward(encode_input, params)
    out = jax.block_until_ready(out)

    ref = encoder_reference(encode_input, params)
    np.testing.assert_allclose(np.asarray(out), np.asarray(ref), rtol=2e-4, atol=2e-5)

    assert out.shape == (num_layers, batch, latent_dim)
    print("KERNEL_OK")
</pallas_src>

<mosaic_0001>
module attributes {stable_mosaic.version = 11 : i64} {
  func.func @_gru_encoder_kernel(%arg0: memref<64x16xf32, #tpu.memory_space<vmem>>, %arg1: memref<16x384xf32, #tpu.memory_space<vmem>>, %arg2: memref<1x384xf32, #tpu.memory_space<vmem>>, %arg3: memref<128x384xf32, #tpu.memory_space<vmem>>, %arg4: memref<1x128xf32, #tpu.memory_space<vmem>>, %arg5: memref<128x384xf32, #tpu.memory_space<vmem>>, %arg6: memref<1x384xf32, #tpu.memory_space<vmem>>, %arg7: memref<128x384xf32, #tpu.memory_space<vmem>>, %arg8: memref<1x128xf32, #tpu.memory_space<vmem>>, %arg9: memref<2x8x128xf32, #tpu.memory_space<vmem>>) attributes {dimension_semantics = [], scalar_prefetch = 0 : i64, scratch_operands = 0 : i64, tpu.core_type = #tpu.core_type<tc>} {
    %c0 = arith.constant 0 : index
    %c0_0 = arith.constant 0 : index
    %0 = vector.load %arg0[%c0, %c0_0] : memref<64x16xf32, #tpu.memory_space<vmem>>, vector<64x16xf32>
    %c0_1 = arith.constant 0 : index
    %c0_2 = arith.constant 0 : index
    %1 = vector.load %arg1[%c0_1, %c0_2] : memref<16x384xf32, #tpu.memory_space<vmem>>, vector<16x384xf32>
    %cst = arith.constant dense<0.000000e+00> : vector<64x384xf32>
    %2 = tpu.matmul %0, %1, %cst {dimension_numbers = #tpu.dot_dimension_numbers<[1], [0], [0], [1], [0, 0, 1, 1], [], []>} : vector<64x16xf32>, vector<16x384xf32>, vector<64x384xf32> -> vector<64x384xf32>
    %c0_3 = arith.constant 0 : index
    %c0_4 = arith.constant 0 : index
    %3 = vector.load %arg2[%c0_3, %c0_4] : memref<1x384xf32, #tpu.memory_space<vmem>>, vector<1x384xf32>
    %4 = vector.broadcast %3 : vector<1x384xf32> to vector<64x384xf32>
    %5 = arith.addf %2, %4 : vector<64x384xf32>
    %c0_5 = arith.constant 0 : index
    %c0_6 = arith.constant 0 : index
    %6 = vector.load %arg3[%c0_5, %c0_6] : memref<128x384xf32, #tpu.memory_space<vmem>>, vector<128x384xf32>
    %c0_7 = arith.constant 0 : index
    %c0_8 = arith.constant 0 : index
    %7 = vector.load %arg4[%c0_7, %c0_8] : memref<1x128xf32, #tpu.memory_space<vmem>>, vector<1x128xf32>
    %8 = vector.shape_cast %7 : vector<1x128xf32> to vector<1x128xf32>
    %9 = vector.broadcast %8 : vector<1x128xf32> to vector<8x128xf32>
    %c0_9 = arith.constant 0 : index
    %c0_10 = arith.constant 0 : index
    %10 = vector.load %arg5[%c0_9, %c0_10] : memref<128x384xf32, #tpu.memory_space<vmem>>, vector<128x384xf32>
    %c0_11 = arith.constant 0 : index
    %c0_12 = arith.constant 0 : index
    %11 = vector.load %arg6[%c0_11, %c0_12] : memref<1x384xf32, #tpu.memory_space<vmem>>, vector<1x384xf32>
    %12 = vector.shape_cast %11 : vector<1x384xf32> to vector<1x384xf32>
    %13 = vector.broadcast %12 : vector<1x384xf32> to vector<8x384xf32>
    %c0_13 = arith.constant 0 : index
    %c0_14 = arith.constant 0 : index
    %14 = vector.load %arg7[%c0_13, %c0_14] : memref<128x384xf32, #tpu.memory_space<vmem>>, vector<128x384xf32>
    %c0_15 = arith.constant 0 : index
    %c0_16 = arith.constant 0 : index
    %15 = vector.load %arg8[%c0_15, %c0_16] : memref<1x128xf32, #tpu.memory_space<vmem>>, vector<1x128xf32>
    %16 = vector.shape_cast %15 : vector<1x128xf32> to vector<1x128xf32>
    %17 = vector.broadcast %16 : vector<1x128xf32> to vector<8x128xf32>
    %cst_17 = arith.constant 0.000000e+00 : f32
    %18 = vector.broadcast %cst_17 : f32 to vector<8x128xf32>
    %cst_18 = arith.constant 0.000000e+00 : f32
    %19 = vector.broadcast %cst_18 : f32 to vector<8x128xf32>
    %20 = vector.extract_strided_slice %5 {offsets = [0, 0], sizes = [8, 384], strides = [1, 1]} : vector<64x384xf32> to vector<8x384xf32>
    %cst_19 = arith.constant dense<0.000000e+00> : vector<8x384xf32>
    %21 = tpu.matmul %18, %6, %cst_19 {dimension_numbers = #tpu.dot_dimension_numbers<[1], [0], [0], [1], [0, 0, 1, 1], [], []>} : vector<8x128xf32>, vector<128x384xf32>, vector<8x384xf32> -> vector<8x384xf32>
    %22 = vector.extract_strided_slice %20 {offsets = [0, 0], sizes = [8, 128], strides = [1, 1]} : vector<8x384xf32> to vector<8x128xf32>
    %23 = vector.extract_strided_slice %21 {offsets = [0, 0], sizes = [8, 128], strides = [1, 1]} : vector<8x384xf32> to vector<8x128xf32>
    %24 = arith.addf %22, %23 : vector<8x128xf32>
    %25 = arith.negf %24 : vector<8x128xf32>
    %26 = math.exp %25 : vector<8x128xf32>
    %cst_20 = arith.constant 1.000000e+00 : f32
    %27 = vector.broadcast %cst_20 : f32 to vector<8x128xf32>
    %28 = arith.addf %27, %26 : vector<8x128xf32>
    %29 = arith.divf %27, %28 : vector<8x128xf32>
    %30 = vector.extract_strided_slice %20 {offsets = [0, 128], sizes = [8, 128], strides = [1, 1]} : vector<8x384xf32> to vector<8x128xf32>
    %31 = vector.extract_strided_slice %21 {offsets = [0, 128], sizes = [8, 128], strides = [1, 1]} : vector<8x384xf32> to vector<8x128xf32>
    %32 = arith.addf %30, %31 : vector<8x128xf32>
    %33 = arith.negf %32 : vector<8x128xf32>
    %34 = math.exp %33 : vector<8x128xf32>
    %cst_21 = arith.constant 1.000000e+00 : f32
    %35 = vector.broadcast %cst_21 : f32 to vector<8x128xf32>
    %36 = arith.addf %35, %34 : vector<8x128xf32>
    %37 = arith.divf %35, %36 : vector<8x128xf32>
    %38 = vector.extract_strided_slice %20 {offsets = [0, 256], sizes = [8, 128], strides = [1, 1]} : vector<8x384xf32> to vector<8x128xf32>
    %39 = vector.extract_strided_slice %21 {offsets = [0, 256], sizes = [8, 128], strides = [1, 1]} : vector<8x384xf32> to vector<8x128xf32>
    %40 = arith.addf %39, %9 : vector<8x128xf32>
    %41 = arith.mulf %29, %40 : vector<8x128xf32>
    %42 = arith.addf %38, %41 : vector<8x128xf32>
    %43 = math.tanh %42 : vector<8x128xf32>
    %cst_22 = arith.constant 1.000000e+00 : f32
    %44 = vector.broadcast %cst_22 : f32 to vector<8x128xf32>
    %45 = arith.subf %44, %37 : vector<8x128xf32>
    %46 = arith.mulf %45, %43 : vector<8x128xf32>
    %47 = arith.mulf %37, %18 : vector<8x128xf32>
    %48 = arith.addf %46, %47 : vector<8x128xf32>
    %cst_23 = arith.constant dense<0.000000e+00> : vector<8x384xf32>
    %49 = tpu.matmul %48, %10, %cst_23 {dimension_numbers = #tpu.dot_dimension_numbers<[1], [0], [0], [1], [0, 0, 1, 1], [], []>} : vector<8x128xf32>, vector<128x384xf32>, vector<8x384xf32> -> vector<8x384xf32>
    %50 = arith.addf %49, %13 : vector<8x384xf32>
    %cst_24 = arith.constant dense<0.000000e+00> : vector<8x384xf32>
    %51 = tpu.matmul %19, %14, %cst_24 {dimension_numbers = #tpu.dot_dimension_numbers<[1], [0], [0], [1], [0, 0, 1, 1], [], []>} : vector<8x128xf32>, vector<128x384xf32>, vector<8x384xf32> -> vector<8x384xf32>
    %52 = vector.extract_strided_slice %50 {offsets = [0, 0], sizes = [8, 128], strides = [1, 1]} : vector<8x384xf32> to vector<8x128xf32>
    %53 = vector.extract_strided_slice %51 {offsets = [0, 0], sizes = [8, 128], strides = [1, 1]} : vector<8x384xf32> to vector<8x128xf32>
    %54 = arith.addf %52, %53 : vector<8x128xf32>
    %55 = arith.negf %54 : vector<8x128xf32>
    %56 = math.exp %55 : vector<8x128xf32>
    %cst_25 = arith.constant 1.000000e+00 : f32
    %57 = vector.broadcast %cst_25 : f32 to vector<8x128xf32>
    %58 = arith.addf %57, %56 : vector<8x128xf32>
    %59 = arith.divf %57, %58 : vector<8x128xf32>
    %60 = vector.extract_strided_slice %50 {offsets = [0, 128], sizes = [8, 128], strides = [1, 1]} : vector<8x384xf32> to vector<8x128xf32>
    %61 = vector.extract_strided_slice %51 {offsets = [0, 128], sizes = [8, 128], strides = [1, 1]} : vector<8x384xf32> to vector<8x128xf32>
    %62 = arith.addf %60, %61 : vector<8x128xf32>
    %63 = arith.negf %62 : vector<8x128xf32>
    %64 = math.exp %63 : vector<8x128xf32>
    %cst_26 = arith.constant 1.000000e+00 : f32
    %65 = vector.broadcast %cst_26 : f32 to vector<8x128xf32>
    %66 = arith.addf %65, %64 : vector<8x128xf32>
    %67 = arith.divf %65, %66 : vector<8x128xf32>
    %68 = vector.extract_strided_slice %50 {offsets = [0, 256], sizes = [8, 128], strides = [1, 1]} : vector<8x384xf32> to vector<8x128xf32>
    %69 = vector.extract_strided_slice %51 {offsets = [0, 256], sizes = [8, 128], strides = [1, 1]} : vector<8x384xf32> to vector<8x128xf32>
    %70 = arith.addf %69, %17 : vector<8x128xf32>
    %71 = arith.mulf %59, %70 : vector<8x128xf32>
    %72 = arith.addf %68, %71 : vector<8x128xf32>
    %73 = math.tanh %72 : vector<8x128xf32>
    %cst_27 = arith.constant 1.000000e+00 : f32
    %74 = vector.broadcast %cst_27 : f32 to vector<8x128xf32>
    %75 = arith.subf %74, %67 : vector<8x128xf32>
    %76 = arith.mulf %75, %73 : vector<8x128xf32>
    %77 = arith.mulf %67, %19 : vector<8x128xf32>
    %78 = arith.addf %76, %77 : vector<8x128xf32>
    %79 = vector.extract_strided_slice %5 {offsets = [8, 0], sizes = [8, 384], strides = [1, 1]} : vector<64x384xf32> to vector<8x384xf32>
    %cst_28 = arith.constant dense<0.000000e+00> : vector<8x384xf32>
    %80 = tpu.matmul %48, %6, %cst_28 {dimension_numbers = #tpu.dot_dimension_numbers<[1], [0], [0], [1], [0, 0, 1, 1], [], []>} : vector<8x128xf32>, vector<128x384xf32>, vector<8x384xf32> -> vector<8x384xf32>
    %81 = vector.extract_strided_slice %79 {offsets = [0, 0], sizes = [8, 128], strides = [1, 1]} : vector<8x384xf32> to vector<8x128xf32>
    %82 = vector.extract_strided_slice %80 {offsets = [0, 0], sizes = [8, 128], strides = [1, 1]} : vector<8x384xf32> to vector<8x128xf32>
    %83 = arith.addf %81, %82 : vector<8x128xf32>
    %84 = arith.negf %83 : vector<8x128xf32>
    %85 = math.exp %84 : vector<8x128xf32>
    %cst_29 = arith.constant 1.000000e+00 : f32
    %86 = vector.broadcast %cst_29 : f32 to vector<8x128xf32>
    %87 = arith.addf %86, %85 : vector<8x128xf32>
    %88 = arith.divf %86, %87 : vector<8x128xf32>
    %89 = vector.extract_strided_slice %79 {offsets = [0, 128], sizes = [8, 128], strides = [1, 1]} : vector<8x384xf32> to vector<8x128xf32>
    %90 = vector.extract_strided_slice %80 {offsets = [0, 128], sizes = [8, 128], strides = [1, 1]} : vector<8x384xf32> to vector<8x128xf32>
    %91 = arith.addf %89, %90 : vector<8x128xf32>
    %92 = arith.negf %91 : vector<8x128xf32>
    %93 = math.exp %92 : vector<8x128xf32>
    %cst_30 = arith.constant 1.000000e+00 : f32
    %94 = vector.broadcast %cst_30 : f32 to vector<8x128xf32>
    %95 = arith.addf %94, %93 : vector<8x128xf32>
    %96 = arith.divf %94, %95 : vector<8x128xf32>
    %97 = vector.extract_strided_slice %79 {offsets = [0, 256], sizes = [8, 128], strides = [1, 1]} : vector<8x384xf32> to vector<8x128xf32>
    %98 = vector.extract_strided_slice %80 {offsets = [0, 256], sizes = [8, 128], strides = [1, 1]} : vector<8x384xf32> to vector<8x128xf32>
    %99 = arith.addf %98, %9 : vector<8x128xf32>
    %100 = arith.mulf %88, %99 : vector<8x128xf32>
    %101 = arith.addf %97, %100 : vector<8x128xf32>
    %102 = math.tanh %101 : vector<8x128xf32>
    %cst_31 = arith.constant 1.000000e+00 : f32
    %103 = vector.broadcast %cst_31 : f32 to vector<8x128xf32>
    %104 = arith.subf %103, %96 : vector<8x128xf32>
    %105 = arith.mulf %104, %102 : vector<8x128xf32>
    %106 = arith.mulf %96, %48 : vector<8x128xf32>
    %107 = arith.addf %105, %106 : vector<8x128xf32>
    %cst_32 = arith.constant dense<0.000000e+00> : vector<8x384xf32>
    %108 = tpu.matmul %107, %10, %cst_32 {dimension_numbers = #tpu.dot_dimension_numbers<[1], [0], [0], [1], [0, 0, 1, 1], [], []>} : vector<8x128xf32>, vector<128x384xf32>, vector<8x384xf32> -> vector<8x384xf32>
    %109 = arith.addf %108, %13 : vector<8x384xf32>
    %cst_33 = arith.constant dense<0.000000e+00> : vector<8x384xf32>
    %110 = tpu.matmul %78, %14, %cst_33 {dimension_numbers = #tpu.dot_dimension_numbers<[1], [0], [0], [1], [0, 0, 1, 1], [], []>} : vector<8x128xf32>, vector<128x384xf32>, vector<8x384xf32> -> vector<8x384xf32>
    %111 = vector.extract_strided_slice %109 {offsets = [0, 0], sizes = [8, 128], strides = [1, 1]} : vector<8x384xf32> to vector<8x128xf32>
    %112 = vector.extract_strided_slice %110 {offsets = [0, 0], sizes = [8, 128], strides = [1, 1]} : vector<8x384xf32> to vector<8x128xf32>
    %113 = arith.addf %111, %112 : vector<8x128xf32>
    %114 = arith.negf %113 : vector<8x128xf32>
    %115 = math.exp %114 : vector<8x128xf32>
    %cst_34 = arith.constant 1.000000e+00 : f32
    %116 = vector.broadcast %cst_34 : f32 to vector<8x128xf32>
    %117 = arith.addf %116, %115 : vector<8x128xf32>
    %118 = arith.divf %116, %117 : vector<8x128xf32>
    %119 = vector.extract_strided_slice %109 {offsets = [0, 128], sizes = [8, 128], strides = [1, 1]} : vector<8x384xf32> to vector<8x128xf32>
    %120 = vector.extract_strided_slice %110 {offsets = [0, 128], sizes = [8, 128], strides = [1, 1]} : vector<8x384xf32> to vector<8x128xf32>
    %121 = arith.addf %119, %120 : vector<8x128xf32>
    %122 = arith.negf %121 : vector<8x128xf32>
    %123 = math.exp %122 : vector<8x128xf32>
    %cst_35 = arith.constant 1.000000e+00 : f32
    %124 = vector.broadcast %cst_35 : f32 to vector<8x128xf32>
    %125 = arith.addf %124, %123 : vector<8x128xf32>
    %126 = arith.divf %124, %125 : vector<8x128xf32>
    %127 = vector.extract_strided_slice %109 {offsets = [0, 256], sizes = [8, 128], strides = [1, 1]} : vector<8x384xf32> to vector<8x128xf32>
    %128 = vector.extract_strided_slice %110 {offsets = [0, 256], sizes = [8, 128], strides = [1, 1]} : vector<8x384xf32> to vector<8x128xf32>
    %129 = arith.addf %128, %17 : vector<8x128xf32>
    %130 = arith.mulf %118, %129 : vector<8x128xf32>
    %131 = arith.addf %127, %130 : vector<8x128xf32>
    %132 = math.tanh %131 : vector<8x128xf32>
    %cst_36 = arith.constant 1.000000e+00 : f32
    %133 = vector.broadcast %cst_36 : f32 to vector<8x128xf32>
    %134 = arith.subf %133, %126 : vector<8x128xf32>
    %135 = arith.mulf %134, %132 : vector<8x128xf32>
    %136 = arith.mulf %126, %78 : vector<8x128xf32>
    %137 = arith.addf %135, %136 : vector<8x128xf32>
    %138 = vector.extract_strided_slice %5 {offsets = [16, 0], sizes = [8, 384], strides = [1, 1]} : vector<64x384xf32> to vector<8x384xf32>
    %cst_37 = arith.constant dense<0.000000e+00> : vector<8x384xf32>
    %139 = tpu.matmul %107, %6, %cst_37 {dimension_numbers = #tpu.dot_dimension_numbers<[1], [0], [0], [1], [0, 0, 1, 1], [], []>} : vector<8x128xf32>, vector<128x384xf32>, vector<8x384xf32> -> vector<8x384xf32>
    %140 = vector.extract_strided_slice %138 {offsets = [0, 0], sizes = [8, 128], strides = [1, 1]} : vector<8x384xf32> to vector<8x128xf32>
    %141 = vector.extract_strided_slice %139 {offsets = [0, 0], sizes = [8, 128], strides = [1, 1]} : vector<8x384xf32> to vector<8x128xf32>
    %142 = arith.addf %140, %141 : vector<8x128xf32>
    %143 = arith.negf %142 : vector<8x128xf32>
    %144 = math.exp %143 : vector<8x128xf32>
    %cst_38 = arith.constant 1.000000e+00 : f32
    %145 = vector.broadcast %cst_38 : f32 to vector<8x128xf32>
    %146 = arith.addf %145, %144 : vector<8x128xf32>
    %147 = arith.divf %145, %146 : vector<8x128xf32>
    %148 = vector.extract_strided_slice %138 {offsets = [0, 128], sizes = [8, 128], strides = [1, 1]} : vector<8x384xf32> to vector<8x128xf32>
    %149 = vector.extract_strided_slice %139 {offsets = [0, 128], sizes = [8, 128], strides = [1, 1]} : vector<8x384xf32> to vector<8x128xf32>
    %150 = arith.addf %148, %149 : vector<8x128xf32>
    %151 = arith.negf %150 : vector<8x128xf32>
    %152 = math.exp %151 : vector<8x128xf32>
    %cst_39 = arith.constant 1.000000e+00 : f32
    %153 = vector.broadcast %cst_39 : f32 to vector<8x128xf32>
    %154 = arith.addf %153, %152 : vector<8x128xf32>
    %155 = arith.divf %153, %154 : vector<8x128xf32>
    %156 = vector.extract_strided_slice %138 {offsets = [0, 256], sizes = [8, 128], strides = [1, 1]} : vector<8x384xf32> to vector<8x128xf32>
    %157 = vector.extract_strided_slice %139 {offsets = [0, 256], sizes = [8, 128], strides = [1, 1]} : vector<8x384xf32> to vector<8x128xf32>
    %158 = arith.addf %157, %9 : vector<8x128xf32>
    %159 = arith.mulf %147, %158 : vector<8x128xf32>
    %160 = arith.addf %156, %159 : vector<8x128xf32>
    %161 = math.tanh %160 : vector<8x128xf32>
    %cst_40 = arith.constant 1.000000e+00 : f32
    %162 = vector.broadcast %cst_40 : f32 to vector<8x128xf32>
    %163 = arith.subf %162, %155 : vector<8x128xf32>
    %164 = arith.mulf %163, %161 : vector<8x128xf32>
    %165 = arith.mulf %155, %107 : vector<8x128xf32>
    %166 = arith.addf %164, %165 : vector<8x128xf32>
    %cst_41 = arith.constant dense<0.000000e+00> : vector<8x384xf32>
    %167 = tpu.matmul %166, %10, %cst_41 {dimension_numbers = #tpu.dot_dimension_numbers<[1], [0], [0], [1], [0, 0, 1, 1], [], []>} : vector<8x128xf32>, vector<128x384xf32>, vector<8x384xf32> -> vector<8x384xf32>
    %168 = arith.addf %167, %13 : vector<8x384xf32>
    %cst_42 = arith.constant dense<0.000000e+00> : vector<8x384xf32>
    %169 = tpu.matmul %137, %14, %cst_42 {dimension_numbers = #tpu.dot_dimension_numbers<[1], [0], [0], [1], [0, 0, 1, 1], [], []>} : vector<8x128xf32>, vector<128x384xf32>, vector<8x384xf32> -> vector<8x384xf32>
    %170 = vector.extract_strided_slice %168 {offsets = [0, 0], sizes = [8, 128], strides = [1, 1]} : vector<8x384xf32> to vector<8x128xf32>
    %171 = vector.extract_strided_slice %169 {offsets = [0, 0], sizes = [8, 128], strides = [1, 1]} : vector<8x384xf32> to vector<8x128xf32>
    %172 = arith.addf %170, %171 : vector<8x128xf32>
    %173 = arith.negf %172 : vector<8x128xf32>
    %174 = math.exp %173 : vector<8x128xf32>
    %cst_43 = arith.constant 1.000000e+00 : f32
    %175 = vector.broadcast %cst_43 : f32 to vector<8x128xf32>
    %176 = arith.addf %175, %174 : vector<8x128xf32>
    %177 = arith.divf %175, %176 : vector<8x128xf32>
    %178 = vector.extract_strided_slice %168 {offsets = [0, 128], sizes = [8, 128], strides = [1, 1]} : vector<8x384xf32> to vector<8x128xf32>
    %179 = vector.extract_strided_slice %169 {offsets = [0, 128], sizes = [8, 128], strides = [1, 1]} : vector<8x384xf32> to vector<8x128xf32>
    %180 = arith.addf %178, %179 : vector<8x128xf32>
    %181 = arith.negf %180 : vector<8x128xf32>
    %182 = math.exp %181 : vector<8x128xf32>
    %cst_44 = arith.constant 1.000000e+00 : f32
    %183 = vector.broadcast %cst_44 : f32 to vector<8x128xf32>
    %184 = arith.addf %183, %182 : vector<8x128xf32>
    %185 = arith.divf %183, %184 : vector<8x128xf32>
    %186 = vector.extract_strided_slice %168 {offsets = [0, 256], sizes = [8, 128], strides = [1, 1]} : vector<8x384xf32> to vector<8x128xf32>
    %187 = vector.extract_strided_slice %169 {offsets = [0, 256], sizes = [8, 128], strides = [1, 1]} : vector<8x384xf32> to vector<8x128xf32>
    %188 = arith.addf %187, %17 : vector<8x128xf32>
    %189 = arith.mulf %177, %188 : vector<8x128xf32>
    %190 = arith.addf %186, %189 : vector<8x128xf32>
    %191 = math.tanh %190 : vector<8x128xf32>
    %cst_45 = arith.constant 1.000000e+00 : f32
    %192 = vector.broadcast %cst_45 : f32 to vector<8x128xf32>
    %193 = arith.subf %192, %185 : vector<8x128xf32>
    %194 = arith.mulf %193, %191 : vector<8x128xf32>
    %195 = arith.mulf %185, %137 : vector<8x128xf32>
    %196 = arith.addf %194, %195 : vector<8x128xf32>
    %197 = vector.extract_strided_slice %5 {offsets = [24, 0], sizes = [8, 384], strides = [1, 1]} : vector<64x384xf32> to vector<8x384xf32>
    %cst_46 = arith.constant dense<0.000000e+00> : vector<8x384xf32>
    %198 = tpu.matmul %166, %6, %cst_46 {dimension_numbers = #tpu.dot_dimension_numbers<[1], [0], [0], [1], [0, 0, 1, 1], [], []>} : vector<8x128xf32>, vector<128x384xf32>, vector<8x384xf32> -> vector<8x384xf32>
    %199 = vector.extract_strided_slice %197 {offsets = [0, 0], sizes = [8, 128], strides = [1, 1]} : vector<8x384xf32> to vector<8x128xf32>
    %200 = vector.extract_strided_slice %198 {offsets = [0, 0], sizes = [8, 128], strides = [1, 1]} : vector<8x384xf32> to vector<8x128xf32>
    %201 = arith.addf %199, %200 : vector<8x128xf32>
    %202 = arith.negf %201 : vector<8x128xf32>
    %203 = math.exp %202 : vector<8x128xf32>
    %cst_47 = arith.constant 1.000000e+00 : f32
    %204 = vector.broadcast %cst_47 : f32 to vector<8x128xf32>
    %205 = arith.addf %204, %203 : vector<8x128xf32>
    %206 = arith.divf %204, %205 : vector<8x128xf32>
    %207 = vector.extract_strided_slice %197 {offsets = [0, 128], sizes = [8, 128], strides = [1, 1]} : vector<8x384xf32> to vector<8x128xf32>
    %208 = vector.extract_strided_slice %198 {offsets = [0, 128], sizes = [8, 128], strides = [1, 1]} : vector<8x384xf32> to vector<8x128xf32>
    %209 = arith.addf %207, %208 : vector<8x128xf32>
    %210 = arith.negf %209 : vector<8x128xf32>
    %211 = math.exp %210 : vector<8x128xf32>
    %cst_48 = arith.constant 1.000000e+00 : f32
    %212 = vector.broadcast %cst_48 : f32 to vector<8x128xf32>
    %213 = arith.addf %212, %211 : vector<8x128xf32>
    %214 = arith.divf %212, %213 : vector<8x128xf32>
    %215 = vector.extract_strided_slice %197 {offsets = [0, 256], sizes = [8, 128], strides = [1, 1]} : vector<8x384xf32> to vector<8x128xf32>
    %216 = vector.extract_strided_slice %198 {offsets = [0, 256], sizes = [8, 128], strides = [1, 1]} : vector<8x384xf32> to vector<8x128xf32>
    %217 = arith.addf %216, %9 : vector<8x128xf32>
    %218 = arith.mulf %206, %217 : vector<8x128xf32>
    %219 = arith.addf %215, %218 : vector<8x128xf32>
    %220 = math.tanh %219 : vector<8x128xf32>
    %cst_49 = arith.constant 1.000000e+00 : f32
    %221 = vector.broadcast %cst_49 : f32 to vector<8x128xf32>
    %222 = arith.subf %221, %214 : vector<8x128xf32>
    %223 = arith.mulf %222, %220 : vector<8x128xf32>
    %224 = arith.mulf %214, %166 : vector<8x128xf32>
    %225 = arith.addf %223, %224 : vector<8x128xf32>
    %cst_50 = arith.constant dense<0.000000e+00> : vector<8x384xf32>
    %226 = tpu.matmul %225, %10, %cst_50 {dimension_numbers = #tpu.dot_dimension_numbers<[1], [0], [0], [1], [0, 0, 1, 1], [], []>} : vector<8x128xf32>, vector<128x384xf32>, vector<8x384xf32> -> vector<8x384xf32>
    %227 = arith.addf %226, %13 : vector<8x384xf32>
    %cst_51 = arith.constant dense<0.000000e+00> : vector<8x384xf32>
    %228 = tpu.matmul %196, %14, %cst_51 {dimension_numbers = #tpu.dot_dimension_numbers<[1], [0], [0], [1], [0, 0, 1, 1], [], []>} : vector<8x128xf32>, vector<128x384xf32>, vector<8x384xf32> -> vector<8x384xf32>
    %229 = vector.extract_strided_slice %227 {offsets = [0, 0], sizes = [8, 128], strides = [1, 1]} : vector<8x384xf32> to vector<8x128xf32>
    %230 = vector.extract_strided_slice %228 {offsets = [0, 0], sizes = [8, 128], strides = [1, 1]} : vector<8x384xf32> to vector<8x128xf32>
    %231 = arith.addf %229, %230 : vector<8x128xf32>
    %232 = arith.negf %231 : vector<8x128xf32>
    %233 = math.exp %232 : vector<8x128xf32>
    %cst_52 = arith.constant 1.000000e+00 : f32
    %234 = vector.broadcast %cst_52 : f32 to vector<8x128xf32>
    %235 = arith.addf %234, %233 : vector<8x128xf32>
    %236 = arith.divf %234, %235 : vector<8x128xf32>
    %237 = vector.extract_strided_slice %227 {offsets = [0, 128], sizes = [8, 128], strides = [1, 1]} : vector<8x384xf32> to vector<8x128xf32>
    %238 = vector.extract_strided_slice %228 {offsets = [0, 128], sizes = [8, 128], strides = [1, 1]} : vector<8x384xf32> to vector<8x128xf32>
    %239 = arith.addf %237, %238 : vector<8x128xf32>
    %240 = arith.negf %239 : vector<8x128xf32>
    %241 = math.exp %240 : vector<8x128xf32>
    %cst_53 = arith.constant 1.000000e+00 : f32
    %242 = vector.broadcast %cst_53 : f32 to vector<8x128xf32>
    %243 = arith.addf %242, %241 : vector<8x128xf32>
    %244 = arith.divf %242, %243 : vector<8x128xf32>
    %245 = vector.extract_strided_slice %227 {offsets = [0, 256], sizes = [8, 128], strides = [1, 1]} : vector<8x384xf32> to vector<8x128xf32>
    %246 = vector.extract_strided_slice %228 {offsets = [0, 256], sizes = [8, 128], strides = [1, 1]} : vector<8x384xf32> to vector<8x128xf32>
    %247 = arith.addf %246, %17 : vector<8x128xf32>
    %248 = arith.mulf %236, %247 : vector<8x128xf32>
    %249 = arith.addf %245, %248 : vector<8x128xf32>
    %250 = math.tanh %249 : vector<8x128xf32>
    %cst_54 = arith.constant 1.000000e+00 : f32
    %251 = vector.broadcast %cst_54 : f32 to vector<8x128xf32>
    %252 = arith.subf %251, %244 : vector<8x128xf32>
    %253 = arith.mulf %252, %250 : vector<8x128xf32>
    %254 = arith.mulf %244, %196 : vector<8x128xf32>
    %255 = arith.addf %253, %254 : vector<8x128xf32>
    %256 = vector.extract_strided_slice %5 {offsets = [32, 0], sizes = [8, 384], strides = [1, 1]} : vector<64x384xf32> to vector<8x384xf32>
    %cst_55 = arith.constant dense<0.000000e+00> : vector<8x384xf32>
    %257 = tpu.matmul %225, %6, %cst_55 {dimension_numbers = #tpu.dot_dimension_numbers<[1], [0], [0], [1], [0, 0, 1, 1], [], []>} : vector<8x128xf32>, vector<128x384xf32>, vector<8x384xf32> -> vector<8x384xf32>
    %258 = vector.extract_strided_slice %256 {offsets = [0, 0], sizes = [8, 128], strides = [1, 1]} : vector<8x384xf32> to vector<8x128xf32>
    %259 = vector.extract_strided_slice %257 {offsets = [0, 0], sizes = [8, 128], strides = [1, 1]} : vector<8x384xf32> to vector<8x128xf32>
    %260 = arith.addf %258, %259 : vector<8x128xf32>
    %261 = arith.negf %260 : vector<8x128xf32>
    %262 = math.exp %261 : vector<8x128xf32>
    %cst_56 = arith.constant 1.000000e+00 : f32
    %263 = vector.broadcast %cst_56 : f32 to vector<8x128xf32>
    %264 = arith.addf %263, %262 : vector<8x128xf32>
    %265 = arith.divf %263, %264 : vector<8x128xf32>
    %266 = vector.extract_strided_slice %256 {offsets = [0, 128], sizes = [8, 128], strides = [1, 1]} : vector<8x384xf32> to vector<8x128xf32>
    %267 = vector.extract_strided_slice %257 {offsets = [0, 128], sizes = [8, 128], strides = [1, 1]} : vector<8x384xf32> to vector<8x128xf32>
    %268 = arith.addf %266, %267 : vector<8x128xf32>
    %269 = arith.negf %268 : vector<8x128xf32>
    %270 = math.exp %269 : vector<8x128xf32>
    %cst_57 = arith.constant 1.000000e+00 : f32
    %271 = vector.broadcast %cst_57 : f32 to vector<8x128xf32>
    %272 = arith.addf %271, %270 : vector<8x128xf32>
    %273 = arith.divf %271, %272 : vector<8x128xf32>
    %274 = vector.extract_strided_slice %256 {offsets = [0, 256], sizes = [8, 128], strides = [1, 1]} : vector<8x384xf32> to vector<8x128xf32>
    %275 = vector.extract_strided_slice %257 {offsets = [0, 256], sizes = [8, 128], strides = [1, 1]} : vector<8x384xf32> to vector<8x128xf32>
    %276 = arith.addf %275, %9 : vector<8x128xf32>
    %277 = arith.mulf %265, %276 : vector<8x128xf32>
    %278 = arith.addf %274, %277 : vector<8x128xf32>
    %279 = math.tanh %278 : vector<8x128xf32>
    %cst_58 = arith.constant 1.000000e+00 : f32
    %280 = vector.broadcast %cst_58 : f32 to vector<8x128xf32>
    %281 = arith.subf %280, %273 : vector<8x128xf32>
    %282 = arith.mulf %281, %279 : vector<8x128xf32>
    %283 = arith.mulf %273, %225 : vector<8x128xf32>
    %284 = arith.addf %282, %283 : vector<8x128xf32>
    %cst_59 = arith.constant dense<0.000000e+00> : vector<8x384xf32>
    %285 = tpu.matmul %284, %10, %cst_59 {dimension_numbers = #tpu.dot_dimension_numbers<[1], [0], [0], [1], [0, 0, 1, 1], [], []>} : vector<8x128xf32>, vector<128x384xf32>, vector<8x384xf32> -> vector<8x384xf32>
    %286 = arith.addf %285, %13 : vector<8x384xf32>
    %cst_60 = arith.constant dense<0.000000e+00> : vector<8x384xf32>
    %287 = tpu.matmul %255, %14, %cst_60 {dimension_numbers = #tpu.dot_dimension_numbers<[1], [0], [0], [1], [0, 0, 1, 1], [], []>} : vector<8x128xf32>, vector<128x384xf32>, vector<8x384xf32> -> vector<8x384xf32>
    %288 = vector.extract_strided_slice %286 {offsets = [0, 0], sizes = [8, 128], strides = [1, 1]} : vector<8x384xf32> to vector<8x128xf32>
    %289 = vector.extract_strided_slice %287 {offsets = [0, 0], sizes = [8, 128], strides = [1, 1]} : vector<8x384xf32> to vector<8x128xf32>
    %290 = arith.addf %288, %289 : vector<8x128xf32>
    %291 = arith.negf %290 : vector<8x128xf32>
    %292 = math.exp %291 : vector<8x128xf32>
    %cst_61 = arith.constant 1.000000e+00 : f32
    %293 = vector.broadcast %cst_61 : f32 to vector<8x128xf32>
    %294 = arith.addf %293, %292 : vector<8x128xf32>
    %295 = arith.divf %293, %294 : vector<8x128xf32>
    %296 = vector.extract_strided_slice %286 {offsets = [0, 128], sizes = [8, 128], strides = [1, 1]} : vector<8x384xf32> to vector<8x128xf32>
    %297 = vector.extract_strided_slice %287 {offsets = [0, 128], sizes = [8, 128], strides = [1, 1]} : vector<8x384xf32> to vector<8x128xf32>
    %298 = arith.addf %296, %297 : vector<8x128xf32>
    %299 = arith.negf %298 : vector<8x128xf32>
    %300 = math.exp %299 : vector<8x128xf32>
    %cst_62 = arith.constant 1.000000e+00 : f32
    %301 = vector.broadcast %cst_62 : f32 to vector<8x128xf32>
    %302 = arith.addf %301, %300 : vector<8x128xf32>
    %303 = arith.divf %301, %302 : vector<8x128xf32>
    %304 = vector.extract_strided_slice %286 {offsets = [0, 256], sizes = [8, 128], strides = [1, 1]} : vector<8x384xf32> to vector<8x128xf32>
    %305 = vector.extract_strided_slice %287 {offsets = [0, 256], sizes = [8, 128], strides = [1, 1]} : vector<8x384xf32> to vector<8x128xf32>
    %306 = arith.addf %305, %17 : vector<8x128xf32>
    %307 = arith.mulf %295, %306 : vector<8x128xf32>
    %308 = arith.addf %304, %307 : vector<8x128xf32>
    %309 = math.tanh %308 : vector<8x128xf32>
    %cst_63 = arith.constant 1.000000e+00 : f32
    %310 = vector.broadcast %cst_63 : f32 to vector<8x128xf32>
    %311 = arith.subf %310, %303 : vector<8x128xf32>
    %312 = arith.mulf %311, %309 : vector<8x128xf32>
    %313 = arith.mulf %303, %255 : vector<8x128xf32>
    %314 = arith.addf %312, %313 : vector<8x128xf32>
    %315 = vector.extract_strided_slice %5 {offsets = [40, 0], sizes = [8, 384], strides = [1, 1]} : vector<64x384xf32> to vector<8x384xf32>
    %cst_64 = arith.constant dense<0.000000e+00> : vector<8x384xf32>
    %316 = tpu.matmul %284, %6, %cst_64 {dimension_numbers = #tpu.dot_dimension_numbers<[1], [0], [0], [1], [0, 0, 1, 1], [], []>} : vector<8x128xf32>, vector<128x384xf32>, vector<8x384xf32> -> vector<8x384xf32>
    %317 = vector.extract_strided_slice %315 {offsets = [0, 0], sizes = [8, 128], strides = [1, 1]} : vector<8x384xf32> to vector<8x128xf32>
    %318 = vector.extract_strided_slice %316 {offsets = [0, 0], sizes = [8, 128], strides = [1, 1]} : vector<8x384xf32> to vector<8x128xf32>
    %319 = arith.addf %317, %318 : vector<8x128xf32>
    %320 = arith.negf %319 : vector<8x128xf32>
    %321 = math.exp %320 : vector<8x128xf32>
    %cst_65 = arith.constant 1.000000e+00 : f32
    %322 = vector.broadcast %cst_65 : f32 to vector<8x128xf32>
    %323 = arith.addf %322, %321 : vector<8x128xf32>
    %324 = arith.divf %322, %323 : vector<8x128xf32>
    %325 = vector.extract_strided_slice %315 {offsets = [0, 128], sizes = [8, 128], strides = [1, 1]} : vector<8x384xf32> to vector<8x128xf32>
    %326 = vector.extract_strided_slice %316 {offsets = [0, 128], sizes = [8, 128], strides = [1, 1]} : vector<8x384xf32> to vector<8x128xf32>
    %327 = arith.addf %325, %326 : vector<8x128xf32>
    %328 = arith.negf %327 : vector<8x128xf32>
    %329 = math.exp %328 : vector<8x128xf32>
    %cst_66 = arith.constant 1.000000e+00 : f32
    %330 = vector.broadcast %cst_66 : f32 to vector<8x128xf32>
    %331 = arith.addf %330, %329 : vector<8x128xf32>
    %332 = arith.divf %330, %331 : vector<8x128xf32>
    %333 = vector.extract_strided_slice %315 {offsets = [0, 256], sizes = [8, 128], strides = [1, 1]} : vector<8x384xf32> to vector<8x128xf32>
    %334 = vector.extract_strided_slice %316 {offsets = [0, 256], sizes = [8, 128], strides = [1, 1]} : vector<8x384xf32> to vector<8x128xf32>
    %335 = arith.addf %334, %9 : vector<8x128xf32>
    %336 = arith.mulf %324, %335 : vector<8x128xf32>
    %337 = arith.addf %333, %336 : vector<8x128xf32>
    %338 = math.tanh %337 : vector<8x128xf32>
    %cst_67 = arith.constant 1.000000e+00 : f32
    %339 = vector.broadcast %cst_67 : f32 to vector<8x128xf32>
    %340 = arith.subf %339, %332 : vector<8x128xf32>
    %341 = arith.mulf %340, %338 : vector<8x128xf32>
    %342 = arith.mulf %332, %284 : vector<8x128xf32>
    %343 = arith.addf %341, %342 : vector<8x128xf32>
    %cst_68 = arith.constant dense<0.000000e+00> : vector<8x384xf32>
    %344 = tpu.matmul %343, %10, %cst_68 {dimension_numbers = #tpu.dot_dimension_numbers<[1], [0], [0], [1], [0, 0, 1, 1], [], []>} : vector<8x128xf32>, vector<128x384xf32>, vector<8x384xf32> -> vector<8x384xf32>
    %345 = arith.addf %344, %13 : vector<8x384xf32>
    %cst_69 = arith.constant dense<0.000000e+00> : vector<8x384xf32>
    %346 = tpu.matmul %314, %14, %cst_69 {dimension_numbers = #tpu.dot_dimension_numbers<[1], [0], [0], [1], [0, 0, 1, 1], [], []>} : vector<8x128xf32>, vector<128x384xf32>, vector<8x384xf32> -> vector<8x384xf32>
    %347 = vector.extract_strided_slice %345 {offsets = [0, 0], sizes = [8, 128], strides = [1, 1]} : vector<8x384xf32> to vector<8x128xf32>
    %348 = vector.extract_strided_slice %346 {offsets = [0, 0], sizes = [8, 128], strides = [1, 1]} : vector<8x384xf32> to vector<8x128xf32>
    %349 = arith.addf %347, %348 : vector<8x128xf32>
    %350 = arith.negf %349 : vector<8x128xf32>
    %351 = math.exp %350 : vector<8x128xf32>
    %cst_70 = arith.constant 1.000000e+00 : f32
    %352 = vector.broadcast %cst_70 : f32 to vector<8x128xf32>
    %353 = arith.addf %352, %351 : vector<8x128xf32>
    %354 = arith.divf %352, %353 : vector<8x128xf32>
    %355 = vector.extract_strided_slice %345 {offsets = [0, 128], sizes = [8, 128], strides = [1, 1]} : vector<8x384xf32> to vector<8x128xf32>
    %356 = vector.extract_strided_slice %346 {offsets = [0, 128], sizes = [8, 128], strides = [1, 1]} : vector<8x384xf32> to vector<8x128xf32>
    %357 = arith.addf %355, %356 : vector<8x128xf32>
    %358 = arith.negf %357 : vector<8x128xf32>
    %359 = math.exp %358 : vector<8x128xf32>
    %cst_71 = arith.constant 1.000000e+00 : f32
    %360 = vector.broadcast %cst_71 : f32 to vector<8x128xf32>
    %361 = arith.addf %360, %359 : vector<8x128xf32>
    %362 = arith.divf %360, %361 : vector<8x128xf32>
    %363 = vector.extract_strided_slice %345 {offsets = [0, 256], sizes = [8, 128], strides = [1, 1]} : vector<8x384xf32> to vector<8x128xf32>
    %364 = vector.extract_strided_slice %346 {offsets = [0, 256], sizes = [8, 128], strides = [1, 1]} : vector<8x384xf32> to vector<8x128xf32>
    %365 = arith.addf %364, %17 : vector<8x128xf32>
    %366 = arith.mulf %354, %365 : vector<8x128xf32>
    %367 = arith.addf %363, %366 : vector<8x128xf32>
    %368 = math.tanh %367 : vector<8x128xf32>
    %cst_72 = arith.constant 1.000000e+00 : f32
    %369 = vector.broadcast %cst_72 : f32 to vector<8x128xf32>
    %370 = arith.subf %369, %362 : vector<8x128xf32>
    %371 = arith.mulf %370, %368 : vector<8x128xf32>
    %372 = arith.mulf %362, %314 : vector<8x128xf32>
    %373 = arith.addf %371, %372 : vector<8x128xf32>
    %374 = vector.extract_strided_slice %5 {offsets = [48, 0], sizes = [8, 384], strides = [1, 1]} : vector<64x384xf32> to vector<8x384xf32>
    %cst_73 = arith.constant dense<0.000000e+00> : vector<8x384xf32>
    %375 = tpu.matmul %343, %6, %cst_73 {dimension_numbers = #tpu.dot_dimension_numbers<[1], [0], [0], [1], [0, 0, 1, 1], [], []>} : vector<8x128xf32>, vector<128x384xf32>, vector<8x384xf32> -> vector<8x384xf32>
    %376 = vector.extract_strided_slice %374 {offsets = [0, 0], sizes = [8, 128], strides = [1, 1]} : vector<8x384xf32> to vector<8x128xf32>
    %377 = vector.extract_strided_slice %375 {offsets = [0, 0], sizes = [8, 128], strides = [1, 1]} : vector<8x384xf32> to vector<8x128xf32>
    %378 = arith.addf %376, %377 : vector<8x128xf32>
    %379 = arith.negf %378 : vector<8x128xf32>
    %380 = math.exp %379 : vector<8x128xf32>
    %cst_74 = arith.constant 1.000000e+00 : f32
    %381 = vector.broadcast %cst_74 : f32 to vector<8x128xf32>
    %382 = arith.addf %381, %380 : vector<8x128xf32>
    %383 = arith.divf %381, %382 : vector<8x128xf32>
    %384 = vector.extract_strided_slice %374 {offsets = [0, 128], sizes = [8, 128], strides = [1, 1]} : vector<8x384xf32> to vector<8x128xf32>
    %385 = vector.extract_strided_slice %375 {offsets = [0, 128], sizes = [8, 128], strides = [1, 1]} : vector<8x384xf32> to vector<8x128xf32>
    %386 = arith.addf %384, %385 : vector<8x128xf32>
    %387 = arith.negf %386 : vector<8x128xf32>
    %388 = math.exp %387 : vector<8x128xf32>
    %cst_75 = arith.constant 1.000000e+00 : f32
    %389 = vector.broadcast %cst_75 : f32 to vector<8x128xf32>
    %390 = arith.addf %389, %388 : vector<8x128xf32>
    %391 = arith.divf %389, %390 : vector<8x128xf32>
    %392 = vector.extract_strided_slice %374 {offsets = [0, 256], sizes = [8, 128], strides = [1, 1]} : vector<8x384xf32> to vector<8x128xf32>
    %393 = vector.extract_strided_slice %375 {offsets = [0, 256], sizes = [8, 128], strides = [1, 1]} : vector<8x384xf32> to vector<8x128xf32>
    %394 = arith.addf %393, %9 : vector<8x128xf32>
    %395 = arith.mulf %383, %394 : vector<8x128xf32>
    %396 = arith.addf %392, %395 : vector<8x128xf32>
    %397 = math.tanh %396 : vector<8x128xf32>
    %cst_76 = arith.constant 1.000000e+00 : f32
    %398 = vector.broadcast %cst_76 : f32 to vector<8x128xf32>
    %399 = arith.subf %398, %391 : vector<8x128xf32>
    %400 = arith.mulf %399, %397 : vector<8x128xf32>
    %401 = arith.mulf %391, %343 : vector<8x128xf32>
    %402 = arith.addf %400, %401 : vector<8x128xf32>
    %cst_77 = arith.constant dense<0.000000e+00> : vector<8x384xf32>
    %403 = tpu.matmul %402, %10, %cst_77 {dimension_numbers = #tpu.dot_dimension_numbers<[1], [0], [0], [1], [0, 0, 1, 1], [], []>} : vector<8x128xf32>, vector<128x384xf32>, vector<8x384xf32> -> vector<8x384xf32>
    %404 = arith.addf %403, %13 : vector<8x384xf32>
    %cst_78 = arith.constant dense<0.000000e+00> : vector<8x384xf32>
    %405 = tpu.matmul %373, %14, %cst_78 {dimension_numbers = #tpu.dot_dimension_numbers<[1], [0], [0], [1], [0, 0, 1, 1], [], []>} : vector<8x128xf32>, vector<128x384xf32>, vector<8x384xf32> -> vector<8x384xf32>
    %406 = vector.extract_strided_slice %404 {offsets = [0, 0], sizes = [8, 128], strides = [1, 1]} : vector<8x384xf32> to vector<8x128xf32>
    %407 = vector.extract_strided_slice %405 {offsets = [0, 0], sizes = [8, 128], strides = [1, 1]} : vector<8x384xf32> to vector<8x128xf32>
    %408 = arith.addf %406, %407 : vector<8x128xf32>
    %409 = arith.negf %408 : vector<8x128xf32>
    %410 = math.exp %409 : vector<8x128xf32>
    %cst_79 = arith.constant 1.000000e+00 : f32
    %411 = vector.broadcast %cst_79 : f32 to vector<8x128xf32>
    %412 = arith.addf %411, %410 : vector<8x128xf32>
    %413 = arith.divf %411, %412 : vector<8x128xf32>
    %414 = vector.extract_strided_slice %404 {offsets = [0, 128], sizes = [8, 128], strides = [1, 1]} : vector<8x384xf32> to vector<8x128xf32>
    %415 = vector.extract_strided_slice %405 {offsets = [0, 128], sizes = [8, 128], strides = [1, 1]} : vector<8x384xf32> to vector<8x128xf32>
    %416 = arith.addf %414, %415 : vector<8x128xf32>
    %417 = arith.negf %416 : vector<8x128xf32>
    %418 = math.exp %417 : vector<8x128xf32>
    %cst_80 = arith.constant 1.000000e+00 : f32
    %419 = vector.broadcast %cst_80 : f32 to vector<8x128xf32>
    %420 = arith.addf %419, %418 : vector<8x128xf32>
    %421 = arith.divf %419, %420 : vector<8x128xf32>
    %422 = vector.extract_strided_slice %404 {offsets = [0, 256], sizes = [8, 128], strides = [1, 1]} : vector<8x384xf32> to vector<8x128xf32>
    %423 = vector.extract_strided_slice %405 {offsets = [0, 256], sizes = [8, 128], strides = [1, 1]} : vector<8x384xf32> to vector<8x128xf32>
    %424 = arith.addf %423, %17 : vector<8x128xf32>
    %425 = arith.mulf %413, %424 : vector<8x128xf32>
    %426 = arith.addf %422, %425 : vector<8x128xf32>
    %427 = math.tanh %426 : vector<8x128xf32>
    %cst_81 = arith.constant 1.000000e+00 : f32
    %428 = vector.broadcast %cst_81 : f32 to vector<8x128xf32>
    %429 = arith.subf %428, %421 : vector<8x128xf32>
    %430 = arith.mulf %429, %427 : vector<8x128xf32>
    %431 = arith.mulf %421, %373 : vector<8x128xf32>
    %432 = arith.addf %430, %431 : vector<8x128xf32>
    %433 = vector.extract_strided_slice %5 {offsets = [56, 0], sizes = [8, 384], strides = [1, 1]} : vector<64x384xf32> to vector<8x384xf32>
    %cst_82 = arith.constant dense<0.000000e+00> : vector<8x384xf32>
    %434 = tpu.matmul %402, %6, %cst_82 {dimension_numbers = #tpu.dot_dimension_numbers<[1], [0], [0], [1], [0, 0, 1, 1], [], []>} : vector<8x128xf32>, vector<128x384xf32>, vector<8x384xf32> -> vector<8x384xf32>
    %435 = vector.extract_strided_slice %433 {offsets = [0, 0], sizes = [8, 128], strides = [1, 1]} : vector<8x384xf32> to vector<8x128xf32>
    %436 = vector.extract_strided_slice %434 {offsets = [0, 0], sizes = [8, 128], strides = [1, 1]} : vector<8x384xf32> to vector<8x128xf32>
    %437 = arith.addf %435, %436 : vector<8x128xf32>
    %438 = arith.negf %437 : vector<8x128xf32>
    %439 = math.exp %438 : vector<8x128xf32>
    %cst_83 = arith.constant 1.000000e+00 : f32
    %440 = vector.broadcast %cst_83 : f32 to vector<8x128xf32>
    %441 = arith.addf %440, %439 : vector<8x128xf32>
    %442 = arith.divf %440, %441 : vector<8x128xf32>
    %443 = vector.extract_strided_slice %433 {offsets = [0, 128], sizes = [8, 128], strides = [1, 1]} : vector<8x384xf32> to vector<8x128xf32>
    %444 = vector.extract_strided_slice %434 {offsets = [0, 128], sizes = [8, 128], strides = [1, 1]} : vector<8x384xf32> to vector<8x128xf32>
    %445 = arith.addf %443, %444 : vector<8x128xf32>
    %446 = arith.negf %445 : vector<8x128xf32>
    %447 = math.exp %446 : vector<8x128xf32>
    %cst_84 = arith.constant 1.000000e+00 : f32
    %448 = vector.broadcast %cst_84 : f32 to vector<8x128xf32>
    %449 = arith.addf %448, %447 : vector<8x128xf32>
    %450 = arith.divf %448, %449 : vector<8x128xf32>
    %451 = vector.extract_strided_slice %433 {offsets = [0, 256], sizes = [8, 128], strides = [1, 1]} : vector<8x384xf32> to vector<8x128xf32>
    %452 = vector.extract_strided_slice %434 {offsets = [0, 256], sizes = [8, 128], strides = [1, 1]} : vector<8x384xf32> to vector<8x128xf32>
    %453 = arith.addf %452, %9 : vector<8x128xf32>
    %454 = arith.mulf %442, %453 : vector<8x128xf32>
    %455 = arith.addf %451, %454 : vector<8x128xf32>
    %456 = math.tanh %455 : vector<8x128xf32>
    %cst_85 = arith.constant 1.000000e+00 : f32
    %457 = vector.broadcast %cst_85 : f32 to vector<8x128xf32>
    %458 = arith.subf %457, %450 : vector<8x128xf32>
    %459 = arith.mulf %458, %456 : vector<8x128xf32>
    %460 = arith.mulf %450, %402 : vector<8x128xf32>
    %461 = arith.addf %459, %460 : vector<8x128xf32>
    %cst_86 = arith.constant dense<0.000000e+00> : vector<8x384xf32>
    %462 = tpu.matmul %461, %10, %cst_86 {dimension_numbers = #tpu.dot_dimension_numbers<[1], [0], [0], [1], [0, 0, 1, 1], [], []>} : vector<8x128xf32>, vector<128x384xf32>, vector<8x384xf32> -> vector<8x384xf32>
    %463 = arith.addf %462, %13 : vector<8x384xf32>
    %cst_87 = arith.constant dense<0.000000e+00> : vector<8x384xf32>
    %464 = tpu.matmul %432, %14, %cst_87 {dimension_numbers = #tpu.dot_dimension_numbers<[1], [0], [0], [1], [0, 0, 1, 1], [], []>} : vector<8x128xf32>, vector<128x384xf32>, vector<8x384xf32> -> vector<8x384xf32>
    %465 = vector.extract_strided_slice %463 {offsets = [0, 0], sizes = [8, 128], strides = [1, 1]} : vector<8x384xf32> to vector<8x128xf32>
    %466 = vector.extract_strided_slice %464 {offsets = [0, 0], sizes = [8, 128], strides = [1, 1]} : vector<8x384xf32> to vector<8x128xf32>
    %467 = arith.addf %465, %466 : vector<8x128xf32>
    %468 = arith.negf %467 : vector<8x128xf32>
    %469 = math.exp %468 : vector<8x128xf32>
    %cst_88 = arith.constant 1.000000e+00 : f32
    %470 = vector.broadcast %cst_88 : f32 to vector<8x128xf32>
    %471 = arith.addf %470, %469 : vector<8x128xf32>
    %472 = arith.divf %470, %471 : vector<8x128xf32>
    %473 = vector.extract_strided_slice %463 {offsets = [0, 128], sizes = [8, 128], strides = [1, 1]} : vector<8x384xf32> to vector<8x128xf32>
    %474 = vector.extract_strided_slice %464 {offsets = [0, 128], sizes = [8, 128], strides = [1, 1]} : vector<8x384xf32> to vector<8x128xf32>
    %475 = arith.addf %473, %474 : vector<8x128xf32>
    %476 = arith.negf %475 : vector<8x128xf32>
    %477 = math.exp %476 : vector<8x128xf32>
    %cst_89 = arith.constant 1.000000e+00 : f32
    %478 = vector.broadcast %cst_89 : f32 to vector<8x128xf32>
    %479 = arith.addf %478, %477 : vector<8x128xf32>
    %480 = arith.divf %478, %479 : vector<8x128xf32>
    %481 = vector.extract_strided_slice %463 {offsets = [0, 256], sizes = [8, 128], strides = [1, 1]} : vector<8x384xf32> to vector<8x128xf32>
    %482 = vector.extract_strided_slice %464 {offsets = [0, 256], sizes = [8, 128], strides = [1, 1]} : vector<8x384xf32> to vector<8x128xf32>
    %483 = arith.addf %482, %17 : vector<8x128xf32>
    %484 = arith.mulf %472, %483 : vector<8x128xf32>
    %485 = arith.addf %481, %484 : vector<8x128xf32>
    %486 = math.tanh %485 : vector<8x128xf32>
    %cst_90 = arith.constant 1.000000e+00 : f32
    %487 = vector.broadcast %cst_90 : f32 to vector<8x128xf32>
    %488 = arith.subf %487, %480 : vector<8x128xf32>
    %489 = arith.mulf %488, %486 : vector<8x128xf32>
    %490 = arith.mulf %480, %432 : vector<8x128xf32>
    %491 = arith.addf %489, %490 : vector<8x128xf32>
    %492 = vector.shape_cast %461 : vector<8x128xf32> to vector<1x8x128xf32>
    %493 = vector.shape_cast %491 : vector<8x128xf32> to vector<1x8x128xf32>
    %494 = tpu.concatenate %492, %493 in 0 : vector<1x8x128xf32>, vector<1x8x128xf32> -> vector<2x8x128xf32>
    %c0_91 = arith.constant 0 : index
    %c0_92 = arith.constant 0 : index
    %c0_93 = arith.constant 0 : index
    %495 = vector.load %arg9[%c0_91, %c0_92, %c0_93] : memref<2x8x128xf32, #tpu.memory_space<vmem>>, vector<2x8x128xf32>
    tpu.vector_store %arg9[%c0_91, %c0_92, %c0_93], %494 {strides = array<i32>} : memref<2x8x128xf32, #tpu.memory_space<vmem>>, vector<2x8x128xf32>,
    return
  }
}

</mosaic_0001>

<llo_original>
// kernel: tpu_custom_call.1
$region0: #{tpu_custom_call.1}
  #allocation0 [shape = 'u32[]', space=smem, size = 0x4, offset = 0x4, fixed_abs, tag = 'smem constant byte address 0x4 - core index']
  #allocation1 [shape = 'u32[144,128]{1,0:T(1,128)}', space=vmem, size = 0x12000, scoped, tag = 'internal scratch']
  %s0 = inlined_call_operand.vmem [shape: f32[64,16], index: 0, kind: input, shape index: {}]
  %s1 = inlined_call_operand.vmem [shape: f32[16,384], index: 1, kind: input, shape index: {}]
  %s2 = inlined_call_operand.vmem [shape: f32[1,384], index: 2, kind: input, shape index: {}]
  %s3 = inlined_call_operand.hbm [shape: f32[128,384], index: 3, kind: input, shape index: {}]
  %s4 = inlined_call_operand.vmem [shape: f32[1,128], index: 4, kind: input, shape index: {}]
  %s5 = inlined_call_operand.hbm [shape: f32[128,384], index: 5, kind: input, shape index: {}]
  %s6 = inlined_call_operand.vmem [shape: f32[1,384], index: 6, kind: input, shape index: {}]
  %s7 = inlined_call_operand.hbm [shape: f32[128,384], index: 7, kind: input, shape index: {}]
  %s8 = inlined_call_operand.vmem [shape: f32[1,128], index: 8, kind: input, shape index: {}]
  %s9 = inlined_call_operand.hbm [shape: f32[2,8,128], index: 9, kind: output, shape index: {}]
  %s10 = sld [smem:[#allocation0]]
  $region58: #{tpu_custom_call.1} parent=0
    _
  %s12 = ssub.s32 1, %s10
  %s13 = scalar_select 0, %s12, %s10
  $region1: #{tpu_custom_call.1} parent=0
    #allocation2 [shape = 'u8[196608]{0}', space=vmem, size = 0x30000, scoped, tag = 'input window, operand 3, single buffered']
    #allocation3 [shape = 's32[1]{0}', space=sflag, size = 0x4, scoped, tag = 'scoped memory for tpu_custom_call.1']
    #allocation4 [shape = 's32[1]{0}', space=sflag, size = 0x4, scoped, tag = 'scoped memory for tpu_custom_call.1']
    #allocation5 [shape = 'u8[196608]{0}', space=vmem, size = 0x30000, scoped, tag = 'input window, operand 5, single buffered']
    #allocation6 [shape = 's32[1]{0}', space=sflag, size = 0x4, scoped, tag = 'scoped memory for tpu_custom_call.1']
    #allocation7 [shape = 'u8[196608]{0}', space=vmem, size = 0x30000, scoped, tag = 'input window, operand 7, single buffered']
    #allocation8 [shape = 'u8[8192]{0}', space=vmem, size = 0x2000, scoped, tag = 'output window, operand 0, single buffered']
    %14 = vsyncpa [#allocation3], 0
    %15 = vsyncpa [#allocation6], 0
    %16 = vsyncpa [#allocation4], 0
    // Predicated region
    $region2: #{tpu_custom_call.1} parent=1 // pred_check
      _
    $region3: #{tpu_custom_call.1} parent=1 // pred_check_branch
      %18 = sbr.rel (0) target = $region5
    $region4: #{tpu_custom_call.1} parent=1 // pred_region
      _
    $region5: #{tpu_custom_call.1} parent=1 // pred_fallthru
      _
    // Predicated region
    $region6: #{tpu_custom_call.1} parent=1 // pred_check
      _
    $region7: #{tpu_custom_call.1} parent=1 // pred_check_branch
      %20 = sbr.rel (0) target = $region9
    $region8: #{tpu_custom_call.1} parent=1 // pred_region
      _
    $region9: #{tpu_custom_call.1} parent=1 // pred_fallthru
      _
    // Predicated region
    $region10: #{tpu_custom_call.1} parent=1 // pred_check
      _
    $region11: #{tpu_custom_call.1} parent=1 // pred_check_branch
      %22 = sbr.rel (0) target = $region13
    $region12: #{tpu_custom_call.1} parent=1 // pred_region
      _
    $region13: #{tpu_custom_call.1} parent=1 // pred_fallthru
      _
    // Predicated region
    $region14: #{tpu_custom_call.1} parent=1 // pred_check
      _
    $region15: #{tpu_custom_call.1} parent=1 // pred_check_branch
      %24 = sbr.rel (0) target = $region17
    $region16: #{tpu_custom_call.1} parent=1 // pred_region
      %s26 = ssub.s32 6144, 6144
      %27 = vsyncadd [#allocation3], %s26
      %s28 = sshll.u32 [#allocation2], 4
      %s29 = int_to_ptr.vmem [resolvable:$true] %s28
      %34 = dma.hbm_to_vmem [thread:$0]  %s3, 6144, %s29, [#allocation3], 384, 384, 24
    $region17: #{tpu_custom_call.1} parent=1 // pred_fallthru
      _
    // Predicated region
    $region18: #{tpu_custom_call.1} parent=1 // pred_check
      _
    $region19: #{tpu_custom_call.1} parent=1 // pred_check_branch
      %36 = sbr.rel (0) target = $region21
    $region20: #{tpu_custom_call.1} parent=1 // pred_region
      _
    $region21: #{tpu_custom_call.1} parent=1 // pred_fallthru
      _
    // Predicated region
    $region22: #{tpu_custom_call.1} parent=1 // pred_check
      _
    $region23: #{tpu_custom_call.1} parent=1 // pred_check_branch
      %38 = sbr.rel (0) target = $region25
    $region24: #{tpu_custom_call.1} parent=1 // pred_region
      %s40 = ssub.s32 6144, 6144
      %41 = vsyncadd [#allocation6], %s40
      %s42 = sshll.u32 [#allocation5], 4
      %s43 = int_to_ptr.vmem [resolvable:$true] %s42
      %48 = dma.hbm_to_vmem [thread:$0]  %s5, 6144, %s43, [#allocation6], 384, 384, 24
    $region25: #{tpu_custom_call.1} parent=1 // pred_fallthru
      _
    // Predicated region
    $region26: #{tpu_custom_call.1} parent=1 // pred_check
      _
    $region27: #{tpu_custom_call.1} parent=1 // pred_check_branch
      %50 = sbr.rel (0) target = $region29
    $region28: #{tpu_custom_call.1} parent=1 // pred_region
      _
    $region29: #{tpu_custom_call.1} parent=1 // pred_fallthru
      _
    // Predicated region
    $region30: #{tpu_custom_call.1} parent=1 // pred_check
      _
    $region31: #{tpu_custom_call.1} parent=1 // pred_check_branch
      %52 = sbr.rel (0) target = $region33
    $region32: #{tpu_custom_call.1} parent=1 // pred_region
      %s54 = ssub.s32 6144, 6144
      %55 = vsyncadd [#allocation6], %s54
      %s56 = sshll.u32 [#allocation7], 4
      %s57 = int_to_ptr.vmem [resolvable:$true] %s56
      %62 = dma.hbm_to_vmem [thread:$0]  %s7, 6144, %s57, [#allocation6], 384, 384, 24
    $region33: #{tpu_custom_call.1} parent=1 // pred_fallthru
      _
    // Predicated region
    $region34: #{tpu_custom_call.1} parent=1 // pred_check
      _
    $region35: #{tpu_custom_call.1} parent=1 // pred_check_branch
      %64 = sbr.rel (0) target = $region37
    $region36: #{tpu_custom_call.1} parent=1 // pred_region
      _
    $region37: #{tpu_custom_call.1} parent=1 // pred_fallthru
      _
    // Predicated region
    $region38: #{tpu_custom_call.1} parent=1 // pred_check
      _
    $region39: #{tpu_custom_call.1} parent=1 // pred_check_branch
      %66 = sbr.rel (0) target = $region41
    $region40: #{tpu_custom_call.1} parent=1 // pred_region
      %67 = dma.done [#allocation3], 6144
    $region41: #{tpu_custom_call.1} parent=1 // pred_fallthru
      _
    // Predicated region
    $region42: #{tpu_custom_call.1} parent=1 // pred_check
      _
    $region43: #{tpu_custom_call.1} parent=1 // pred_check_branch
      %69 = sbr.rel (0) target = $region45
    $region44: #{tpu_custom_call.1} parent=1 // pred_region
      %70 = dma.done [#allocation6], 6144
    $region45: #{tpu_custom_call.1} parent=1 // pred_fallthru
      _
    // Predicated region
    $region46: #{tpu_custom_call.1} parent=1 // pred_check
      _
    $region47: #{tpu_custom_call.1} parent=1 // pred_check_branch
      %72 = sbr.rel (0) target = $region49
    $region48: #{tpu_custom_call.1} parent=1 // pred_region
      %73 = dma.done [#allocation6], 6144
    $region49: #{tpu_custom_call.1} parent=1 // pred_fallthru
      _
    %v74 = vld [vmem:[%s0] sm:$0xff]
    %v75 = vld [vmem:[%s0 + $0x8] sm:$0xff]
    %v76 = vld [vmem:[%s0 + $0x10] sm:$0xff]
    %v77 = vld [vmem:[%s0 + $0x18] sm:$0xff]
    %v78 = vld [vmem:[%s0 + $0x20] sm:$0xff]
    %v79 = vld [vmem:[%s0 + $0x28] sm:$0xff]
    %v80 = vld [vmem:[%s0 + $0x30] sm:$0xff]
    %v81 = vld [vmem:[%s0 + $0x38] sm:$0xff]
    %v82 = vld [vmem:[%s1] sm:$0xff]
    %v83 = vld [vmem:[%s1 + $0x8] sm:$0xff]
    %v84 = vld [vmem:[%s1 + $0x10] sm:$0xff]
    %v85 = vld [vmem:[%s1 + $0x18] sm:$0xff]
    %v86 = vld [vmem:[%s1 + $0x20] sm:$0xff]
    %v87 = vld [vmem:[%s1 + $0x28] sm:$0xff]
    %v88 = vld [vmem:[%s2] sm:$0x7]
    %v90 = vlaneseq
    %v91 = vshrl.u32 %v90, 7
    %v92 = vsub.s32 0, %v91
    %v93 = vrot.slane %v88, %v92
    %v94 = vlaneseq
    %v95 = vshrl.u32 %v94, 7
    %v96 = vsub.s32 1, %v95
    %v97 = vrot.slane %v88, %v96
    %v98 = vlaneseq
    %v99 = vshrl.u32 %v98, 7
    %v100 = vsub.s32 2, %v99
    %v101 = vrot.slane %v88, %v100
    %vm105 = vcmask 130048
    %v107 = vsel %vm105, %v74, 0
    %v110 = vsel %vm105, %v75, 0
    %v113 = vsel %vm105, %v76, 0
    %v116 = vsel %vm105, %v77, 0
    %v119 = vsel %vm105, %v78, 0
    %v122 = vsel %vm105, %v79, 0
    %v125 = vsel %vm105, %v80, 0
    %v128 = vsel %vm105, %v81, 0
    %130 = vmatprep.subr.mxu0 0.0
    %131 = vmatpush1.msra.mxu0 0.0
    %132 = vmatprep.subr.mxu0 0.0
    %133 = vmatpush1.msra.mxu0 0.0
    %134 = vmatprep.subr.mxu0 0.0
    %135 = vmatpush1.msra.mxu0 0.0
    %136 = vmatprep.subr.mxu0 0.0
    %137 = vmatpush1.msra.mxu0 0.0
    %138 = vmatprep.subr.mxu0 0.0
    %139 = vmatpush1.msra.mxu0 0.0
    %140 = vmatprep.subr.mxu0 0.0
    %141 = vmatpush1.msra.mxu0 0.0
    %142 = vmatprep.subr.mxu0 0.0
    %143 = vmatpush1.msra.mxu0 0.0
    %144 = vmatprep.subr.mxu0 0.0
    %145 = vmatpush1.msra.mxu0 0.0
    %146 = vmatprep.subr.mxu0 0.0
    %147 = vmatpush1.msra.mxu0 0.0
    %148 = vmatprep.subr.mxu0 0.0
    %149 = vmatpush1.msra.mxu0 0.0
    %150 = vmatprep.subr.mxu0 0.0
    %151 = vmatpush1.msra.mxu0 0.0
    %152 = vmatprep.subr.mxu0 0.0
    %153 = vmatpush1.msra.mxu0 0.0
    %154 = vmatprep.subr.mxu0 0.0
    %155 = vmatpush1.msra.mxu0 0.0
    %156 = vmatprep.subr.mxu0 0.0
    %157 = vmatpush1.msra.mxu0 0.0
    %158 = vmatprep.subr.mxu0 %v86
    %159 = vmatpush1.msra.mxu0 %v85
    %160 = vmatprep.subr.mxu0 %v83
    %161 = vmatpush1.msra.mxu0 %v82
    %162 = vmatprep.subr.mxu0 0.0
    %163 = vmatpush2.msra.mxu0 0.0
    %164 = vmatprep.subr.mxu0 0.0
    %165 = vmatpush2.msra.mxu0 0.0
    %166 = vmatprep.subr.mxu0 0.0
    %167 = vmatpush2.msra.mxu0 0.0
    %168 = vmatprep.subr.mxu0 0.0
    %169 = vmatpush2.msra.mxu0 0.0
    %170 = vmatprep.subr.mxu0 0.0
    %171 = vmatpush2.msra.mxu0 0.0
    %172 = vmatprep.subr.mxu0 0.0
    %173 = vmatpush2.msra.mxu0 0.0
    %174 = vmatprep.subr.mxu0 0.0
    %175 = vmatpush2.msra.mxu0 0.0
    %176 = vmatprep.subr.mxu0 0.0
    %177 = vmatpush2.msra.mxu0 0.0
    %178 = vmatprep.subr.mxu0 0.0
    %179 = vmatpush2.msra.mxu0 0.0
    %180 = vmatprep.subr.mxu0 0.0
    %181 = vmatpush2.msra.mxu0 0.0
    %182 = vmatprep.subr.mxu0 0.0
    %183 = vmatpush2.msra.mxu0 0.0
    %184 = vmatprep.subr.mxu0 0.0
    %185 = vmatpush2.msra.mxu0 0.0
    %186 = vmatprep.subr.mxu0 0.0
    %187 = vmatpush2.msra.mxu0 0.0
    %188 = vmatprep.subr.mxu0 0.0
    %189 = vmatpush2.msra.mxu0 0.0
    %190 = vmatprep.subr.mxu0 0.0
    %191 = vmatpush2.msra.mxu0 0.0
    %192 = vmatprep.subr.mxu0 0.0
    %193 = vmatpush2.msra.mxu0 0.0
    %194 = vmatprep.mubr.f32.mxu0 0.0
    %195 = vmatmul.mubr.f32.gmra.mxu0 %v107
    %v196 = vpop.f32.mrf.mxu0
    %v197 = vadd.f32 %v93, %v196
    %v198 = vpop.f32.mrf.mxu0
    %v199 = vadd.f32 %v97, %v198
    %200 = vmatprep.mubr.f32.mxu0 0.0
    %201 = vmatmul.mubr.f32.gmra.mxu0 %v110
    %v202 = vpop.f32.mrf.mxu0
    %v203 = vadd.f32 %v93, %v202
    %v204 = vpop.f32.mrf.mxu0
    %v205 = vadd.f32 %v97, %v204
    %206 = vmatprep.mubr.f32.mxu0 0.0
    %207 = vmatmul.mubr.f32.gmra.mxu0 %v113
    %v208 = vpop.f32.mrf.mxu0
    %v209 = vadd.f32 %v93, %v208
    %v210 = vpop.f32.mrf.mxu0
    %v211 = vadd.f32 %v97, %v210
    %212 = vmatprep.mubr.f32.mxu0 0.0
    %213 = vmatmul.mubr.f32.gmra.mxu0 %v116
    %v214 = vpop.f32.mrf.mxu0
    %v215 = vadd.f32 %v93, %v214
    %v216 = vpop.f32.mrf.mxu0
    %v217 = vadd.f32 %v97, %v216
    %218 = vmatprep.mubr.f32.mxu0 0.0
    %219 = vmatmul.mubr.f32.gmra.mxu0 %v119
    %v220 = vpop.f32.mrf.mxu0
    %v221 = vadd.f32 %v93, %v220
    %v222 = vpop.f32.mrf.mxu0
    %v223 = vadd.f32 %v97, %v222
    %224 = vmatprep.mubr.f32.mxu0 0.0
    %225 = vmatmul.mubr.f32.gmra.mxu0 %v122
    %v226 = vpop.f32.mrf.mxu0
    %v227 = vadd.f32 %v93, %v226
    %v228 = vpop.f32.mrf.mxu0
    %v229 = vadd.f32 %v97, %v228
    %230 = vmatprep.mubr.f32.mxu0 0.0
    %231 = vmatmul.mubr.f32.gmra.mxu0 %v125
    %v232 = vpop.f32.mrf.mxu0
    %v233 = vadd.f32 %v93, %v232
    %v234 = vpop.f32.mrf.mxu0
    %v235 = vadd.f32 %v97, %v234
    %236 = vmatprep.mubr.f32.mxu0 0.0
    %237 = vmatmul.mubr.f32.gmra.mxu0 %v128
    %v238 = vpop.f32.mrf.mxu0
    %v239 = vadd.f32 %v93, %v238
    %v240 = vpop.f32.mrf.mxu0
    %v241 = vadd.f32 %v97, %v240
    %242 = vdwg.mxu0
    %243 = vmatprep.subr.mxu0 0.0
    %244 = vmatpush1.msra.mxu0 0.0
    %245 = vmatprep.subr.mxu0 0.0
    %246 = vmatpush1.msra.mxu0 0.0
    %247 = vmatprep.subr.mxu0 0.0
    %248 = vmatpush1.msra.mxu0 0.0
    %249 = vmatprep.subr.mxu0 0.0
    %250 = vmatpush1.msra.mxu0 0.0
    %251 = vmatprep.subr.mxu0 0.0
    %252 = vmatpush1.msra.mxu0 0.0
    %253 = vmatprep.subr.mxu0 0.0
    %254 = vmatpush1.msra.mxu0 0.0
    %255 = vmatprep.subr.mxu0 0.0
    %256 = vmatpush1.msra.mxu0 0.0
    %257 = vmatprep.subr.mxu0 0.0
    %258 = vmatpush1.msra.mxu0 0.0
    %259 = vmatprep.subr.mxu0 0.0
    %260 = vmatpush1.msra.mxu0 0.0
    %261 = vmatprep.subr.mxu0 0.0
    %262 = vmatpush1.msra.mxu0 0.0
    %263 = vmatprep.subr.mxu0 0.0
    %264 = vmatpush1.msra.mxu0 0.0
    %265 = vmatprep.subr.mxu0 0.0
    %266 = vmatpush1.msra.mxu0 0.0
    %267 = vmatprep.subr.mxu0 0.0
    %268 = vmatpush1.msra.mxu0 0.0
    %269 = vmatprep.subr.mxu0 0.0
    %270 = vmatpush1.msra.mxu0 0.0
    %271 = vmatprep.subr.mxu0 0.0
    %272 = vmatpush1.msra.mxu0 %v87
    %273 = vmatprep.subr.mxu0 0.0
    %274 = vmatpush1.msra.mxu0 %v84
    %275 = vmatprep.subr.mxu0 0.0
    %276 = vmatpush2.msra.mxu0 0.0
    %277 = vmatprep.subr.mxu0 0.0
    %278 = vmatpush2.msra.mxu0 0.0
    %279 = vmatprep.subr.mxu0 0.0
    %280 = vmatpush2.msra.mxu0 0.0
    %281 = vmatprep.subr.mxu0 0.0
    %282 = vmatpush2.msra.mxu0 0.0
    %283 = vmatprep.subr.mxu0 0.0
    %284 = vmatpush2.msra.mxu0 0.0
    %285 = vmatprep.subr.mxu0 0.0
    %286 = vmatpush2.msra.mxu0 0.0
    %287 = vmatprep.subr.mxu0 0.0
    %288 = vmatpush2.msra.mxu0 0.0
    %289 = vmatprep.subr.mxu0 0.0
    %290 = vmatpush2.msra.mxu0 0.0
    %291 = vmatprep.subr.mxu0 0.0
    %292 = vmatpush2.msra.mxu0 0.0
    %293 = vmatprep.subr.mxu0 0.0
    %294 = vmatpush2.msra.mxu0 0.0
    %295 = vmatprep.subr.mxu0 0.0
    %296 = vmatpush2.msra.mxu0 0.0
    %297 = vmatprep.subr.mxu0 0.0
    %298 = vmatpush2.msra.mxu0 0.0
    %299 = vmatprep.subr.mxu0 0.0
    %300 = vmatpush2.msra.mxu0 0.0
    %301 = vmatprep.subr.mxu0 0.0
    %302 = vmatpush2.msra.mxu0 0.0
    %303 = vmatprep.subr.mxu0 0.0
    %304 = vmatpush2.msra.mxu0 0.0
    %305 = vmatprep.subr.mxu0 0.0
    %306 = vmatpush2.msra.mxu0 0.0
    %307 = vmatprep.mubr.f32.mxu0 0.0
    %308 = vmatmul.mubr.f32.gmra.mxu0 %v107
    %v309 = vpop.f32.mrf.mxu0
    %v310 = vadd.f32 %v101, %v309
    %v311 = vpop.f32.mrf.mxu0
    %312 = vmatprep.mubr.f32.mxu0 0.0
    %313 = vmatmul.mubr.f32.gmra.mxu0 %v110
    %v314 = vpop.f32.mrf.mxu0
    %v315 = vadd.f32 %v101, %v314
    %v316 = vpop.f32.mrf.mxu0
    %317 = vmatprep.mubr.f32.mxu0 0.0
    %318 = vmatmul.mubr.f32.gmra.mxu0 %v113
    %v319 = vpop.f32.mrf.mxu0
    %v320 = vadd.f32 %v101, %v319
    %v321 = vpop.f32.mrf.mxu0
    %322 = vmatprep.mubr.f32.mxu0 0.0
    %323 = vmatmul.mubr.f32.gmra.mxu0 %v116
    %v324 = vpop.f32.mrf.mxu0
    %v325 = vadd.f32 %v101, %v324
    %v326 = vpop.f32.mrf.mxu0
    %327 = vmatprep.mubr.f32.mxu0 0.0
    %328 = vmatmul.mubr.f32.gmra.mxu0 %v119
    %v329 = vpop.f32.mrf.mxu0
    %v330 = vadd.f32 %v101, %v329
    %v331 = vpop.f32.mrf.mxu0
    %332 = vmatprep.mubr.f32.mxu0 0.0
    %333 = vmatmul.mubr.f32.gmra.mxu0 %v122
    %v334 = vpop.f32.mrf.mxu0
    %v335 = vadd.f32 %v101, %v334
    %v336 = vpop.f32.mrf.mxu0
    %337 = vmatprep.mubr.f32.mxu0 0.0
    %338 = vmatmul.mubr.f32.gmra.mxu0 %v125
    %v339 = vpop.f32.mrf.mxu0
    %v340 = vadd.f32 %v101, %v339
    %v341 = vpop.f32.mrf.mxu0
    %342 = vmatprep.mubr.f32.mxu0 0.0
    %343 = vmatmul.mubr.f32.gmra.mxu0 %v128
    %v344 = vpop.f32.mrf.mxu0
    %v345 = vadd.f32 %v101, %v344
    %v346 = vpop.f32.mrf.mxu0
    %347 = vdwg.mxu0
    %v348 = vld [vmem:[#allocation2] sm:$0xff]
    %v349 = vld [vmem:[#allocation2 + $0x8] sm:$0xff]
    %v350 = vld [vmem:[#allocation2 + $0x10] sm:$0xff]
    %v351 = vld [vmem:[#allocation2 + $0x18] sm:$0xff]
    %v352 = vld [vmem:[#allocation2 + $0x20] sm:$0xff]
    %v353 = vld [vmem:[#allocation2 + $0x28] sm:$0xff]
    %v354 = vld [vmem:[#allocation2 + $0x30] sm:$0xff]
    %v355 = vld [vmem:[#allocation2 + $0x38] sm:$0xff]
    %v356 = vld [vmem:[#allocation2 + $0x40] sm:$0xff]
    %v357 = vld [vmem:[#allocation2 + $0x48] sm:$0xff]
    %v358 = vld [vmem:[#allocation2 + $0x50] sm:$0xff]
    %v359 = vld [vmem:[#allocation2 + $0x58] sm:$0xff]
    %v360 = vld [vmem:[#allocation2 + $0x60] sm:$0xff]
    %v361 = vld [vmem:[#allocation2 + $0x68] sm:$0xff]
    %v362 = vld [vmem:[#allocation2 + $0x70] sm:$0xff]
    %v363 = vld [vmem:[#allocation2 + $0x78] sm:$0xff]
    %v364 = vld [vmem:[#allocation2 + $0x80] sm:$0xff]
    %v365 = vld [vmem:[#allocation2 + $0x88] sm:$0xff]
    %v366 = vld [vmem:[#allocation2 + $0x90] sm:$0xff]
    %v367 = vld [vmem:[#allocation2 + $0x98] sm:$0xff]
    %v368 = vld [vmem:[#allocation2 + $0xa0] sm:$0xff]
    %v369 = vld [vmem:[#allocation2 + $0xa8] sm:$0xff]
    %v370 = vld [vmem:[#allocation2 + $0xb0] sm:$0xff]
    %v371 = vld [vmem:[#allocation2 + $0xb8] sm:$0xff]
    %v372 = vld [vmem:[#allocation2 + $0xc0] sm:$0xff]
    %v373 = vld [vmem:[#allocation2 + $0xc8] sm:$0xff]
    %v374 = vld [vmem:[#allocation2 + $0xd0] sm:$0xff]
    %v375 = vld [vmem:[#allocation2 + $0xd8] sm:$0xff]
    %v376 = vld [vmem:[#allocation2 + $0xe0] sm:$0xff]
    %v377 = vld [vmem:[#allocation2 + $0xe8] sm:$0xff]
    %v378 = vld [vmem:[#allocation2 + $0xf0] sm:$0xff]
    %v379 = vld [vmem:[#allocation2 + $0xf8] sm:$0xff]
    %v380 = vld [vmem:[#allocation2 + $0x100] sm:$0xff]
    %v381 = vld [vmem:[#allocation2 + $0x108] sm:$0xff]
    %v382 = vld [vmem:[#allocation2 + $0x110] sm:$0xff]
    %v383 = vld [vmem:[#allocation2 + $0x118] sm:$0xff]
    %v384 = vld [vmem:[#allocation2 + $0x120] sm:$0xff]
    %v385 = vld [vmem:[#allocation2 + $0x128] sm:$0xff]
    %v386 = vld [vmem:[#allocation2 + $0x130] sm:$0xff]
    %v387 = vld [vmem:[#allocation2 + $0x138] sm:$0xff]
    %v388 = vld [vmem:[#allocation2 + $0x140] sm:$0xff]
    %v389 = vld [vmem:[#allocation2 + $0x148] sm:$0xff]
    %v390 = vld [vmem:[#allocation2 + $0x150] sm:$0xff]
    %v391 = vld [vmem:[#allocation2 + $0x158] sm:$0xff]
    %v392 = vld [vmem:[#allocation2 + $0x160] sm:$0xff]
    %v393 = vld [vmem:[#allocation2 + $0x168] sm:$0xff]
    %v394 = vld [vmem:[#allocation2 + $0x170] sm:$0xff]
    %v395 = vld [vmem:[#allocation2 + $0x178] sm:$0xff]
    %v396 = vld [vmem:[%s4] sm:$0x1]
    %v398 = vlaneseq
    %v399 = vshrl.u32 %v398, 7
    %v400 = vsub.s32 0, %v399
    %v401 = vrot.slane %v396, %v400
    %v403 = vld [vmem:[#allocation5] sm:$0xff]
    %v404 = vld [vmem:[#allocation5 + $0x8] sm:$0xff]
    %v405 = vld [vmem:[#allocation5 + $0x10] sm:$0xff]
    %v406 = vld [vmem:[#allocation5 + $0x18] sm:$0xff]
    %v407 = vld [vmem:[#allocation5 + $0x20] sm:$0xff]
    %v408 = vld [vmem:[#allocation5 + $0x28] sm:$0xff]
    %v409 = vld [vmem:[#allocation5 + $0x30] sm:$0xff]
    %v410 = vld [vmem:[#allocation5 + $0x38] sm:$0xff]
    %v411 = vld [vmem:[#allocation5 + $0x40] sm:$0xff]
    %v412 = vld [vmem:[#allocation5 + $0x48] sm:$0xff]
    %v413 = vld [vmem:[#allocation5 + $0x50] sm:$0xff]
    %v414 = vld [vmem:[#allocation5 + $0x58] sm:$0xff]
    %v415 = vld [vmem:[#allocation5 + $0x60] sm:$0xff]
    %v416 = vld [vmem:[#allocation5 + $0x68] sm:$0xff]
    %v417 = vld [vmem:[#allocation5 + $0x70] sm:$0xff]
    %v418 = vld [vmem:[#allocation5 + $0x78] sm:$0xff]
    %v419 = vld [vmem:[#allocation5 + $0x80] sm:$0xff]
    %v420 = vld [vmem:[#allocation5 + $0x88] sm:$0xff]
    %v421 = vld [vmem:[#allocation5 + $0x90] sm:$0xff]
    %v422 = vld [vmem:[#allocation5 + $0x98] sm:$0xff]
    %v423 = vld [vmem:[#allocation5 + $0xa0] sm:$0xff]
    %v424 = vld [vmem:[#allocation5 + $0xa8] sm:$0xff]
    %v425 = vld [vmem:[#allocation5 + $0xb0] sm:$0xff]
    %v426 = vld [vmem:[#allocation5 + $0xb8] sm:$0xff]
    %v427 = vld [vmem:[#allocation5 + $0xc0] sm:$0xff]
    %v428 = vld [vmem:[#allocation5 + $0xc8] sm:$0xff]
    %v429 = vld [vmem:[#allocation5 + $0xd0] sm:$0xff]
    %v430 = vld [vmem:[#allocation5 + $0xd8] sm:$0xff]
    %v431 = vld [vmem:[#allocation5 + $0xe0] sm:$0xff]
    %v432 = vld [vmem:[#allocation5 + $0xe8] sm:$0xff]
    %v433 = vld [vmem:[#allocation5 + $0xf0] sm:$0xff]
    %v434 = vld [vmem:[#allocation5 + $0xf8] sm:$0xff]
    %v435 = vld [vmem:[#allocation5 + $0x100] sm:$0xff]
    %v436 = vld [vmem:[#allocation5 + $0x108] sm:$0xff]
    %v437 = vld [vmem:[#allocation5 + $0x110] sm:$0xff]
    %v438 = vld [vmem:[#allocation5 + $0x118] sm:$0xff]
    %v439 = vld [vmem:[#allocation5 + $0x120] sm:$0xff]
    %v440 = vld [vmem:[#allocation5 + $0x128] sm:$0xff]
    %v441 = vld [vmem:[#allocation5 + $0x130] sm:$0xff]
    %v442 = vld [vmem:[#allocation5 + $0x138] sm:$0xff]
    %v443 = vld [vmem:[#allocation5 + $0x140] sm:$0xff]
    %v444 = vld [vmem:[#allocation5 + $0x148] sm:$0xff]
    %v445 = vld [vmem:[#allocation5 + $0x150] sm:$0xff]
    %v446 = vld [vmem:[#allocation5 + $0x158] sm:$0xff]
    %v447 = vld [vmem:[#allocation5 + $0x160] sm:$0xff]
    %v448 = vld [vmem:[#allocation5 + $0x168] sm:$0xff]
    %v449 = vld [vmem:[#allocation5 + $0x170] sm:$0xff]
    %v450 = vld [vmem:[#allocation5 + $0x178] sm:$0xff]
    %v451 = vld [vmem:[%s6] sm:$0x7]
    %v453 = vlaneseq
    %v454 = vshrl.u32 %v453, 7
    %v455 = vsub.s32 0, %v454
    %v456 = vrot.slane %v451, %v455
    %v457 = vlaneseq
    %v458 = vshrl.u32 %v457, 7
    %v459 = vsub.s32 1, %v458
    %v460 = vrot.slane %v451, %v459
    %v461 = vlaneseq
    %v462 = vshrl.u32 %v461, 7
    %v463 = vsub.s32 2, %v462
    %v464 = vrot.slane %v451, %v463
    %v468 = vld [vmem:[#allocation7] sm:$0xff]
    %v469 = vld [vmem:[#allocation7 + $0x8] sm:$0xff]
    %v470 = vld [vmem:[#allocation7 + $0x10] sm:$0xff]
    %v471 = vld [vmem:[#allocation7 + $0x18] sm:$0xff]
    %v472 = vld [vmem:[#allocation7 + $0x20] sm:$0xff]
    %v473 = vld [vmem:[#allocation7 + $0x28] sm:$0xff]
    %v474 = vld [vmem:[#allocation7 + $0x30] sm:$0xff]
    %v475 = vld [vmem:[#allocation7 + $0x38] sm:$0xff]
    %v476 = vld [vmem:[#allocation7 + $0x40] sm:$0xff]
    %v477 = vld [vmem:[#allocation7 + $0x48] sm:$0xff]
    %v478 = vld [vmem:[#allocation7 + $0x50] sm:$0xff]
    %v479 = vld [vmem:[#allocation7 + $0x58] sm:$0xff]
    %v480 = vld [vmem:[#allocation7 + $0x60] sm:$0xff]
    %v481 = vld [vmem:[#allocation7 + $0x68] sm:$0xff]
    %v482 = vld [vmem:[#allocation7 + $0x70] sm:$0xff]
    %v483 = vld [vmem:[#allocation7 + $0x78] sm:$0xff]
    %v484 = vld [vmem:[#allocation7 + $0x80] sm:$0xff]
    %v485 = vld [vmem:[#allocation7 + $0x88] sm:$0xff]
    %v486 = vld [vmem:[#allocation7 + $0x90] sm:$0xff]
    %v487 = vld [vmem:[#allocation7 + $0x98] sm:$0xff]
    %v488 = vld [vmem:[#allocation7 + $0xa0] sm:$0xff]
    %v489 = vld [vmem:[#allocation7 + $0xa8] sm:$0xff]
    %v490 = vld [vmem:[#allocation7 + $0xb0] sm:$0xff]
    %v491 = vld [vmem:[#allocation7 + $0xb8] sm:$0xff]
    %v492 = vld [vmem:[#allocation7 + $0xc0] sm:$0xff]
    %v493 = vld [vmem:[#allocation7 + $0xc8] sm:$0xff]
    %v494 = vld [vmem:[#allocation7 + $0xd0] sm:$0xff]
    %v495 = vld [vmem:[#allocation7 + $0xd8] sm:$0xff]
    %v496 = vld [vmem:[#allocation7 + $0xe0] sm:$0xff]
    %v497 = vld [vmem:[#allocation7 + $0xe8] sm:$0xff]
    %v498 = vld [vmem:[#allocation7 + $0xf0] sm:$0xff]
    %v499 = vld [vmem:[#allocation7 + $0xf8] sm:$0xff]
    %v500 = vld [vmem:[#allocation7 + $0x100] sm:$0xff]
    %v501 = vld [vmem:[#allocation7 + $0x108] sm:$0xff]
    %v502 = vld [vmem:[#allocation7 + $0x110] sm:$0xff]
    %v503 = vld [vmem:[#allocation7 + $0x118] sm:$0xff]
    %v504 = vld [vmem:[#allocation7 + $0x120] sm:$0xff]
    %v505 = vld [vmem:[#allocation7 + $0x128] sm:$0xff]
    %v506 = vld [vmem:[#allocation7 + $0x130] sm:$0xff]
    %v507 = vld [vmem:[#allocation7 + $0x138] sm:$0xff]
    %v508 = vld [vmem:[#allocation7 + $0x140] sm:$0xff]
    %v509 = vld [vmem:[#allocation7 + $0x148] sm:$0xff]
    %v510 = vld [vmem:[#allocation7 + $0x150] sm:$0xff]
    %v511 = vld [vmem:[#allocation7 + $0x158] sm:$0xff]
    %v512 = vld [vmem:[#allocation7 + $0x160] sm:$0xff]
    %v513 = vld [vmem:[#allocation7 + $0x168] sm:$0xff]
    %v514 = vld [vmem:[#allocation7 + $0x170] sm:$0xff]
    %v515 = vld [vmem:[#allocation7 + $0x178] sm:$0xff]
    %v516 = vld [vmem:[%s8] sm:$0x1]
    %v518 = vlaneseq
    %v519 = vshrl.u32 %v518, 7
    %v520 = vsub.s32 0, %v519
    %v521 = vrot.slane %v516, %v520
    %523 = vmatprep.subr.mxu0 %v394
    %524 = vmatpush1.msra.mxu0 %v393
    %525 = vmatprep.subr.mxu0 %v391
    %526 = vmatpush1.msra.mxu0 %v390
    %527 = vmatprep.subr.mxu0 %v388
    %528 = vmatpush1.msra.mxu0 %v387
    %529 = vmatprep.subr.mxu0 %v385
    %530 = vmatpush1.msra.mxu0 %v384
    %531 = vmatprep.subr.mxu0 %v382
    %532 = vmatpush1.msra.mxu0 %v381
    %533 = vmatprep.subr.mxu0 %v379
    %534 = vmatpush1.msra.mxu0 %v378
    %535 = vmatprep.subr.mxu0 %v376
    %536 = vmatpush1.msra.mxu0 %v375
    %537 = vmatprep.subr.mxu0 %v373
    %538 = vmatpush1.msra.mxu0 %v372
    %539 = vmatprep.subr.mxu0 %v370
    %540 = vmatpush1.msra.mxu0 %v369
    %541 = vmatprep.subr.mxu0 %v367
    %542 = vmatpush1.msra.mxu0 %v366
    %543 = vmatprep.subr.mxu0 %v364
    %544 = vmatpush1.msra.mxu0 %v363
    %545 = vmatprep.subr.mxu0 %v361
    %546 = vmatpush1.msra.mxu0 %v360
    %547 = vmatprep.subr.mxu0 %v358
    %548 = vmatpush1.msra.mxu0 %v357
    %549 = vmatprep.subr.mxu0 %v355
    %550 = vmatpush1.msra.mxu0 %v354
    %551 = vmatprep.subr.mxu0 %v352
    %552 = vmatpush1.msra.mxu0 %v351
    %553 = vmatprep.subr.mxu0 %v349
    %554 = vmatpush1.msra.mxu0 %v348
    %555 = vmatprep.subr.mxu0 0.0
    %556 = vmatpush2.msra.mxu0 0.0
    %557 = vmatprep.subr.mxu0 0.0
    %558 = vmatpush2.msra.mxu0 0.0
    %559 = vmatprep.subr.mxu0 0.0
    %560 = vmatpush2.msra.mxu0 0.0
    %561 = vmatprep.subr.mxu0 0.0
    %562 = vmatpush2.msra.mxu0 0.0
    %563 = vmatprep.subr.mxu0 0.0
    %564 = vmatpush2.msra.mxu0 0.0
    %565 = vmatprep.subr.mxu0 0.0
    %566 = vmatpush2.msra.mxu0 0.0
    %567 = vmatprep.subr.mxu0 0.0
    %568 = vmatpush2.msra.mxu0 0.0
    %569 = vmatprep.subr.mxu0 0.0
    %570 = vmatpush2.msra.mxu0 0.0
    %571 = vmatprep.subr.mxu0 0.0
    %572 = vmatpush2.msra.mxu0 0.0
    %573 = vmatprep.subr.mxu0 0.0
    %574 = vmatpush2.msra.mxu0 0.0
    %575 = vmatprep.subr.mxu0 0.0
    %576 = vmatpush2.msra.mxu0 0.0
    %577 = vmatprep.subr.mxu0 0.0
    %578 = vmatpush2.msra.mxu0 0.0
    %579 = vmatprep.subr.mxu0 0.0
    %580 = vmatpush2.msra.mxu0 0.0
    %581 = vmatprep.subr.mxu0 0.0
    %582 = vmatpush2.msra.mxu0 0.0
    %583 = vmatprep.subr.mxu0 0.0
    %584 = vmatpush2.msra.mxu0 0.0
    %585 = vmatprep.subr.mxu0 0.0
    %586 = vmatpush2.msra.mxu0 0.0
    %587 = vmatprep.mubr.f32.mxu0 0.0
    %588 = vmatmul.mubr.f32.gmra.mxu0 0.0
    %v589 = vpop.f32.mrf.mxu0
    %v590 = vadd.f32 0.0, %v589
    %v591 = vpop.f32.mrf.mxu0
    %v592 = vadd.f32 0.0, %v591
    %593 = vdwg.mxu0
    %594 = vmatprep.subr.mxu0 0.0
    %595 = vmatpush1.msra.mxu0 %v395
    %596 = vmatprep.subr.mxu0 0.0
    %597 = vmatpush1.msra.mxu0 %v392
    %598 = vmatprep.subr.mxu0 0.0
    %599 = vmatpush1.msra.mxu0 %v389
    %600 = vmatprep.subr.mxu0 0.0
    %601 = vmatpush1.msra.mxu0 %v386
    %602 = vmatprep.subr.mxu0 0.0
    %603 = vmatpush1.msra.mxu0 %v383
    %604 = vmatprep.subr.mxu0 0.0
    %605 = vmatpush1.msra.mxu0 %v380
    %606 = vmatprep.subr.mxu0 0.0
    %607 = vmatpush1.msra.mxu0 %v377
    %608 = vmatprep.subr.mxu0 0.0
    %609 = vmatpush1.msra.mxu0 %v374
    %610 = vmatprep.subr.mxu0 0.0
    %611 = vmatpush1.msra.mxu0 %v371
    %612 = vmatprep.subr.mxu0 0.0
    %613 = vmatpush1.msra.mxu0 %v368
    %614 = vmatprep.subr.mxu0 0.0
    %615 = vmatpush1.msra.mxu0 %v365
    %616 = vmatprep.subr.mxu0 0.0
    %617 = vmatpush1.msra.mxu0 %v362
    %618 = vmatprep.subr.mxu0 0.0
    %619 = vmatpush1.msra.mxu0 %v359
    %620 = vmatprep.subr.mxu0 0.0
    %621 = vmatpush1.msra.mxu0 %v356
    %622 = vmatprep.subr.mxu0 0.0
    %623 = vmatpush1.msra.mxu0 %v353
    %624 = vmatprep.subr.mxu0 0.0
    %625 = vmatpush1.msra.mxu0 %v350
    %626 = vmatprep.subr.mxu0 0.0
    %627 = vmatpush2.msra.mxu0 0.0
    %628 = vmatprep.subr.mxu0 0.0
    %629 = vmatpush2.msra.mxu0 0.0
    %630 = vmatprep.subr.mxu0 0.0
    %631 = vmatpush2.msra.mxu0 0.0
    %632 = vmatprep.subr.mxu0 0.0
    %633 = vmatpush2.msra.mxu0 0.0
    %634 = vmatprep.subr.mxu0 0.0
    %635 = vmatpush2.msra.mxu0 0.0
    %636 = vmatprep.subr.mxu0 0.0
    %637 = vmatpush2.msra.mxu0 0.0
    %638 = vmatprep.subr.mxu0 0.0
    %639 = vmatpush2.msra.mxu0 0.0
    %640 = vmatprep.subr.mxu0 0.0
    %641 = vmatpush2.msra.mxu0 0.0
    %642 = vmatprep.subr.mxu0 0.0
    %643 = vmatpush2.msra.mxu0 0.0
    %644 = vmatprep.subr.mxu0 0.0
    %645 = vmatpush2.msra.mxu0 0.0
    %646 = vmatprep.subr.mxu0 0.0
    %647 = vmatpush2.msra.mxu0 0.0
    %648 = vmatprep.subr.mxu0 0.0
    %649 = vmatpush2.msra.mxu0 0.0
    %650 = vmatprep.subr.mxu0 0.0
    %651 = vmatpush2.msra.mxu0 0.0
    %652 = vmatprep.subr.mxu0 0.0
    %653 = vmatpush2.msra.mxu0 0.0
    %654 = vmatprep.subr.mxu0 0.0
    %655 = vmatpush2.msra.mxu0 0.0
    %656 = vmatprep.subr.mxu0 0.0
    %657 = vmatpush2.msra.mxu0 0.0
    %658 = vmatprep.mubr.f32.mxu0 0.0
    %659 = vmatmul.mubr.f32.gmra.mxu0 0.0
    %v660 = vpop.f32.mrf.mxu0
    %v661 = vadd.f32 0.0, %v660
    %v662 = vpop.f32.mrf.mxu0
    %663 = vdwg.mxu0
    %v664 = vadd.f32 %v197, %v590
    %v665 = vxor.u32 %v664, 2147483648
    %v666 = vmul.f32 %v665, 1.442695
    %v667 = vpow.pop %v666
    %v668 = vadd.f32 %v667, 1.0
    %v669 = vrcp.pop %v668
    %v670 = vmul.f32 1.0, %v669
    %v671 = vadd.f32 %v199, %v592
    %v672 = vxor.u32 %v671, 2147483648
    %v673 = vmul.f32 %v672, 1.442695
    %v674 = vpow.pop %v673
    %v675 = vadd.f32 %v674, 1.0
    %v676 = vrcp.pop %v675
    %v677 = vmul.f32 1.0, %v676
    %v678 = vadd.f32 %v661, %v401
    %v679 = vmul.f32 %v670, %v678
    %v680 = vadd.f32 %v310, %v679
    %v681 = vtanh.pop %v680
    %v682 = vsub.f32 1.0, %v677
    %v683 = vmul.f32 %v682, %v681
    %v684 = vmul.f32 %v677, 0.0
    %v685 = vadd.f32 %v683, %v684
    %686 = vmatprep.subr.mxu0 %v449
    %687 = vmatpush1.msra.mxu0 %v448
    %688 = vmatprep.subr.mxu0 %v446
    %689 = vmatpush1.msra.mxu0 %v445
    %690 = vmatprep.subr.mxu0 %v443
    %691 = vmatpush1.msra.mxu0 %v442
    %692 = vmatprep.subr.mxu0 %v440
    %693 = vmatpush1.msra.mxu0 %v439
    %694 = vmatprep.subr.mxu0 %v437
    %695 = vmatpush1.msra.mxu0 %v436
    %696 = vmatprep.subr.mxu0 %v434
    %697 = vmatpush1.msra.mxu0 %v433
    %698 = vmatprep.subr.mxu0 %v431
    %699 = vmatpush1.msra.mxu0 %v430
    %700 = vmatprep.subr.mxu0 %v428
    %701 = vmatpush1.msra.mxu0 %v427
    %702 = vmatprep.subr.mxu0 %v425
    %703 = vmatpush1.msra.mxu0 %v424
    %704 = vmatprep.subr.mxu0 %v422
    %705 = vmatpush1.msra.mxu0 %v421
    %706 = vmatprep.subr.mxu0 %v419
    %707 = vmatpush1.msra.mxu0 %v418
    %708 = vmatprep.subr.mxu0 %v416
    %709 = vmatpush1.msra.mxu0 %v415
    %710 = vmatprep.subr.mxu0 %v413
    %711 = vmatpush1.msra.mxu0 %v412
    %712 = vmatprep.subr.mxu0 %v410
    %713 = vmatpush1.msra.mxu0 %v409
    %714 = vmatprep.subr.mxu0 %v407
    %715 = vmatpush1.msra.mxu0 %v406
    %716 = vmatprep.subr.mxu0 %v404
    %717 = vmatpush1.msra.mxu0 %v403
    %718 = vmatprep.subr.mxu0 0.0
    %719 = vmatpush2.msra.mxu0 0.0
    %720 = vmatprep.subr.mxu0 0.0
    %721 = vmatpush2.msra.mxu0 0.0
    %722 = vmatprep.subr.mxu0 0.0
    %723 = vmatpush2.msra.mxu0 0.0
    %724 = vmatprep.subr.mxu0 0.0
    %725 = vmatpush2.msra.mxu0 0.0
    %726 = vmatprep.subr.mxu0 0.0
    %727 = vmatpush2.msra.mxu0 0.0
    %728 = vmatprep.subr.mxu0 0.0
    %729 = vmatpush2.msra.mxu0 0.0
    %730 = vmatprep.subr.mxu0 0.0
    %731 = vmatpush2.msra.mxu0 0.0
    %732 = vmatprep.subr.mxu0 0.0
    %733 = vmatpush2.msra.mxu0 0.0
    %734 = vmatprep.subr.mxu0 0.0
    %735 = vmatpush2.msra.mxu0 0.0
    %736 = vmatprep.subr.mxu0 0.0
    %737 = vmatpush2.msra.mxu0 0.0
    %738 = vmatprep.subr.mxu0 0.0
    %739 = vmatpush2.msra.mxu0 0.0
    %740 = vmatprep.subr.mxu0 0.0
    %741 = vmatpush2.msra.mxu0 0.0
    %742 = vmatprep.subr.mxu0 0.0
    %743 = vmatpush2.msra.mxu0 0.0
    %744 = vmatprep.subr.mxu0 0.0
    %745 = vmatpush2.msra.mxu0 0.0
    %746 = vmatprep.subr.mxu0 0.0
    %747 = vmatpush2.msra.mxu0 0.0
    %748 = vmatprep.subr.mxu0 0.0
    %749 = vmatpush2.msra.mxu0 0.0
    %750 = vmatprep.mubr.f32.mxu0 0.0
    %751 = vmatmul.mubr.f32.gmra.mxu0 %v685
    %v752 = vpop.f32.mrf.mxu0
    %v753 = vadd.f32 %v456, %v752
    %v754 = vpop.f32.mrf.mxu0
    %v755 = vadd.f32 %v460, %v754
    %756 = vdwg.mxu0
    %757 = vmatprep.subr.mxu0 0.0
    %758 = vmatpush1.msra.mxu0 %v450
    %759 = vmatprep.subr.mxu0 0.0
    %760 = vmatpush1.msra.mxu0 %v447
    %761 = vmatprep.subr.mxu0 0.0
    %762 = vmatpush1.msra.mxu0 %v444
    %763 = vmatprep.subr.mxu0 0.0
    %764 = vmatpush1.msra.mxu0 %v441
    %765 = vmatprep.subr.mxu0 0.0
    %766 = vmatpush1.msra.mxu0 %v438
    %767 = vmatprep.subr.mxu0 0.0
    %768 = vmatpush1.msra.mxu0 %v435
    %769 = vmatprep.subr.mxu0 0.0
    %770 = vmatpush1.msra.mxu0 %v432
    %771 = vmatprep.subr.mxu0 0.0
    %772 = vmatpush1.msra.mxu0 %v429
    %773 = vmatprep.subr.mxu0 0.0
    %774 = vmatpush1.msra.mxu0 %v426
    %775 = vmatprep.subr.mxu0 0.0
    %776 = vmatpush1.msra.mxu0 %v423
    %777 = vmatprep.subr.mxu0 0.0
    %778 = vmatpush1.msra.mxu0 %v420
    %779 = vmatprep.subr.mxu0 0.0
    %780 = vmatpush1.msra.mxu0 %v417
    %781 = vmatprep.subr.mxu0 0.0
    %782 = vmatpush1.msra.mxu0 %v414
    %783 = vmatprep.subr.mxu0 0.0
    %784 = vmatpush1.msra.mxu0 %v411
    %785 = vmatprep.subr.mxu0 0.0
    %786 = vmatpush1.msra.mxu0 %v408
    %787 = vmatprep.subr.mxu0 0.0
    %788 = vmatpush1.msra.mxu0 %v405
    %789 = vmatprep.subr.mxu0 0.0
    %790 = vmatpush2.msra.mxu0 0.0
    %791 = vmatprep.subr.mxu0 0.0
    %792 = vmatpush2.msra.mxu0 0.0
    %793 = vmatprep.subr.mxu0 0.0
    %794 = vmatpush2.msra.mxu0 0.0
    %795 = vmatprep.subr.mxu0 0.0
    %796 = vmatpush2.msra.mxu0 0.0
    %797 = vmatprep.subr.mxu0 0.0
    %798 = vmatpush2.msra.mxu0 0.0
    %799 = vmatprep.subr.mxu0 0.0
    %800 = vmatpush2.msra.mxu0 0.0
    %801 = vmatprep.subr.mxu0 0.0
    %802 = vmatpush2.msra.mxu0 0.0
    %803 = vmatprep.subr.mxu0 0.0
    %804 = vmatpush2.msra.mxu0 0.0
    %805 = vmatprep.subr.mxu0 0.0
    %806 = vmatpush2.msra.mxu0 0.0
    %807 = vmatprep.subr.mxu0 0.0
    %808 = vmatpush2.msra.mxu0 0.0
    %809 = vmatprep.subr.mxu0 0.0
    %810 = vmatpush2.msra.mxu0 0.0
    %811 = vmatprep.subr.mxu0 0.0
    %812 = vmatpush2.msra.mxu0 0.0
    %813 = vmatprep.subr.mxu0 0.0
    %814 = vmatpush2.msra.mxu0 0.0
    %815 = vmatprep.subr.mxu0 0.0
    %816 = vmatpush2.msra.mxu0 0.0
    %817 = vmatprep.subr.mxu0 0.0
    %818 = vmatpush2.msra.mxu0 0.0
    %819 = vmatprep.subr.mxu0 0.0
    %820 = vmatpush2.msra.mxu0 0.0
    %821 = vmatprep.mubr.f32.mxu0 0.0
    %822 = vmatmul.mubr.f32.gmra.mxu0 %v685
    %v823 = vpop.f32.mrf.mxu0
    %v824 = vadd.f32 %v464, %v823
    %v825 = vpop.f32.mrf.mxu0
    %826 = vdwg.mxu0
    %827 = vmatprep.subr.mxu0 %v514
    %828 = vmatpush1.msra.mxu0 %v513
    %829 = vmatprep.subr.mxu0 %v511
    %830 = vmatpush1.msra.mxu0 %v510
    %831 = vmatprep.subr.mxu0 %v508
    %832 = vmatpush1.msra.mxu0 %v507
    %833 = vmatprep.subr.mxu0 %v505
    %834 = vmatpush1.msra.mxu0 %v504
    %835 = vmatprep.subr.mxu0 %v502
    %836 = vmatpush1.msra.mxu0 %v501
    %837 = vmatprep.subr.mxu0 %v499
    %838 = vmatpush1.msra.mxu0 %v498
    %839 = vmatprep.subr.mxu0 %v496
    %840 = vmatpush1.msra.mxu0 %v495
    %841 = vmatprep.subr.mxu0 %v493
    %842 = vmatpush1.msra.mxu0 %v492
    %843 = vmatprep.subr.mxu0 %v490
    %844 = vmatpush1.msra.mxu0 %v489
    %845 = vmatprep.subr.mxu0 %v487
    %846 = vmatpush1.msra.mxu0 %v486
    %847 = vmatprep.subr.mxu0 %v484
    %848 = vmatpush1.msra.mxu0 %v483
    %849 = vmatprep.subr.mxu0 %v481
    %850 = vmatpush1.msra.mxu0 %v480
    %851 = vmatprep.subr.mxu0 %v478
    %852 = vmatpush1.msra.mxu0 %v477
    %853 = vmatprep.subr.mxu0 %v475
    %854 = vmatpush1.msra.mxu0 %v474
    %855 = vmatprep.subr.mxu0 %v472
    %856 = vmatpush1.msra.mxu0 %v471
    %857 = vmatprep.subr.mxu0 %v469
    %858 = vmatpush1.msra.mxu0 %v468
    %859 = vmatprep.subr.mxu0 0.0
    %860 = vmatpush2.msra.mxu0 0.0
    %861 = vmatprep.subr.mxu0 0.0
    %862 = vmatpush2.msra.mxu0 0.0
    %863 = vmatprep.subr.mxu0 0.0
    %864 = vmatpush2.msra.mxu0 0.0
    %865 = vmatprep.subr.mxu0 0.0
    %866 = vmatpush2.msra.mxu0 0.0
    %867 = vmatprep.subr.mxu0 0.0
    %868 = vmatpush2.msra.mxu0 0.0
    %869 = vmatprep.subr.mxu0 0.0
    %870 = vmatpush2.msra.mxu0 0.0
    %871 = vmatprep.subr.mxu0 0.0
    %872 = vmatpush2.msra.mxu0 0.0
    %873 = vmatprep.subr.mxu0 0.0
    %874 = vmatpush2.msra.mxu0 0.0
    %875 = vmatprep.subr.mxu0 0.0
    %876 = vmatpush2.msra.mxu0 0.0
    %877 = vmatprep.subr.mxu0 0.0
    %878 = vmatpush2.msra.mxu0 0.0
    %879 = vmatprep.subr.mxu0 0.0
    %880 = vmatpush2.msra.mxu0 0.0
    %881 = vmatprep.subr.mxu0 0.0
    %882 = vmatpush2.msra.mxu0 0.0
    %883 = vmatprep.subr.mxu0 0.0
    %884 = vmatpush2.msra.mxu0 0.0
    %885 = vmatprep.subr.mxu0 0.0
    %886 = vmatpush2.msra.mxu0 0.0
    %887 = vmatprep.subr.mxu0 0.0
    %888 = vmatpush2.msra.mxu0 0.0
    %889 = vmatprep.subr.mxu0 0.0
    %890 = vmatpush2.msra.mxu0 0.0
    %891 = vmatprep.mubr.f32.mxu0 0.0
    %892 = vmatmul.mubr.f32.gmra.mxu0 0.0
    %v893 = vpop.f32.mrf.mxu0
    %v894 = vadd.f32 0.0, %v893
    %v895 = vpop.f32.mrf.mxu0
    %v896 = vadd.f32 0.0, %v895
    %897 = vdwg.mxu0
    %898 = vmatprep.subr.mxu0 0.0
    %899 = vmatpush1.msra.mxu0 %v515
    %900 = vmatprep.subr.mxu0 0.0
    %901 = vmatpush1.msra.mxu0 %v512
    %902 = vmatprep.subr.mxu0 0.0
    %903 = vmatpush1.msra.mxu0 %v509
    %904 = vmatprep.subr.mxu0 0.0
    %905 = vmatpush1.msra.mxu0 %v506
    %906 = vmatprep.subr.mxu0 0.0
    %907 = vmatpush1.msra.mxu0 %v503
    %908 = vmatprep.subr.mxu0 0.0
    %909 = vmatpush1.msra.mxu0 %v500
    %910 = vmatprep.subr.mxu0 0.0
    %911 = vmatpush1.msra.mxu0 %v497
    %912 = vmatprep.subr.mxu0 0.0
    %913 = vmatpush1.msra.mxu0 %v494
    %914 = vmatprep.subr.mxu0 0.0
    %915 = vmatpush1.msra.mxu0 %v491
    %916 = vmatprep.subr.mxu0 0.0
    %917 = vmatpush1.msra.mxu0 %v488
    %918 = vmatprep.subr.mxu0 0.0
    %919 = vmatpush1.msra.mxu0 %v485
    %920 = vmatprep.subr.mxu0 0.0
    %921 = vmatpush1.msra.mxu0 %v482
    %922 = vmatprep.subr.mxu0 0.0
    %923 = vmatpush1.msra.mxu0 %v479
    %924 = vmatprep.subr.mxu0 0.0
    %925 = vmatpush1.msra.mxu0 %v476
    %926 = vmatprep.subr.mxu0 0.0
    %927 = vmatpush1.msra.mxu0 %v473
    %928 = vmatprep.subr.mxu0 0.0
    %929 = vmatpush1.msra.mxu0 %v470
    %930 = vmatprep.subr.mxu0 0.0
    %931 = vmatpush2.msra.mxu0 0.0
    %932 = vmatprep.subr.mxu0 0.0
    %933 = vmatpush2.msra.mxu0 0.0
    %934 = vmatprep.subr.mxu0 0.0
    %935 = vmatpush2.msra.mxu0 0.0
    %936 = vmatprep.subr.mxu0 0.0
    %937 = vmatpush2.msra.mxu0 0.0
    %938 = vmatprep.subr.mxu0 0.0
    %939 = vmatpush2.msra.mxu0 0.0
    %940 = vmatprep.subr.mxu0 0.0
    %941 = vmatpush2.msra.mxu0 0.0
    %942 = vmatprep.subr.mxu0 0.0
    %943 = vmatpush2.msra.mxu0 0.0
    %944 = vmatprep.subr.mxu0 0.0
    %945 = vmatpush2.msra.mxu0 0.0
    %946 = vmatprep.subr.mxu0 0.0
    %947 = vmatpush2.msra.mxu0 0.0
    %948 = vmatprep.subr.mxu0 0.0
    %949 = vmatpush2.msra.mxu0 0.0
    %950 = vmatprep.subr.mxu0 0.0
    %951 = vmatpush2.msra.mxu0 0.0
    %952 = vmatprep.subr.mxu0 0.0
    %953 = vmatpush2.msra.mxu0 0.0
    %954 = vmatprep.subr.mxu0 0.0
    %955 = vmatpush2.msra.mxu0 0.0
    %956 = vmatprep.subr.mxu0 0.0
    %957 = vmatpush2.msra.mxu0 0.0
    %958 = vmatprep.subr.mxu0 0.0
    %959 = vmatpush2.msra.mxu0 0.0
    %960 = vmatprep.subr.mxu0 0.0
    %961 = vmatpush2.msra.mxu0 0.0
    %962 = vmatprep.mubr.f32.mxu0 0.0
    %963 = vmatmul.mubr.f32.gmra.mxu0 0.0
    %v964 = vpop.f32.mrf.mxu0
    %v965 = vadd.f32 0.0, %v964
    %v966 = vpop.f32.mrf.mxu0
    %967 = vdwg.mxu0
    %v968 = vadd.f32 %v753, %v894
    %v969 = vxor.u32 %v968, 2147483648
    %v970 = vmul.f32 %v969, 1.442695
    %v971 = vpow.pop %v970
    %v972 = vadd.f32 %v971, 1.0
    %v973 = vrcp.pop %v972
    %v974 = vmul.f32 1.0, %v973
    %v975 = vadd.f32 %v755, %v896
    %v976 = vxor.u32 %v975, 2147483648
    %v977 = vmul.f32 %v976, 1.442695
    %v978 = vpow.pop %v977
    %v979 = vadd.f32 %v978, 1.0
    %v980 = vrcp.pop %v979
    %v981 = vmul.f32 1.0, %v980
    %v982 = vadd.f32 %v965, %v521
    %v983 = vmul.f32 %v974, %v982
    %v984 = vadd.f32 %v824, %v983
    %v985 = vtanh.pop %v984
    %v986 = vsub.f32 1.0, %v981
    %v987 = vmul.f32 %v986, %v985
    %v988 = vmul.f32 %v981, 0.0
    %v989 = vadd.f32 %v987, %v988
    %990 = vmatprep.subr.mxu0 %v394
    %991 = vmatpush1.msra.mxu0 %v393
    %992 = vmatprep.subr.mxu0 %v391
    %993 = vmatpush1.msra.mxu0 %v390
    %994 = vmatprep.subr.mxu0 %v388
    %995 = vmatpush1.msra.mxu0 %v387
    %996 = vmatprep.subr.mxu0 %v385
    %997 = vmatpush1.msra.mxu0 %v384
    %998 = vmatprep.subr.mxu0 %v382
    %999 = vmatpush1.msra.mxu0 %v381
    %1000 = vmatprep.subr.mxu0 %v379
    %1001 = vmatpush1.msra.mxu0 %v378
    %1002 = vmatprep.subr.mxu0 %v376
    %1003 = vmatpush1.msra.mxu0 %v375
    %1004 = vmatprep.subr.mxu0 %v373
    %1005 = vmatpush1.msra.mxu0 %v372
    %1006 = vmatprep.subr.mxu0 %v370
    %1007 = vmatpush1.msra.mxu0 %v369
    %1008 = vmatprep.subr.mxu0 %v367
    %1009 = vmatpush1.msra.mxu0 %v366
    %1010 = vmatprep.subr.mxu0 %v364
    %1011 = vmatpush1.msra.mxu0 %v363
    %1012 = vmatprep.subr.mxu0 %v361
    %1013 = vmatpush1.msra.mxu0 %v360
    %1014 = vmatprep.subr.mxu0 %v358
    %1015 = vmatpush1.msra.mxu0 %v357
    %1016 = vmatprep.subr.mxu0 %v355
    %1017 = vmatpush1.msra.mxu0 %v354
    %1018 = vmatprep.subr.mxu0 %v352
    %1019 = vmatpush1.msra.mxu0 %v351
    %1020 = vmatprep.subr.mxu0 %v349
    %1021 = vmatpush1.msra.mxu0 %v348
    %1022 = vmatprep.subr.mxu0 0.0
    %1023 = vmatpush2.msra.mxu0 0.0
    %1024 = vmatprep.subr.mxu0 0.0
    %1025 = vmatpush2.msra.mxu0 0.0
    %1026 = vmatprep.subr.mxu0 0.0
    %1027 = vmatpush2.msra.mxu0 0.0
    %1028 = vmatprep.subr.mxu0 0.0
    %1029 = vmatpush2.msra.mxu0 0.0
    %1030 = vmatprep.subr.mxu0 0.0
    %1031 = vmatpush2.msra.mxu0 0.0
    %1032 = vmatprep.subr.mxu0 0.0
    %1033 = vmatpush2.msra.mxu0 0.0
    %1034 = vmatprep.subr.mxu0 0.0
    %1035 = vmatpush2.msra.mxu0 0.0
    %1036 = vmatprep.subr.mxu0 0.0
    %1037 = vmatpush2.msra.mxu0 0.0
    %1038 = vmatprep.subr.mxu0 0.0
    %1039 = vmatpush2.msra.mxu0 0.0
    %1040 = vmatprep.subr.mxu0 0.0
    %1041 = vmatpush2.msra.mxu0 0.0
    %1042 = vmatprep.subr.mxu0 0.0
    %1043 = vmatpush2.msra.mxu0 0.0
    %1044 = vmatprep.subr.mxu0 0.0
    %1045 = vmatpush2.msra.mxu0 0.0
    %1046 = vmatprep.subr.mxu0 0.0
    %1047 = vmatpush2.msra.mxu0 0.0
    %1048 = vmatprep.subr.mxu0 0.0
    %1049 = vmatpush2.msra.mxu0 0.0
    %1050 = vmatprep.subr.mxu0 0.0
    %1051 = vmatpush2.msra.mxu0 0.0
    %1052 = vmatprep.subr.mxu0 0.0
    %1053 = vmatpush2.msra.mxu0 0.0
    %1054 = vmatprep.mubr.f32.mxu0 0.0
    %1055 = vmatmul.mubr.f32.gmra.mxu0 %v685
    %v1056 = vpop.f32.mrf.mxu0
    %v1057 = vadd.f32 0.0, %v1056
    %v1058 = vpop.f32.mrf.mxu0
    %v1059 = vadd.f32 0.0, %v1058
    %1060 = vdwg.mxu0
    %1061 = vmatprep.subr.mxu0 0.0
    %1062 = vmatpush1.msra.mxu0 %v395
    %1063 = vmatprep.subr.mxu0 0.0
    %1064 = vmatpush1.msra.mxu0 %v392
    %1065 = vmatprep.subr.mxu0 0.0
    %1066 = vmatpush1.msra.mxu0 %v389
    %1067 = vmatprep.subr.mxu0 0.0
    %1068 = vmatpush1.msra.mxu0 %v386
    %1069 = vmatprep.subr.mxu0 0.0
    %1070 = vmatpush1.msra.mxu0 %v383
    %1071 = vmatprep.subr.mxu0 0.0
    %1072 = vmatpush1.msra.mxu0 %v380
    %1073 = vmatprep.subr.mxu0 0.0
    %1074 = vmatpush1.msra.mxu0 %v377
    %1075 = vmatprep.subr.mxu0 0.0
    %1076 = vmatpush1.msra.mxu0 %v374
    %1077 = vmatprep.subr.mxu0 0.0
    %1078 = vmatpush1.msra.mxu0 %v371
    %1079 = vmatprep.subr.mxu0 0.0
    %1080 = vmatpush1.msra.mxu0 %v368
    %1081 = vmatprep.subr.mxu0 0.0
    %1082 = vmatpush1.msra.mxu0 %v365
    %1083 = vmatprep.subr.mxu0 0.0
    %1084 = vmatpush1.msra.mxu0 %v362
    %1085 = vmatprep.subr.mxu0 0.0
    %1086 = vmatpush1.msra.mxu0 %v359
    %1087 = vmatprep.subr.mxu0 0.0
    %1088 = vmatpush1.msra.mxu0 %v356
    %1089 = vmatprep.subr.mxu0 0.0
    %1090 = vmatpush1.msra.mxu0 %v353
    %1091 = vmatprep.subr.mxu0 0.0
    %1092 = vmatpush1.msra.mxu0 %v350
    %1093 = vmatprep.subr.mxu0 0.0
    %1094 = vmatpush2.msra.mxu0 0.0
    %1095 = vmatprep.subr.mxu0 0.0
    %1096 = vmatpush2.msra.mxu0 0.0
    %1097 = vmatprep.subr.mxu0 0.0
    %1098 = vmatpush2.msra.mxu0 0.0
    %1099 = vmatprep.subr.mxu0 0.0
    %1100 = vmatpush2.msra.mxu0 0.0
    %1101 = vmatprep.subr.mxu0 0.0
    %1102 = vmatpush2.msra.mxu0 0.0
    %1103 = vmatprep.subr.mxu0 0.0
    %1104 = vmatpush2.msra.mxu0 0.0
    %1105 = vmatprep.subr.mxu0 0.0
    %1106 = vmatpush2.msra.mxu0 0.0
    %1107 = vmatprep.subr.mxu0 0.0
    %1108 = vmatpush2.msra.mxu0 0.0
    %1109 = vmatprep.subr.mxu0 0.0
    %1110 = vmatpush2.msra.mxu0 0.0
    %1111 = vmatprep.subr.mxu0 0.0
    %1112 = vmatpush2.msra.mxu0 0.0
    %1113 = vmatprep.subr.mxu0 0.0
    %1114 = vmatpush2.msra.mxu0 0.0
    %1115 = vmatprep.subr.mxu0 0.0
    %1116 = vmatpush2.msra.mxu0 0.0
    %1117 = vmatprep.subr.mxu0 0.0
    %1118 = vmatpush2.msra.mxu0 0.0
    %1119 = vmatprep.subr.mxu0 0.0
    %1120 = vmatpush2.msra.mxu0 0.0
    %1121 = vmatprep.subr.mxu0 0.0
    %1122 = vmatpush2.msra.mxu0 0.0
    %1123 = vmatprep.subr.mxu0 0.0
    %1124 = vmatpush2.msra.mxu0 0.0
    %1125 = vmatprep.mubr.f32.mxu0 0.0
    %1126 = vmatmul.mubr.f32.gmra.mxu0 %v685
    %v1127 = vpop.f32.mrf.mxu0
    %v1128 = vadd.f32 0.0, %v1127
    %v1129 = vpop.f32.mrf.mxu0
    %1130 = vdwg.mxu0
    %v1131 = vadd.f32 %v203, %v1057
    %v1132 = vxor.u32 %v1131, 2147483648
    %v1133 = vmul.f32 %v1132, 1.442695
    %v1134 = vpow.pop %v1133
    %v1135 = vadd.f32 %v1134, 1.0
    %v1136 = vrcp.pop %v1135
    %v1137 = vmul.f32 1.0, %v1136
    %v1138 = vadd.f32 %v205, %v1059
    %v1139 = vxor.u32 %v1138, 2147483648
    %v1140 = vmul.f32 %v1139, 1.442695
    %v1141 = vpow.pop %v1140
    %v1142 = vadd.f32 %v1141, 1.0
    %v1143 = vrcp.pop %v1142
    %v1144 = vmul.f32 1.0, %v1143
    %v1145 = vadd.f32 %v1128, %v401
    %v1146 = vmul.f32 %v1137, %v1145
    %v1147 = vadd.f32 %v315, %v1146
    %v1148 = vtanh.pop %v1147
    %v1149 = vsub.f32 1.0, %v1144
    %v1150 = vmul.f32 %v1149, %v1148
    %v1151 = vmul.f32 %v1144, %v685
    %v1152 = vadd.f32 %v1150, %v1151
    %1153 = vmatprep.subr.mxu0 %v449
    %1154 = vmatpush1.msra.mxu0 %v448
    %1155 = vmatprep.subr.mxu0 %v446
    %1156 = vmatpush1.msra.mxu0 %v445
    %1157 = vmatprep.subr.mxu0 %v443
    %1158 = vmatpush1.msra.mxu0 %v442
    %1159 = vmatprep.subr.mxu0 %v440
    %1160 = vmatpush1.msra.mxu0 %v439
    %1161 = vmatprep.subr.mxu0 %v437
    %1162 = vmatpush1.msra.mxu0 %v436
    %1163 = vmatprep.subr.mxu0 %v434
    %1164 = vmatpush1.msra.mxu0 %v433
    %1165 = vmatprep.subr.mxu0 %v431
    %1166 = vmatpush1.msra.mxu0 %v430
    %1167 = vmatprep.subr.mxu0 %v428
    %1168 = vmatpush1.msra.mxu0 %v427
    %1169 = vmatprep.subr.mxu0 %v425
    %1170 = vmatpush1.msra.mxu0 %v424
    %1171 = vmatprep.subr.mxu0 %v422
    %1172 = vmatpush1.msra.mxu0 %v421
    %1173 = vmatprep.subr.mxu0 %v419
    %1174 = vmatpush1.msra.mxu0 %v418
    %1175 = vmatprep.subr.mxu0 %v416
    %1176 = vmatpush1.msra.mxu0 %v415
    %1177 = vmatprep.subr.mxu0 %v413
    %1178 = vmatpush1.msra.mxu0 %v412
    %1179 = vmatprep.subr.mxu0 %v410
    %1180 = vmatpush1.msra.mxu0 %v409
    %1181 = vmatprep.subr.mxu0 %v407
    %1182 = vmatpush1.msra.mxu0 %v406
    %1183 = vmatprep.subr.mxu0 %v404
    %1184 = vmatpush1.msra.mxu0 %v403
    %1185 = vmatprep.subr.mxu0 0.0
    %1186 = vmatpush2.msra.mxu0 0.0
    %1187 = vmatprep.subr.mxu0 0.0
    %1188 = vmatpush2.msra.mxu0 0.0
    %1189 = vmatprep.subr.mxu0 0.0
    %1190 = vmatpush2.msra.mxu0 0.0
    %1191 = vmatprep.subr.mxu0 0.0
    %1192 = vmatpush2.msra.mxu0 0.0
    %1193 = vmatprep.subr.mxu0 0.0
    %1194 = vmatpush2.msra.mxu0 0.0
    %1195 = vmatprep.subr.mxu0 0.0
    %1196 = vmatpush2.msra.mxu0 0.0
    %1197 = vmatprep.subr.mxu0 0.0
    %1198 = vmatpush2.msra.mxu0 0.0
    %1199 = vmatprep.subr.mxu0 0.0
    %1200 = vmatpush2.msra.mxu0 0.0
    %1201 = vmatprep.subr.mxu0 0.0
    %1202 = vmatpush2.msra.mxu0 0.0
    %1203 = vmatprep.subr.mxu0 0.0
    %1204 = vmatpush2.msra.mxu0 0.0
    %1205 = vmatprep.subr.mxu0 0.0
    %1206 = vmatpush2.msra.mxu0 0.0
    %1207 = vmatprep.subr.mxu0 0.0
    %1208 = vmatpush2.msra.mxu0 0.0
    %1209 = vmatprep.subr.mxu0 0.0
    %1210 = vmatpush2.msra.mxu0 0.0
    %1211 = vmatprep.subr.mxu0 0.0
    %1212 = vmatpush2.msra.mxu0 0.0
    %1213 = vmatprep.subr.mxu0 0.0
    %1214 = vmatpush2.msra.mxu0 0.0
    %1215 = vmatprep.subr.mxu0 0.0
    %1216 = vmatpush2.msra.mxu0 0.0
    %1217 = vmatprep.mubr.f32.mxu0 0.0
    %1218 = vmatmul.mubr.f32.gmra.mxu0 %v1152
    %v1219 = vpop.f32.mrf.mxu0
    %v1220 = vadd.f32 %v456, %v1219
    %v1221 = vpop.f32.mrf.mxu0
    %v1222 = vadd.f32 %v460, %v1221
    %1223 = vdwg.mxu0
    %1224 = vmatprep.subr.mxu0 0.0
    %1225 = vmatpush1.msra.mxu0 %v450
    %1226 = vmatprep.subr.mxu0 0.0
    %1227 = vmatpush1.msra.mxu0 %v447
    %1228 = vmatprep.subr.mxu0 0.0
    %1229 = vmatpush1.msra.mxu0 %v444
    %1230 = vmatprep.subr.mxu0 0.0
    %1231 = vmatpush1.msra.mxu0 %v441
    %1232 = vmatprep.subr.mxu0 0.0
    %1233 = vmatpush1.msra.mxu0 %v438
    %1234 = vmatprep.subr.mxu0 0.0
    %1235 = vmatpush1.msra.mxu0 %v435
    %1236 = vmatprep.subr.mxu0 0.0
    %1237 = vmatpush1.msra.mxu0 %v432
    %1238 = vmatprep.subr.mxu0 0.0
    %1239 = vmatpush1.msra.mxu0 %v429
    %1240 = vmatprep.subr.mxu0 0.0
    %1241 = vmatpush1.msra.mxu0 %v426
    %1242 = vmatprep.subr.mxu0 0.0
    %1243 = vmatpush1.msra.mxu0 %v423
    %1244 = vmatprep.subr.mxu0 0.0
    %1245 = vmatpush1.msra.mxu0 %v420
    %1246 = vmatprep.subr.mxu0 0.0
    %1247 = vmatpush1.msra.mxu0 %v417
    %1248 = vmatprep.subr.mxu0 0.0
    %1249 = vmatpush1.msra.mxu0 %v414
    %1250 = vmatprep.subr.mxu0 0.0
    %1251 = vmatpush1.msra.mxu0 %v411
    %1252 = vmatprep.subr.mxu0 0.0
    %1253 = vmatpush1.msra.mxu0 %v408
    %1254 = vmatprep.subr.mxu0 0.0
    %1255 = vmatpush1.msra.mxu0 %v405
    %1256 = vmatprep.subr.mxu0 0.0
    %1257 = vmatpush2.msra.mxu0 0.0
    %1258 = vmatprep.subr.mxu0 0.0
    %1259 = vmatpush2.msra.mxu0 0.0
    %1260 = vmatprep.subr.mxu0 0.0
    %1261 = vmatpush2.msra.mxu0 0.0
    %1262 = vmatprep.subr.mxu0 0.0
    %1263 = vmatpush2.msra.mxu0 0.0
    %1264 = vmatprep.subr.mxu0 0.0
    %1265 = vmatpush2.msra.mxu0 0.0
    %1266 = vmatprep.subr.mxu0 0.0
    %1267 = vmatpush2.msra.mxu0 0.0
    %1268 = vmatprep.subr.mxu0 0.0
    %1269 = vmatpush2.msra.mxu0 0.0
    %1270 = vmatprep.subr.mxu0 0.0
    %1271 = vmatpush2.msra.mxu0 0.0
    %1272 = vmatprep.subr.mxu0 0.0
    %1273 = vmatpush2.msra.mxu0 0.0
    %1274 = vmatprep.subr.mxu0 0.0
    %1275 = vmatpush2.msra.mxu0 0.0
    %1276 = vmatprep.subr.mxu0 0.0
    %1277 = vmatpush2.msra.mxu0 0.0
    %1278 = vmatprep.subr.mxu0 0.0
    %1279 = vmatpush2.msra.mxu0 0.0
    %1280 = vmatprep.subr.mxu0 0.0
    %1281 = vmatpush2.msra.mxu0 0.0
    %1282 = vmatprep.subr.mxu0 0.0
    %1283 = vmatpush2.msra.mxu0 0.0
    %1284 = vmatprep.subr.mxu0 0.0
    %1285 = vmatpush2.msra.mxu0 0.0
    %1286 = vmatprep.subr.mxu0 0.0
    %1287 = vmatpush2.msra.mxu0 0.0
    %1288 = vmatprep.mubr.f32.mxu0 0.0
    %1289 = vmatmul.mubr.f32.gmra.mxu0 %v1152
    %v1290 = vpop.f32.mrf.mxu0
    %v1291 = vadd.f32 %v464, %v1290
    %v1292 = vpop.f32.mrf.mxu0
    %1293 = vdwg.mxu0
    %1294 = vmatprep.subr.mxu0 %v514
    %1295 = vmatpush1.msra.mxu0 %v513
    %1296 = vmatprep.subr.mxu0 %v511
    %1297 = vmatpush1.msra.mxu0 %v510
    %1298 = vmatprep.subr.mxu0 %v508
    %1299 = vmatpush1.msra.mxu0 %v507
    %1300 = vmatprep.subr.mxu0 %v505
    %1301 = vmatpush1.msra.mxu0 %v504
    %1302 = vmatprep.subr.mxu0 %v502
    %1303 = vmatpush1.msra.mxu0 %v501
    %1304 = vmatprep.subr.mxu0 %v499
    %1305 = vmatpush1.msra.mxu0 %v498
    %1306 = vmatprep.subr.mxu0 %v496
    %1307 = vmatpush1.msra.mxu0 %v495
    %1308 = vmatprep.subr.mxu0 %v493
    %1309 = vmatpush1.msra.mxu0 %v492
    %1310 = vmatprep.subr.mxu0 %v490
    %1311 = vmatpush1.msra.mxu0 %v489
    %1312 = vmatprep.subr.mxu0 %v487
    %1313 = vmatpush1.msra.mxu0 %v486
    %1314 = vmatprep.subr.mxu0 %v484
    %1315 = vmatpush1.msra.mxu0 %v483
    %1316 = vmatprep.subr.mxu0 %v481
    %1317 = vmatpush1.msra.mxu0 %v480
    %1318 = vmatprep.subr.mxu0 %v478
    %1319 = vmatpush1.msra.mxu0 %v477
    %1320 = vmatprep.subr.mxu0 %v475
    %1321 = vmatpush1.msra.mxu0 %v474
    %1322 = vmatprep.subr.mxu0 %v472
    %1323 = vmatpush1.msra.mxu0 %v471
    %1324 = vmatprep.subr.mxu0 %v469
    %1325 = vmatpush1.msra.mxu0 %v468
    %1326 = vmatprep.subr.mxu0 0.0
    %1327 = vmatpush2.msra.mxu0 0.0
    %1328 = vmatprep.subr.mxu0 0.0
    %1329 = vmatpush2.msra.mxu0 0.0
    %1330 = vmatprep.subr.mxu0 0.0
    %1331 = vmatpush2.msra.mxu0 0.0
    %1332 = vmatprep.subr.mxu0 0.0
    %1333 = vmatpush2.msra.mxu0 0.0
    %1334 = vmatprep.subr.mxu0 0.0
    %1335 = vmatpush2.msra.mxu0 0.0
    %1336 = vmatprep.subr.mxu0 0.0
    %1337 = vmatpush2.msra.mxu0 0.0
    %1338 = vmatprep.subr.mxu0 0.0
    %1339 = vmatpush2.msra.mxu0 0.0
    %1340 = vmatprep.subr.mxu0 0.0
    %1341 = vmatpush2.msra.mxu0 0.0
    %1342 = vmatprep.subr.mxu0 0.0
    %1343 = vmatpush2.msra.mxu0 0.0
    %1344 = vmatprep.subr.mxu0 0.0
    %1345 = vmatpush2.msra.mxu0 0.0
    %1346 = vmatprep.subr.mxu0 0.0
    %1347 = vmatpush2.msra.mxu0 0.0
    %1348 = vmatprep.subr.mxu0 0.0
    %1349 = vmatpush2.msra.mxu0 0.0
    %1350 = vmatprep.subr.mxu0 0.0
    %1351 = vmatpush2.msra.mxu0 0.0
    %1352 = vmatprep.subr.mxu0 0.0
    %1353 = vmatpush2.msra.mxu0 0.0
    %1354 = vmatprep.subr.mxu0 0.0
    %1355 = vmatpush2.msra.mxu0 0.0
    %1356 = vmatprep.subr.mxu0 0.0
    %1357 = vmatpush2.msra.mxu0 0.0
    %1358 = vmatprep.mubr.f32.mxu0 0.0
    %1359 = vmatmul.mubr.f32.gmra.mxu0 %v989
    %v1360 = vpop.f32.mrf.mxu0
    %v1361 = vadd.f32 0.0, %v1360
    %v1362 = vpop.f32.mrf.mxu0
    %v1363 = vadd.f32 0.0, %v1362
    %1364 = vdwg.mxu0
    %1365 = vmatprep.subr.mxu0 0.0
    %1366 = vmatpush1.msra.mxu0 %v515
    %1367 = vmatprep.subr.mxu0 0.0
    %1368 = vmatpush1.msra.mxu0 %v512
    %1369 = vmatprep.subr.mxu0 0.0
    %1370 = vmatpush1.msra.mxu0 %v509
    %1371 = vmatprep.subr.mxu0 0.0
    %1372 = vmatpush1.msra.mxu0 %v506
    %1373 = vmatprep.subr.mxu0 0.0
    %1374 = vmatpush1.msra.mxu0 %v503
    %1375 = vmatprep.subr.mxu0 0.0
    %1376 = vmatpush1.msra.mxu0 %v500
    %1377 = vmatprep.subr.mxu0 0.0
    %1378 = vmatpush1.msra.mxu0 %v497
    %1379 = vmatprep.subr.mxu0 0.0
    %1380 = vmatpush1.msra.mxu0 %v494
    %1381 = vmatprep.subr.mxu0 0.0
    %1382 = vmatpush1.msra.mxu0 %v491
    %1383 = vmatprep.subr.mxu0 0.0
    %1384 = vmatpush1.msra.mxu0 %v488
    %1385 = vmatprep.subr.mxu0 0.0
    %1386 = vmatpush1.msra.mxu0 %v485
    %1387 = vmatprep.subr.mxu0 0.0
    %1388 = vmatpush1.msra.mxu0 %v482
    %1389 = vmatprep.subr.mxu0 0.0
    %1390 = vmatpush1.msra.mxu0 %v479
    %1391 = vmatprep.subr.mxu0 0.0
    %1392 = vmatpush1.msra.mxu0 %v476
    %1393 = vmatprep.subr.mxu0 0.0
    %1394 = vmatpush1.msra.mxu0 %v473
    %1395 = vmatprep.subr.mxu0 0.0
    %1396 = vmatpush1.msra.mxu0 %v470
    %1397 = vmatprep.subr.mxu0 0.0
    %1398 = vmatpush2.msra.mxu0 0.0
    %1399 = vmatprep.subr.mxu0 0.0
    %1400 = vmatpush2.msra.mxu0 0.0
    %1401 = vmatprep.subr.mxu0 0.0
    %1402 = vmatpush2.msra.mxu0 0.0
    %1403 = vmatprep.subr.mxu0 0.0
    %1404 = vmatpush2.msra.mxu0 0.0
    %1405 = vmatprep.subr.mxu0 0.0
    %1406 = vmatpush2.msra.mxu0 0.0
    %1407 = vmatprep.subr.mxu0 0.0
    %1408 = vmatpush2.msra.mxu0 0.0
    %1409 = vmatprep.subr.mxu0 0.0
    %1410 = vmatpush2.msra.mxu0 0.0
    %1411 = vmatprep.subr.mxu0 0.0
    %1412 = vmatpush2.msra.mxu0 0.0
    %1413 = vmatprep.subr.mxu0 0.0
    %1414 = vmatpush2.msra.mxu0 0.0
    %1415 = vmatprep.subr.mxu0 0.0
    %1416 = vmatpush2.msra.mxu0 0.0
    %1417 = vmatprep.subr.mxu0 0.0
    %1418 = vmatpush2.msra.mxu0 0.0
    %1419 = vmatprep.subr.mxu0 0.0
    %1420 = vmatpush2.msra.mxu0 0.0
    %1421 = vmatprep.subr.mxu0 0.0
    %1422 = vmatpush2.msra.mxu0 0.0
    %1423 = vmatprep.subr.mxu0 0.0
    %1424 = vmatpush2.msra.mxu0 0.0
    %1425 = vmatprep.subr.mxu0 0.0
    %1426 = vmatpush2.msra.mxu0 0.0
    %1427 = vmatprep.subr.mxu0 0.0
    %1428 = vmatpush2.msra.mxu0 0.0
    %1429 = vmatprep.mubr.f32.mxu0 0.0
    %1430 = vmatmul.mubr.f32.gmra.mxu0 %v989
    %v1431 = vpop.f32.mrf.mxu0
    %v1432 = vadd.f32 0.0, %v1431
    %v1433 = vpop.f32.mrf.mxu0
    %1434 = vdwg.mxu0
    %v1435 = vadd.f32 %v1220, %v1361
    %v1436 = vxor.u32 %v1435, 2147483648
    %v1437 = vmul.f32 %v1436, 1.442695
    %v1438 = vpow.pop %v1437
    %v1439 = vadd.f32 %v1438, 1.0
    %v1440 = vrcp.pop %v1439
    %v1441 = vmul.f32 1.0, %v1440
    %v1442 = vadd.f32 %v1222, %v1363
    %v1443 = vxor.u32 %v1442, 2147483648
    %v1444 = vmul.f32 %v1443, 1.442695
    %v1445 = vpow.pop %v1444
    %v1446 = vadd.f32 %v1445, 1.0
    %v1447 = vrcp.pop %v1446
    %v1448 = vmul.f32 1.0, %v1447
    %v1449 = vadd.f32 %v1432, %v521
    %v1450 = vmul.f32 %v1441, %v1449
    %v1451 = vadd.f32 %v1291, %v1450
    %v1452 = vtanh.pop %v1451
    %v1453 = vsub.f32 1.0, %v1448
    %v1454 = vmul.f32 %v1453, %v1452
    %v1455 = vmul.f32 %v1448, %v989
    %v1456 = vadd.f32 %v1454, %v1455
    %1457 = vmatprep.subr.mxu0 %v394
    %1458 = vmatpush1.msra.mxu0 %v393
    %1459 = vmatprep.subr.mxu0 %v391
    %1460 = vmatpush1.msra.mxu0 %v390
    %1461 = vmatprep.subr.mxu0 %v388
    %1462 = vmatpush1.msra.mxu0 %v387
    %1463 = vmatprep.subr.mxu0 %v385
    %1464 = vmatpush1.msra.mxu0 %v384
    %1465 = vmatprep.subr.mxu0 %v382
    %1466 = vmatpush1.msra.mxu0 %v381
    %1467 = vmatprep.subr.mxu0 %v379
    %1468 = vmatpush1.msra.mxu0 %v378
    %1469 = vmatprep.subr.mxu0 %v376
    %1470 = vmatpush1.msra.mxu0 %v375
    %1471 = vmatprep.subr.mxu0 %v373
    %1472 = vmatpush1.msra.mxu0 %v372
    %1473 = vmatprep.subr.mxu0 %v370
    %1474 = vmatpush1.msra.mxu0 %v369
    %1475 = vmatprep.subr.mxu0 %v367
    %1476 = vmatpush1.msra.mxu0 %v366
    %1477 = vmatprep.subr.mxu0 %v364
    %1478 = vmatpush1.msra.mxu0 %v363
    %1479 = vmatprep.subr.mxu0 %v361
    %1480 = vmatpush1.msra.mxu0 %v360
    %1481 = vmatprep.subr.mxu0 %v358
    %1482 = vmatpush1.msra.mxu0 %v357
    %1483 = vmatprep.subr.mxu0 %v355
    %1484 = vmatpush1.msra.mxu0 %v354
    %1485 = vmatprep.subr.mxu0 %v352
    %1486 = vmatpush1.msra.mxu0 %v351
    %1487 = vmatprep.subr.mxu0 %v349
    %1488 = vmatpush1.msra.mxu0 %v348
    %1489 = vmatprep.subr.mxu0 0.0
    %1490 = vmatpush2.msra.mxu0 0.0
    %1491 = vmatprep.subr.mxu0 0.0
    %1492 = vmatpush2.msra.mxu0 0.0
    %1493 = vmatprep.subr.mxu0 0.0
    %1494 = vmatpush2.msra.mxu0 0.0
    %1495 = vmatprep.subr.mxu0 0.0
    %1496 = vmatpush2.msra.mxu0 0.0
    %1497 = vmatprep.subr.mxu0 0.0
    %1498 = vmatpush2.msra.mxu0 0.0
    %1499 = vmatprep.subr.mxu0 0.0
    %1500 = vmatpush2.msra.mxu0 0.0
    %1501 = vmatprep.subr.mxu0 0.0
    %1502 = vmatpush2.msra.mxu0 0.0
    %1503 = vmatprep.subr.mxu0 0.0
    %1504 = vmatpush2.msra.mxu0 0.0
    %1505 = vmatprep.subr.mxu0 0.0
    %1506 = vmatpush2.msra.mxu0 0.0
    %1507 = vmatprep.subr.mxu0 0.0
    %1508 = vmatpush2.msra.mxu0 0.0
    %1509 = vmatprep.subr.mxu0 0.0
    %1510 = vmatpush2.msra.mxu0 0.0
    %1511 = vmatprep.subr.mxu0 0.0
    %1512 = vmatpush2.msra.mxu0 0.0
    %1513 = vmatprep.subr.mxu0 0.0
    %1514 = vmatpush2.msra.mxu0 0.0
    %1515 = vmatprep.subr.mxu0 0.0
    %1516 = vmatpush2.msra.mxu0 0.0
    %1517 = vmatprep.subr.mxu0 0.0
    %1518 = vmatpush2.msra.mxu0 0.0
    %1519 = vmatprep.subr.mxu0 0.0
    %1520 = vmatpush2.msra.mxu0 0.0
    %1521 = vmatprep.mubr.f32.mxu0 0.0
    %1522 = vmatmul.mubr.f32.gmra.mxu0 %v1152
    %v1523 = vpop.f32.mrf.mxu0
    %v1524 = vadd.f32 0.0, %v1523
    %v1525 = vpop.f32.mrf.mxu0
    %v1526 = vadd.f32 0.0, %v1525
    %1527 = vdwg.mxu0
    %1528 = vmatprep.subr.mxu0 0.0
    %1529 = vmatpush1.msra.mxu0 %v395
    %1530 = vmatprep.subr.mxu0 0.0
    %1531 = vmatpush1.msra.mxu0 %v392
    %1532 = vmatprep.subr.mxu0 0.0
    %1533 = vmatpush1.msra.mxu0 %v389
    %1534 = vmatprep.subr.mxu0 0.0
    %1535 = vmatpush1.msra.mxu0 %v386
    %1536 = vmatprep.subr.mxu0 0.0
    %1537 = vmatpush1.msra.mxu0 %v383
    %1538 = vmatprep.subr.mxu0 0.0
    %1539 = vmatpush1.msra.mxu0 %v380
    %1540 = vmatprep.subr.mxu0 0.0
    %1541 = vmatpush1.msra.mxu0 %v377
    %1542 = vmatprep.subr.mxu0 0.0
    %1543 = vmatpush1.msra.mxu0 %v374
    %1544 = vmatprep.subr.mxu0 0.0
    %1545 = vmatpush1.msra.mxu0 %v371
    %1546 = vmatprep.subr.mxu0 0.0
    %1547 = vmatpush1.msra.mxu0 %v368
    %1548 = vmatprep.subr.mxu0 0.0
    %1549 = vmatpush1.msra.mxu0 %v365
    %1550 = vmatprep.subr.mxu0 0.0
    %1551 = vmatpush1.msra.mxu0 %v362
    %1552 = vmatprep.subr.mxu0 0.0
    %1553 = vmatpush1.msra.mxu0 %v359
    %1554 = vmatprep.subr.mxu0 0.0
    %1555 = vmatpush1.msra.mxu0 %v356
    %1556 = vmatprep.subr.mxu0 0.0
    %1557 = vmatpush1.msra.mxu0 %v353
    %1558 = vmatprep.subr.mxu0 0.0
    %1559 = vmatpush1.msra.mxu0 %v350
    %1560 = vmatprep.subr.mxu0 0.0
    %1561 = vmatpush2.msra.mxu0 0.0
    %1562 = vmatprep.subr.mxu0 0.0
    %1563 = vmatpush2.msra.mxu0 0.0
    %1564 = vmatprep.subr.mxu0 0.0
    %1565 = vmatpush2.msra.mxu0 0.0
    %1566 = vmatprep.subr.mxu0 0.0
    %1567 = vmatpush2.msra.mxu0 0.0
    %1568 = vmatprep.subr.mxu0 0.0
    %1569 = vmatpush2.msra.mxu0 0.0
    %1570 = vmatprep.subr.mxu0 0.0
    %1571 = vmatpush2.msra.mxu0 0.0
    %1572 = vmatprep.subr.mxu0 0.0
    %1573 = vmatpush2.msra.mxu0 0.0
    %1574 = vmatprep.subr.mxu0 0.0
    %1575 = vmatpush2.msra.mxu0 0.0
    %1576 = vmatprep.subr.mxu0 0.0
    %1577 = vmatpush2.msra.mxu0 0.0
    %1578 = vmatprep.subr.mxu0 0.0
    %1579 = vmatpush2.msra.mxu0 0.0
    %1580 = vmatprep.subr.mxu0 0.0
    %1581 = vmatpush2.msra.mxu0 0.0
    %1582 = vmatprep.subr.mxu0 0.0
    %1583 = vmatpush2.msra.mxu0 0.0
    %1584 = vmatprep.subr.mxu0 0.0
    %1585 = vmatpush2.msra.mxu0 0.0
    %1586 = vmatprep.subr.mxu0 0.0
    %1587 = vmatpush2.msra.mxu0 0.0
    %1588 = vmatprep.subr.mxu0 0.0
    %1589 = vmatpush2.msra.mxu0 0.0
    %1590 = vmatprep.subr.mxu0 0.0
    %1591 = vmatpush2.msra.mxu0 0.0
    %1592 = vmatprep.mubr.f32.mxu0 0.0
    %1593 = vmatmul.mubr.f32.gmra.mxu0 %v1152
    %v1594 = vpop.f32.mrf.mxu0
    %v1595 = vadd.f32 0.0, %v1594
    %v1596 = vpop.f32.mrf.mxu0
    %1597 = vdwg.mxu0
    %v1598 = vadd.f32 %v209, %v1524
    %v1599 = vxor.u32 %v1598, 2147483648
    %v1600 = vmul.f32 %v1599, 1.442695
    %v1601 = vpow.pop %v1600
    %v1602 = vadd.f32 %v1601, 1.0
    %v1603 = vrcp.pop %v1602
    %v1604 = vmul.f32 1.0, %v1603
    %v1605 = vadd.f32 %v211, %v1526
    %v1606 = vxor.u32 %v1605, 2147483648
    %v1607 = vmul.f32 %v1606, 1.442695
    %v1608 = vpow.pop %v1607
    %v1609 = vadd.f32 %v1608, 1.0
    %v1610 = vrcp.pop %v1609
    %v1611 = vmul.f32 1.0, %v1610
    %v1612 = vadd.f32 %v1595, %v401
    %v1613 = vmul.f32 %v1604, %v1612
    %v1614 = vadd.f32 %v320, %v1613
    %v1615 = vtanh.pop %v1614
    %v1616 = vsub.f32 1.0, %v1611
    %v1617 = vmul.f32 %v1616, %v1615
    %v1618 = vmul.f32 %v1611, %v1152
    %v1619 = vadd.f32 %v1617, %v1618
    %1620 = vmatprep.subr.mxu0 %v449
    %1621 = vmatpush1.msra.mxu0 %v448
    %1622 = vmatprep.subr.mxu0 %v446
    %1623 = vmatpush1.msra.mxu0 %v445
    %1624 = vmatprep.subr.mxu0 %v443
    %1625 = vmatpush1.msra.mxu0 %v442
    %1626 = vmatprep.subr.mxu0 %v440
    %1627 = vmatpush1.msra.mxu0 %v439
    %1628 = vmatprep.subr.mxu0 %v437
    %1629 = vmatpush1.msra.mxu0 %v436
    %1630 = vmatprep.subr.mxu0 %v434
    %1631 = vmatpush1.msra.mxu0 %v433
    %1632 = vmatprep.subr.mxu0 %v431
    %1633 = vmatpush1.msra.mxu0 %v430
    %1634 = vmatprep.subr.mxu0 %v428
    %1635 = vmatpush1.msra.mxu0 %v427
    %1636 = vmatprep.subr.mxu0 %v425
    %1637 = vmatpush1.msra.mxu0 %v424
    %1638 = vmatprep.subr.mxu0 %v422
    %1639 = vmatpush1.msra.mxu0 %v421
    %1640 = vmatprep.subr.mxu0 %v419
    %1641 = vmatpush1.msra.mxu0 %v418
    %1642 = vmatprep.subr.mxu0 %v416
    %1643 = vmatpush1.msra.mxu0 %v415
    %1644 = vmatprep.subr.mxu0 %v413
    %1645 = vmatpush1.msra.mxu0 %v412
    %1646 = vmatprep.subr.mxu0 %v410
    %1647 = vmatpush1.msra.mxu0 %v409
    %1648 = vmatprep.subr.mxu0 %v407
    %1649 = vmatpush1.msra.mxu0 %v406
    %1650 = vmatprep.subr.mxu0 %v404
    %1651 = vmatpush1.msra.mxu0 %v403
    %1652 = vmatprep.subr.mxu0 0.0
    %1653 = vmatpush2.msra.mxu0 0.0
    %1654 = vmatprep.subr.mxu0 0.0
    %1655 = vmatpush2.msra.mxu0 0.0
    %1656 = vmatprep.subr.mxu0 0.0
    %1657 = vmatpush2.msra.mxu0 0.0
    %1658 = vmatprep.subr.mxu0 0.0
    %1659 = vmatpush2.msra.mxu0 0.0
    %1660 = vmatprep.subr.mxu0 0.0
    %1661 = vmatpush2.msra.mxu0 0.0
    %1662 = vmatprep.subr.mxu0 0.0
    %1663 = vmatpush2.msra.mxu0 0.0
    %1664 = vmatprep.subr.mxu0 0.0
    %1665 = vmatpush2.msra.mxu0 0.0
    %1666 = vmatprep.subr.mxu0 0.0
    %1667 = vmatpush2.msra.mxu0 0.0
    %1668 = vmatprep.subr.mxu0 0.0
    %1669 = vmatpush2.msra.mxu0 0.0
    %1670 = vmatprep.subr.mxu0 0.0
    %1671 = vmatpush2.msra.mxu0 0.0
    %1672 = vmatprep.subr.mxu0 0.0
    %1673 = vmatpush2.msra.mxu0 0.0
    %1674 = vmatprep.subr.mxu0 0.0
    %1675 = vmatpush2.msra.mxu0 0.0
    %1676 = vmatprep.subr.mxu0 0.0
    %1677 = vmatpush2.msra.mxu0 0.0
    %1678 = vmatprep.subr.mxu0 0.0
    %1679 = vmatpush2.msra.mxu0 0.0
    %1680 = vmatprep.subr.mxu0 0.0
    %1681 = vmatpush2.msra.mxu0 0.0
    %1682 = vmatprep.subr.mxu0 0.0
    %1683 = vmatpush2.msra.mxu0 0.0
    %1684 = vmatprep.mubr.f32.mxu0 0.0
    %1685 = vmatmul.mubr.f32.gmra.mxu0 %v1619
    %v1686 = vpop.f32.mrf.mxu0
    %v1687 = vadd.f32 %v456, %v1686
    %v1688 = vpop.f32.mrf.mxu0
    %v1689 = vadd.f32 %v460, %v1688
    %1690 = vdwg.mxu0
    %1691 = vmatprep.subr.mxu0 0.0
    %1692 = vmatpush1.msra.mxu0 %v450
    %1693 = vmatprep.subr.mxu0 0.0
    %1694 = vmatpush1.msra.mxu0 %v447
    %1695 = vmatprep.subr.mxu0 0.0
    %1696 = vmatpush1.msra.mxu0 %v444
    %1697 = vmatprep.subr.mxu0 0.0
    %1698 = vmatpush1.msra.mxu0 %v441
    %1699 = vmatprep.subr.mxu0 0.0
    %1700 = vmatpush1.msra.mxu0 %v438
    %1701 = vmatprep.subr.mxu0 0.0
    %1702 = vmatpush1.msra.mxu0 %v435
    %1703 = vmatprep.subr.mxu0 0.0
    %1704 = vmatpush1.msra.mxu0 %v432
    %1705 = vmatprep.subr.mxu0 0.0
    %1706 = vmatpush1.msra.mxu0 %v429
    %1707 = vmatprep.subr.mxu0 0.0
    %1708 = vmatpush1.msra.mxu0 %v426
    %1709 = vmatprep.subr.mxu0 0.0
    %1710 = vmatpush1.msra.mxu0 %v423
    %1711 = vmatprep.subr.mxu0 0.0
    %1712 = vmatpush1.msra.mxu0 %v420
    %1713 = vmatprep.subr.mxu0 0.0
    %1714 = vmatpush1.msra.mxu0 %v417
    %1715 = vmatprep.subr.mxu0 0.0
    %1716 = vmatpush1.msra.mxu0 %v414
    %1717 = vmatprep.subr.mxu0 0.0
    %1718 = vmatpush1.msra.mxu0 %v411
    %1719 = vmatprep.subr.mxu0 0.0
    %1720 = vmatpush1.msra.mxu0 %v408
    %1721 = vmatprep.subr.mxu0 0.0
    %1722 = vmatpush1.msra.mxu0 %v405
    %1723 = vmatprep.subr.mxu0 0.0
    %1724 = vmatpush2.msra.mxu0 0.0
    %1725 = vmatprep.subr.mxu0 0.0
    %1726 = vmatpush2.msra.mxu0 0.0
    %1727 = vmatprep.subr.mxu0 0.0
    %1728 = vmatpush2.msra.mxu0 0.0
    %1729 = vmatprep.subr.mxu0 0.0
    %1730 = vmatpush2.msra.mxu0 0.0
    %1731 = vmatprep.subr.mxu0 0.0
    %1732 = vmatpush2.msra.mxu0 0.0
    %1733 = vmatprep.subr.mxu0 0.0
    %1734 = vmatpush2.msra.mxu0 0.0
    %1735 = vmatprep.subr.mxu0 0.0
    %1736 = vmatpush2.msra.mxu0 0.0
    %1737 = vmatprep.subr.mxu0 0.0
    %1738 = vmatpush2.msra.mxu0 0.0
    %1739 = vmatprep.subr.mxu0 0.0
    %1740 = vmatpush2.msra.mxu0 0.0
    %1741 = vmatprep.subr.mxu0 0.0
    %1742 = vmatpush2.msra.mxu0 0.0
    %1743 = vmatprep.subr.mxu0 0.0
    %1744 = vmatpush2.msra.mxu0 0.0
    %1745 = vmatprep.subr.mxu0 0.0
    %1746 = vmatpush2.msra.mxu0 0.0
    %1747 = vmatprep.subr.mxu0 0.0
    %1748 = vmatpush2.msra.mxu0 0.0
    %1749 = vmatprep.subr.mxu0 0.0
    %1750 = vmatpush2.msra.mxu0 0.0
    %1751 = vmatprep.subr.mxu0 0.0
    %1752 = vmatpush2.msra.mxu0 0.0
    %1753 = vmatprep.subr.mxu0 0.0
    %1754 = vmatpush2.msra.mxu0 0.0
    %1755 = vmatprep.mubr.f32.mxu0 0.0
    %1756 = vmatmul.mubr.f32.gmra.mxu0 %v1619
    %v1757 = vpop.f32.mrf.mxu0
    %v1758 = vadd.f32 %v464, %v1757
    %v1759 = vpop.f32.mrf.mxu0
    %1760 = vdwg.mxu0
    %1761 = vmatprep.subr.mxu0 %v514
    %1762 = vmatpush1.msra.mxu0 %v513
    %1763 = vmatprep.subr.mxu0 %v511
    %1764 = vmatpush1.msra.mxu0 %v510
    %1765 = vmatprep.subr.mxu0 %v508
    %1766 = vmatpush1.msra.mxu0 %v507
    %1767 = vmatprep.subr.mxu0 %v505
    %1768 = vmatpush1.msra.mxu0 %v504
    %1769 = vmatprep.subr.mxu0 %v502
    %1770 = vmatpush1.msra.mxu0 %v501
    %1771 = vmatprep.subr.mxu0 %v499
    %1772 = vmatpush1.msra.mxu0 %v498
    %1773 = vmatprep.subr.mxu0 %v496
    %1774 = vmatpush1.msra.mxu0 %v495
    %1775 = vmatprep.subr.mxu0 %v493
    %1776 = vmatpush1.msra.mxu0 %v492
    %1777 = vmatprep.subr.mxu0 %v490
    %1778 = vmatpush1.msra.mxu0 %v489
    %1779 = vmatprep.subr.mxu0 %v487
    %1780 = vmatpush1.msra.mxu0 %v486
    %1781 = vmatprep.subr.mxu0 %v484
    %1782 = vmatpush1.msra.mxu0 %v483
    %1783 = vmatprep.subr.mxu0 %v481
    %1784 = vmatpush1.msra.mxu0 %v480
    %1785 = vmatprep.subr.mxu0 %v478
    %1786 = vmatpush1.msra.mxu0 %v477
    %1787 = vmatprep.subr.mxu0 %v475
    %1788 = vmatpush1.msra.mxu0 %v474
    %1789 = vmatprep.subr.mxu0 %v472
    %1790 = vmatpush1.msra.mxu0 %v471
    %1791 = vmatprep.subr.mxu0 %v469
    %1792 = vmatpush1.msra.mxu0 %v468
    %1793 = vmatprep.subr.mxu0 0.0
    %1794 = vmatpush2.msra.mxu0 0.0
    %1795 = vmatprep.subr.mxu0 0.0
    %1796 = vmatpush2.msra.mxu0 0.0
    %1797 = vmatprep.subr.mxu0 0.0
    %1798 = vmatpush2.msra.mxu0 0.0
    %1799 = vmatprep.subr.mxu0 0.0
    %1800 = vmatpush2.msra.mxu0 0.0
    %1801 = vmatprep.subr.mxu0 0.0
    %1802 = vmatpush2.msra.mxu0 0.0
    %1803 = vmatprep.subr.mxu0 0.0
    %1804 = vmatpush2.msra.mxu0 0.0
    %1805 = vmatprep.subr.mxu0 0.0
    %1806 = vmatpush2.msra.mxu0 0.0
    %1807 = vmatprep.subr.mxu0 0.0
    %1808 = vmatpush2.msra.mxu0 0.0
    %1809 = vmatprep.subr.mxu0 0.0
    %1810 = vmatpush2.msra.mxu0 0.0
    %1811 = vmatprep.subr.mxu0 0.0
    %1812 = vmatpush2.msra.mxu0 0.0
    %1813 = vmatprep.subr.mxu0 0.0
    %1814 = vmatpush2.msra.mxu0 0.0
    %1815 = vmatprep.subr.mxu0 0.0
    %1816 = vmatpush2.msra.mxu0 0.0
    %1817 = vmatprep.subr.mxu0 0.0
    %1818 = vmatpush2.msra.mxu0 0.0
    %1819 = vmatprep.subr.mxu0 0.0
    %1820 = vmatpush2.msra.mxu0 0.0
    %1821 = vmatprep.subr.mxu0 0.0
    %1822 = vmatpush2.msra.mxu0 0.0
    %1823 = vmatprep.subr.mxu0 0.0
    %1824 = vmatpush2.msra.mxu0 0.0
    %1825 = vmatprep.mubr.f32.mxu0 0.0
    %1826 = vmatmul.mubr.f32.gmra.mxu0 %v1456
    %v1827 = vpop.f32.mrf.mxu0
    %v1828 = vadd.f32 0.0, %v1827
    %v1829 = vpop.f32.mrf.mxu0
    %v1830 = vadd.f32 0.0, %v1829
    %1831 = vdwg.mxu0
    %1832 = vmatprep.subr.mxu0 0.0
    %1833 = vmatpush1.msra.mxu0 %v515
    %1834 = vmatprep.subr.mxu0 0.0
    %1835 = vmatpush1.msra.mxu0 %v512
    %1836 = vmatprep.subr.mxu0 0.0
    %1837 = vmatpush1.msra.mxu0 %v509
    %1838 = vmatprep.subr.mxu0 0.0
    %1839 = vmatpush1.msra.mxu0 %v506
    %1840 = vmatprep.subr.mxu0 0.0
    %1841 = vmatpush1.msra.mxu0 %v503
    %1842 = vmatprep.subr.mxu0 0.0
    %1843 = vmatpush1.msra.mxu0 %v500
    %1844 = vmatprep.subr.mxu0 0.0
    %1845 = vmatpush1.msra.mxu0 %v497
    %1846 = vmatprep.subr.mxu0 0.0
    %1847 = vmatpush1.msra.mxu0 %v494
    %1848 = vmatprep.subr.mxu0 0.0
    %1849 = vmatpush1.msra.mxu0 %v491
    %1850 = vmatprep.subr.mxu0 0.0
    %1851 = vmatpush1.msra.mxu0 %v488
    %1852 = vmatprep.subr.mxu0 0.0
    %1853 = vmatpush1.msra.mxu0 %v485
    %1854 = vmatprep.subr.mxu0 0.0
    %1855 = vmatpush1.msra.mxu0 %v482
    %1856 = vmatprep.subr.mxu0 0.0
    %1857 = vmatpush1.msra.mxu0 %v479
    %1858 = vmatprep.subr.mxu0 0.0
    %1859 = vmatpush1.msra.mxu0 %v476
    %1860 = vmatprep.subr.mxu0 0.0
    %1861 = vmatpush1.msra.mxu0 %v473
    %1862 = vmatprep.subr.mxu0 0.0
    %1863 = vmatpush1.msra.mxu0 %v470
    %1864 = vmatprep.subr.mxu0 0.0
    %1865 = vmatpush2.msra.mxu0 0.0
    %1866 = vmatprep.subr.mxu0 0.0
    %1867 = vmatpush2.msra.mxu0 0.0
    %1868 = vmatprep.subr.mxu0 0.0
    %1869 = vmatpush2.msra.mxu0 0.0
    %1870 = vmatprep.subr.mxu0 0.0
    %1871 = vmatpush2.msra.mxu0 0.0
    %1872 = vmatprep.subr.mxu0 0.0
    %1873 = vmatpush2.msra.mxu0 0.0
    %1874 = vmatprep.subr.mxu0 0.0
    %1875 = vmatpush2.msra.mxu0 0.0
    %1876 = vmatprep.subr.mxu0 0.0
    %1877 = vmatpush2.msra.mxu0 0.0
    %1878 = vmatprep.subr.mxu0 0.0
    %1879 = vmatpush2.msra.mxu0 0.0
    %1880 = vmatprep.subr.mxu0 0.0
    %1881 = vmatpush2.msra.mxu0 0.0
    %1882 = vmatprep.subr.mxu0 0.0
    %1883 = vmatpush2.msra.mxu0 0.0
    %1884 = vmatprep.subr.mxu0 0.0
    %1885 = vmatpush2.msra.mxu0 0.0
    %1886 = vmatprep.subr.mxu0 0.0
    %1887 = vmatpush2.msra.mxu0 0.0
    %1888 = vmatprep.subr.mxu0 0.0
    %1889 = vmatpush2.msra.mxu0 0.0
    %1890 = vmatprep.subr.mxu0 0.0
    %1891 = vmatpush2.msra.mxu0 0.0
    %1892 = vmatprep.subr.mxu0 0.0
    %1893 = vmatpush2.msra.mxu0 0.0
    %1894 = vmatprep.subr.mxu0 0.0
    %1895 = vmatpush2.msra.mxu0 0.0
    %1896 = vmatprep.mubr.f32.mxu0 0.0
    %1897 = vmatmul.mubr.f32.gmra.mxu0 %v1456
    %v1898 = vpop.f32.mrf.mxu0
    %v1899 = vadd.f32 0.0, %v1898
    %v1900 = vpop.f32.mrf.mxu0
    %1901 = vdwg.mxu0
    %v1902 = vadd.f32 %v1687, %v1828
    %v1903 = vxor.u32 %v1902, 2147483648
    %v1904 = vmul.f32 %v1903, 1.442695
    %v1905 = vpow.pop %v1904
    %v1906 = vadd.f32 %v1905, 1.0
    %v1907 = vrcp.pop %v1906
    %v1908 = vmul.f32 1.0, %v1907
    %v1909 = vadd.f32 %v1689, %v1830
    %v1910 = vxor.u32 %v1909, 2147483648
    %v1911 = vmul.f32 %v1910, 1.442695
    %v1912 = vpow.pop %v1911
    %v1913 = vadd.f32 %v1912, 1.0
    %v1914 = vrcp.pop %v1913
    %v1915 = vmul.f32 1.0, %v1914
    %v1916 = vadd.f32 %v1899, %v521
    %v1917 = vmul.f32 %v1908, %v1916
    %v1918 = vadd.f32 %v1758, %v1917
    %v1919 = vtanh.pop %v1918
    %v1920 = vsub.f32 1.0, %v1915
    %v1921 = vmul.f32 %v1920, %v1919
    %v1922 = vmul.f32 %v1915, %v1456
    %v1923 = vadd.f32 %v1921, %v1922
    %1924 = vmatprep.subr.mxu0 %v394
    %1925 = vmatpush1.msra.mxu0 %v393
    %1926 = vmatprep.subr.mxu0 %v391
    %1927 = vmatpush1.msra.mxu0 %v390
    %1928 = vmatprep.subr.mxu0 %v388
    %1929 = vmatpush1.msra.mxu0 %v387
    %1930 = vmatprep.subr.mxu0 %v385
    %1931 = vmatpush1.msra.mxu0 %v384
    %1932 = vmatprep.subr.mxu0 %v382
    %1933 = vmatpush1.msra.mxu0 %v381
    %1934 = vmatprep.subr.mxu0 %v379
    %1935 = vmatpush1.msra.mxu0 %v378
    %1936 = vmatprep.subr.mxu0 %v376
    %1937 = vmatpush1.msra.mxu0 %v375
    %1938 = vmatprep.subr.mxu0 %v373
    %1939 = vmatpush1.msra.mxu0 %v372
    %1940 = vmatprep.subr.mxu0 %v370
    %1941 = vmatpush1.msra.mxu0 %v369
    %1942 = vmatprep.subr.mxu0 %v367
    %1943 = vmatpush1.msra.mxu0 %v366
    %1944 = vmatprep.subr.mxu0 %v364
    %1945 = vmatpush1.msra.mxu0 %v363
    %1946 = vmatprep.subr.mxu0 %v361
    %1947 = vmatpush1.msra.mxu0 %v360
    %1948 = vmatprep.subr.mxu0 %v358
    %1949 = vmatpush1.msra.mxu0 %v357
    %1950 = vmatprep.subr.mxu0 %v355
    %1951 = vmatpush1.msra.mxu0 %v354
    %1952 = vmatprep.subr.mxu0 %v352
    %1953 = vmatpush1.msra.mxu0 %v351
    %1954 = vmatprep.subr.mxu0 %v349
    %1955 = vmatpush1.msra.mxu0 %v348
    %1956 = vmatprep.subr.mxu0 0.0
    %1957 = vmatpush2.msra.mxu0 0.0
    %1958 = vmatprep.subr.mxu0 0.0
    %1959 = vmatpush2.msra.mxu0 0.0
    %1960 = vmatprep.subr.mxu0 0.0
    %1961 = vmatpush2.msra.mxu0 0.0
    %1962 = vmatprep.subr.mxu0 0.0
    %1963 = vmatpush2.msra.mxu0 0.0
    %1964 = vmatprep.subr.mxu0 0.0
    %1965 = vmatpush2.msra.mxu0 0.0
    %1966 = vmatprep.subr.mxu0 0.0
    %1967 = vmatpush2.msra.mxu0 0.0
    %1968 = vmatprep.subr.mxu0 0.0
    %1969 = vmatpush2.msra.mxu0 0.0
    %1970 = vmatprep.subr.mxu0 0.0
    %1971 = vmatpush2.msra.mxu0 0.0
    %1972 = vmatprep.subr.mxu0 0.0
    %1973 = vmatpush2.msra.mxu0 0.0
    %1974 = vmatprep.subr.mxu0 0.0
    %1975 = vmatpush2.msra.mxu0 0.0
    %1976 = vmatprep.subr.mxu0 0.0
    %1977 = vmatpush2.msra.mxu0 0.0
    %1978 = vmatprep.subr.mxu0 0.0
    %1979 = vmatpush2.msra.mxu0 0.0
    %1980 = vmatprep.subr.mxu0 0.0
    %1981 = vmatpush2.msra.mxu0 0.0
    %1982 = vmatprep.subr.mxu0 0.0
    %1983 = vmatpush2.msra.mxu0 0.0
    %1984 = vmatprep.subr.mxu0 0.0
    %1985 = vmatpush2.msra.mxu0 0.0
    %1986 = vmatprep.subr.mxu0 0.0
    %1987 = vmatpush2.msra.mxu0 0.0
    %1988 = vmatprep.mubr.f32.mxu0 0.0
    %1989 = vmatmul.mubr.f32.gmra.mxu0 %v1619
    %v1990 = vpop.f32.mrf.mxu0
    %v1991 = vadd.f32 0.0, %v1990
    %v1992 = vpop.f32.mrf.mxu0
    %v1993 = vadd.f32 0.0, %v1992
    %1994 = vdwg.mxu0
    %1995 = vmatprep.subr.mxu0 0.0
    %1996 = vmatpush1.msra.mxu0 %v395
    %1997 = vmatprep.subr.mxu0 0.0
    %1998 = vmatpush1.msra.mxu0 %v392
    %1999 = vmatprep.subr.mxu0 0.0
    %2000 = vmatpush1.msra.mxu0 %v389
    %2001 = vmatprep.subr.mxu0 0.0
    %2002 = vmatpush1.msra.mxu0 %v386
    %2003 = vmatprep.subr.mxu0 0.0
    %2004 = vmatpush1.msra.mxu0 %v383
    %2005 = vmatprep.subr.mxu0 0.0
    %2006 = vmatpush1.msra.mxu0 %v380
    %2007 = vmatprep.subr.mxu0 0.0
    %2008 = vmatpush1.msra.mxu0 %v377
    %2009 = vmatprep.subr.mxu0 0.0
    %2010 = vmatpush1.msra.mxu0 %v374
    %2011 = vmatprep.subr.mxu0 0.0
    %2012 = vmatpush1.msra.mxu0 %v371
    %2013 = vmatprep.subr.mxu0 0.0
    %2014 = vmatpush1.msra.mxu0 %v368
    %2015 = vmatprep.subr.mxu0 0.0
    %2016 = vmatpush1.msra.mxu0 %v365
    %2017 = vmatprep.subr.mxu0 0.0
    %2018 = vmatpush1.msra.mxu0 %v362
    %2019 = vmatprep.subr.mxu0 0.0
    %2020 = vmatpush1.msra.mxu0 %v359
    %2021 = vmatprep.subr.mxu0 0.0
    %2022 = vmatpush1.msra.mxu0 %v356
    %2023 = vmatprep.subr.mxu0 0.0
    %2024 = vmatpush1.msra.mxu0 %v353
    %2025 = vmatprep.subr.mxu0 0.0
    %2026 = vmatpush1.msra.mxu0 %v350
    %2027 = vmatprep.subr.mxu0 0.0
    %2028 = vmatpush2.msra.mxu0 0.0
    %2029 = vmatprep.subr.mxu0 0.0
    %2030 = vmatpush2.msra.mxu0 0.0
    %2031 = vmatprep.subr.mxu0 0.0
    %2032 = vmatpush2.msra.mxu0 0.0
    %2033 = vmatprep.subr.mxu0 0.0
    %2034 = vmatpush2.msra.mxu0 0.0
    %2035 = vmatprep.subr.mxu0 0.0
    %2036 = vmatpush2.msra.mxu0 0.0
    %2037 = vmatprep.subr.mxu0 0.0
    %2038 = vmatpush2.msra.mxu0 0.0
    %2039 = vmatprep.subr.mxu0 0.0
    %2040 = vmatpush2.msra.mxu0 0.0
    %2041 = vmatprep.subr.mxu0 0.0
    %2042 = vmatpush2.msra.mxu0 0.0
    %2043 = vmatprep.subr.mxu0 0.0
    %2044 = vmatpush2.msra.mxu0 0.0
    %2045 = vmatprep.subr.mxu0 0.0
    %2046 = vmatpush2.msra.mxu0 0.0
    %2047 = vmatprep.subr.mxu0 0.0
    %2048 = vmatpush2.msra.mxu0 0.0
    %2049 = vmatprep.subr.mxu0 0.0
    %2050 = vmatpush2.msra.mxu0 0.0
    %2051 = vmatprep.subr.mxu0 0.0
    %2052 = vmatpush2.msra.mxu0 0.0
    %2053 = vmatprep.subr.mxu0 0.0
    %2054 = vmatpush2.msra.mxu0 0.0
    %2055 = vmatprep.subr.mxu0 0.0
    %2056 = vmatpush2.msra.mxu0 0.0
    %2057 = vmatprep.subr.mxu0 0.0
    %2058 = vmatpush2.msra.mxu0 0.0
    %2059 = vmatprep.mubr.f32.mxu0 0.0
    %2060 = vmatmul.mubr.f32.gmra.mxu0 %v1619
    %v2061 = vpop.f32.mrf.mxu0
    %v2062 = vadd.f32 0.0, %v2061
    %v2063 = vpop.f32.mrf.mxu0
    %2064 = vdwg.mxu0
    %v2065 = vadd.f32 %v215, %v1991
    %v2066 = vxor.u32 %v2065, 2147483648
    %v2067 = vmul.f32 %v2066, 1.442695
    %v2068 = vpow.pop %v2067
    %v2069 = vadd.f32 %v2068, 1.0
    %v2070 = vrcp.pop %v2069
    %v2071 = vmul.f32 1.0, %v2070
    %v2072 = vadd.f32 %v217, %v1993
    %v2073 = vxor.u32 %v2072, 2147483648
    %v2074 = vmul.f32 %v2073, 1.442695
    %v2075 = vpow.pop %v2074
    %v2076 = vadd.f32 %v2075, 1.0
    %v2077 = vrcp.pop %v2076
    %v2078 = vmul.f32 1.0, %v2077
    %v2079 = vadd.f32 %v2062, %v401
    %v2080 = vmul.f32 %v2071, %v2079
    %v2081 = vadd.f32 %v325, %v2080
    %v2082 = vtanh.pop %v2081
    %v2083 = vsub.f32 1.0, %v2078
    %v2084 = vmul.f32 %v2083, %v2082
    %v2085 = vmul.f32 %v2078, %v1619
    %v2086 = vadd.f32 %v2084, %v2085
    %2087 = vmatprep.subr.mxu0 %v449
    %2088 = vmatpush1.msra.mxu0 %v448
    %2089 = vmatprep.subr.mxu0 %v446
    %2090 = vmatpush1.msra.mxu0 %v445
    %2091 = vmatprep.subr.mxu0 %v443
    %2092 = vmatpush1.msra.mxu0 %v442
    %2093 = vmatprep.subr.mxu0 %v440
    %2094 = vmatpush1.msra.mxu0 %v439
    %2095 = vmatprep.subr.mxu0 %v437
    %2096 = vmatpush1.msra.mxu0 %v436
    %2097 = vmatprep.subr.mxu0 %v434
    %2098 = vmatpush1.msra.mxu0 %v433
    %2099 = vmatprep.subr.mxu0 %v431
    %2100 = vmatpush1.msra.mxu0 %v430
    %2101 = vmatprep.subr.mxu0 %v428
    %2102 = vmatpush1.msra.mxu0 %v427
    %2103 = vmatprep.subr.mxu0 %v425
    %2104 = vmatpush1.msra.mxu0 %v424
    %2105 = vmatprep.subr.mxu0 %v422
    %2106 = vmatpush1.msra.mxu0 %v421
    %2107 = vmatprep.subr.mxu0 %v419
    %2108 = vmatpush1.msra.mxu0 %v418
    %2109 = vmatprep.subr.mxu0 %v416
    %2110 = vmatpush1.msra.mxu0 %v415
    %2111 = vmatprep.subr.mxu0 %v413
    %2112 = vmatpush1.msra.mxu0 %v412
    %2113 = vmatprep.subr.mxu0 %v410
    %2114 = vmatpush1.msra.mxu0 %v409
    %2115 = vmatprep.subr.mxu0 %v407
    %2116 = vmatpush1.msra.mxu0 %v406
    %2117 = vmatprep.subr.mxu0 %v404
    %2118 = vmatpush1.msra.mxu0 %v403
    %2119 = vmatprep.subr.mxu0 0.0
    %2120 = vmatpush2.msra.mxu0 0.0
    %2121 = vmatprep.subr.mxu0 0.0
    %2122 = vmatpush2.msra.mxu0 0.0
    %2123 = vmatprep.subr.mxu0 0.0
    %2124 = vmatpush2.msra.mxu0 0.0
    %2125 = vmatprep.subr.mxu0 0.0
    %2126 = vmatpush2.msra.mxu0 0.0
    %2127 = vmatprep.subr.mxu0 0.0
    %2128 = vmatpush2.msra.mxu0 0.0
    %2129 = vmatprep.subr.mxu0 0.0
    %2130 = vmatpush2.msra.mxu0 0.0
    %2131 = vmatprep.subr.mxu0 0.0
    %2132 = vmatpush2.msra.mxu0 0.0
    %2133 = vmatprep.subr.mxu0 0.0
    %2134 = vmatpush2.msra.mxu0 0.0
    %2135 = vmatprep.subr.mxu0 0.0
    %2136 = vmatpush2.msra.mxu0 0.0
    %2137 = vmatprep.subr.mxu0 0.0
    %2138 = vmatpush2.msra.mxu0 0.0
    %2139 = vmatprep.subr.mxu0 0.0
    %2140 = vmatpush2.msra.mxu0 0.0
    %2141 = vmatprep.subr.mxu0 0.0
    %2142 = vmatpush2.msra.mxu0 0.0
    %2143 = vmatprep.subr.mxu0 0.0
    %2144 = vmatpush2.msra.mxu0 0.0
    %2145 = vmatprep.subr.mxu0 0.0
    %2146 = vmatpush2.msra.mxu0 0.0
    %2147 = vmatprep.subr.mxu0 0.0
    %2148 = vmatpush2.msra.mxu0 0.0
    %2149 = vmatprep.subr.mxu0 0.0
    %2150 = vmatpush2.msra.mxu0 0.0
    %2151 = vmatprep.mubr.f32.mxu0 0.0
    %2152 = vmatmul.mubr.f32.gmra.mxu0 %v2086
    %v2153 = vpop.f32.mrf.mxu0
    %v2154 = vadd.f32 %v456, %v2153
    %v2155 = vpop.f32.mrf.mxu0
    %v2156 = vadd.f32 %v460, %v2155
    %2157 = vdwg.mxu0
    %2158 = vmatprep.subr.mxu0 0.0
    %2159 = vmatpush1.msra.mxu0 %v450
    %2160 = vmatprep.subr.mxu0 0.0
    %2161 = vmatpush1.msra.mxu0 %v447
    %2162 = vmatprep.subr.mxu0 0.0
    %2163 = vmatpush1.msra.mxu0 %v444
    %2164 = vmatprep.subr.mxu0 0.0
    %2165 = vmatpush1.msra.mxu0 %v441
    %2166 = vmatprep.subr.mxu0 0.0
    %2167 = vmatpush1.msra.mxu0 %v438
    %2168 = vmatprep.subr.mxu0 0.0
    %2169 = vmatpush1.msra.mxu0 %v435
    %2170 = vmatprep.subr.mxu0 0.0
    %2171 = vmatpush1.msra.mxu0 %v432
    %2172 = vmatprep.subr.mxu0 0.0
    %2173 = vmatpush1.msra.mxu0 %v429
    %2174 = vmatprep.subr.mxu0 0.0
    %2175 = vmatpush1.msra.mxu0 %v426
    %2176 = vmatprep.subr.mxu0 0.0
    %2177 = vmatpush1.msra.mxu0 %v423
    %2178 = vmatprep.subr.mxu0 0.0
    %2179 = vmatpush1.msra.mxu0 %v420
    %2180 = vmatprep.subr.mxu0 0.0
    %2181 = vmatpush1.msra.mxu0 %v417
    %2182 = vmatprep.subr.mxu0 0.0
    %2183 = vmatpush1.msra.mxu0 %v414
    %2184 = vmatprep.subr.mxu0 0.0
    %2185 = vmatpush1.msra.mxu0 %v411
    %2186 = vmatprep.subr.mxu0 0.0
    %2187 = vmatpush1.msra.mxu0 %v408
    %2188 = vmatprep.subr.mxu0 0.0
    %2189 = vmatpush1.msra.mxu0 %v405
    %2190 = vmatprep.subr.mxu0 0.0
    %2191 = vmatpush2.msra.mxu0 0.0
    %2192 = vmatprep.subr.mxu0 0.0
    %2193 = vmatpush2.msra.mxu0 0.0
    %2194 = vmatprep.subr.mxu0 0.0
    %2195 = vmatpush2.msra.mxu0 0.0
    %2196 = vmatprep.subr.mxu0 0.0
    %2197 = vmatpush2.msra.mxu0 0.0
    %2198 = vmatprep.subr.mxu0 0.0
    %2199 = vmatpush2.msra.mxu0 0.0
    %2200 = vmatprep.subr.mxu0 0.0
    %2201 = vmatpush2.msra.mxu0 0.0
    %2202 = vmatprep.subr.mxu0 0.0
    %2203 = vmatpush2.msra.mxu0 0.0
    %2204 = vmatprep.subr.mxu0 0.0
    %2205 = vmatpush2.msra.mxu0 0.0
    %2206 = vmatprep.subr.mxu0 0.0
    %2207 = vmatpush2.msra.mxu0 0.0
    %2208 = vmatprep.subr.mxu0 0.0
    %2209 = vmatpush2.msra.mxu0 0.0
    %2210 = vmatprep.subr.mxu0 0.0
    %2211 = vmatpush2.msra.mxu0 0.0
    %2212 = vmatprep.subr.mxu0 0.0
    %2213 = vmatpush2.msra.mxu0 0.0
    %2214 = vmatprep.subr.mxu0 0.0
    %2215 = vmatpush2.msra.mxu0 0.0
    %2216 = vmatprep.subr.mxu0 0.0
    %2217 = vmatpush2.msra.mxu0 0.0
    %2218 = vmatprep.subr.mxu0 0.0
    %2219 = vmatpush2.msra.mxu0 0.0
    %2220 = vmatprep.subr.mxu0 0.0
    %2221 = vmatpush2.msra.mxu0 0.0
    %2222 = vmatprep.mubr.f32.mxu0 0.0
    %2223 = vmatmul.mubr.f32.gmra.mxu0 %v2086
    %v2224 = vpop.f32.mrf.mxu0
    %v2225 = vadd.f32 %v464, %v2224
    %v2226 = vpop.f32.mrf.mxu0
    %2227 = vdwg.mxu0
    %2228 = vmatprep.subr.mxu0 %v514
    %2229 = vmatpush1.msra.mxu0 %v513
    %2230 = vmatprep.subr.mxu0 %v511
    %2231 = vmatpush1.msra.mxu0 %v510
    %2232 = vmatprep.subr.mxu0 %v508
    %2233 = vmatpush1.msra.mxu0 %v507
    %2234 = vmatprep.subr.mxu0 %v505
    %2235 = vmatpush1.msra.mxu0 %v504
    %2236 = vmatprep.subr.mxu0 %v502
    %2237 = vmatpush1.msra.mxu0 %v501
    %2238 = vmatprep.subr.mxu0 %v499
    %2239 = vmatpush1.msra.mxu0 %v498
    %2240 = vmatprep.subr.mxu0 %v496
    %2241 = vmatpush1.msra.mxu0 %v495
    %2242 = vmatprep.subr.mxu0 %v493
    %2243 = vmatpush1.msra.mxu0 %v492
    %2244 = vmatprep.subr.mxu0 %v490
    %2245 = vmatpush1.msra.mxu0 %v489
    %2246 = vmatprep.subr.mxu0 %v487
    %2247 = vmatpush1.msra.mxu0 %v486
    %2248 = vmatprep.subr.mxu0 %v484
    %2249 = vmatpush1.msra.mxu0 %v483
    %2250 = vmatprep.subr.mxu0 %v481
    %2251 = vmatpush1.msra.mxu0 %v480
    %2252 = vmatprep.subr.mxu0 %v478
    %2253 = vmatpush1.msra.mxu0 %v477
    %2254 = vmatprep.subr.mxu0 %v475
    %2255 = vmatpush1.msra.mxu0 %v474
    %2256 = vmatprep.subr.mxu0 %v472
    %2257 = vmatpush1.msra.mxu0 %v471
    %2258 = vmatprep.subr.mxu0 %v469
    %2259 = vmatpush1.msra.mxu0 %v468
    %2260 = vmatprep.subr.mxu0 0.0
    %2261 = vmatpush2.msra.mxu0 0.0
    %2262 = vmatprep.subr.mxu0 0.0
    %2263 = vmatpush2.msra.mxu0 0.0
    %2264 = vmatprep.subr.mxu0 0.0
    %2265 = vmatpush2.msra.mxu0 0.0
    %2266 = vmatprep.subr.mxu0 0.0
    %2267 = vmatpush2.msra.mxu0 0.0
    %2268 = vmatprep.subr.mxu0 0.0
    %2269 = vmatpush2.msra.mxu0 0.0
    %2270 = vmatprep.subr.mxu0 0.0
    %2271 = vmatpush2.msra.mxu0 0.0
    %2272 = vmatprep.subr.mxu0 0.0
    %2273 = vmatpush2.msra.mxu0 0.0
    %2274 = vmatprep.subr.mxu0 0.0
    %2275 = vmatpush2.msra.mxu0 0.0
    %2276 = vmatprep.subr.mxu0 0.0
    %2277 = vmatpush2.msra.mxu0 0.0
    %2278 = vmatprep.subr.mxu0 0.0
    %2279 = vmatpush2.msra.mxu0 0.0
    %2280 = vmatprep.subr.mxu0 0.0
    %2281 = vmatpush2.msra.mxu0 0.0
    %2282 = vmatprep.subr.mxu0 0.0
    %2283 = vmatpush2.msra.mxu0 0.0
    %2284 = vmatprep.subr.mxu0 0.0
    %2285 = vmatpush2.msra.mxu0 0.0
    %2286 = vmatprep.subr.mxu0 0.0
    %2287 = vmatpush2.msra.mxu0 0.0
    %2288 = vmatprep.subr.mxu0 0.0
    %2289 = vmatpush2.msra.mxu0 0.0
    %2290 = vmatprep.subr.mxu0 0.0
    %2291 = vmatpush2.msra.mxu0 0.0
    %2292 = vmatprep.mubr.f32.mxu0 0.0
    %2293 = vmatmul.mubr.f32.gmra.mxu0 %v1923
    %v2294 = vpop.f32.mrf.mxu0
    %v2295 = vadd.f32 0.0, %v2294
    %v2296 = vpop.f32.mrf.mxu0
    %v2297 = vadd.f32 0.0, %v2296
    %2298 = vdwg.mxu0
    %2299 = vmatprep.subr.mxu0 0.0
    %2300 = vmatpush1.msra.mxu0 %v515
    %2301 = vmatprep.subr.mxu0 0.0
    %2302 = vmatpush1.msra.mxu0 %v512
    %2303 = vmatprep.subr.mxu0 0.0
    %2304 = vmatpush1.msra.mxu0 %v509
    %2305 = vmatprep.subr.mxu0 0.0
    %2306 = vmatpush1.msra.mxu0 %v506
    %2307 = vmatprep.subr.mxu0 0.0
    %2308 = vmatpush1.msra.mxu0 %v503
    %2309 = vmatprep.subr.mxu0 0.0
    %2310 = vmatpush1.msra.mxu0 %v500
    %2311 = vmatprep.subr.mxu0 0.0
    %2312 = vmatpush1.msra.mxu0 %v497
    %2313 = vmatprep.subr.mxu0 0.0
    %2314 = vmatpush1.msra.mxu0 %v494
    %2315 = vmatprep.subr.mxu0 0.0
    %2316 = vmatpush1.msra.mxu0 %v491
    %2317 = vmatprep.subr.mxu0 0.0
    %2318 = vmatpush1.msra.mxu0 %v488
    %2319 = vmatprep.subr.mxu0 0.0
    %2320 = vmatpush1.msra.mxu0 %v485
    %2321 = vmatprep.subr.mxu0 0.0
    %2322 = vmatpush1.msra.mxu0 %v482
    %2323 = vmatprep.subr.mxu0 0.0
    %2324 = vmatpush1.msra.mxu0 %v479
    %2325 = vmatprep.subr.mxu0 0.0
    %2326 = vmatpush1.msra.mxu0 %v476
    %2327 = vmatprep.subr.mxu0 0.0
    %2328 = vmatpush1.msra.mxu0 %v473
    %2329 = vmatprep.subr.mxu0 0.0
    %2330 = vmatpush1.msra.mxu0 %v470
    %2331 = vmatprep.subr.mxu0 0.0
    %2332 = vmatpush2.msra.mxu0 0.0
    %2333 = vmatprep.subr.mxu0 0.0
    %2334 = vmatpush2.msra.mxu0 0.0
    %2335 = vmatprep.subr.mxu0 0.0
    %2336 = vmatpush2.msra.mxu0 0.0
    %2337 = vmatprep.subr.mxu0 0.0
    %2338 = vmatpush2.msra.mxu0 0.0
    %2339 = vmatprep.subr.mxu0 0.0
    %2340 = vmatpush2.msra.mxu0 0.0
    %2341 = vmatprep.subr.mxu0 0.0
    %2342 = vmatpush2.msra.mxu0 0.0
    %2343 = vmatprep.subr.mxu0 0.0
    %2344 = vmatpush2.msra.mxu0 0.0
    %2345 = vmatprep.subr.mxu0 0.0
    %2346 = vmatpush2.msra.mxu0 0.0
    %2347 = vmatprep.subr.mxu0 0.0
    %2348 = vmatpush2.msra.mxu0 0.0
    %2349 = vmatprep.subr.mxu0 0.0
    %2350 = vmatpush2.msra.mxu0 0.0
    %2351 = vmatprep.subr.mxu0 0.0
    %2352 = vmatpush2.msra.mxu0 0.0
    %2353 = vmatprep.subr.mxu0 0.0
    %2354 = vmatpush2.msra.mxu0 0.0
    %2355 = vmatprep.subr.mxu0 0.0
    %2356 = vmatpush2.msra.mxu0 0.0
    %2357 = vmatprep.subr.mxu0 0.0
    %2358 = vmatpush2.msra.mxu0 0.0
    %2359 = vmatprep.subr.mxu0 0.0
    %2360 = vmatpush2.msra.mxu0 0.0
    %2361 = vmatprep.subr.mxu0 0.0
    %2362 = vmatpush2.msra.mxu0 0.0
    %2363 = vmatprep.mubr.f32.mxu0 0.0
    %2364 = vmatmul.mubr.f32.gmra.mxu0 %v1923
    %v2365 = vpop.f32.mrf.mxu0
    %v2366 = vadd.f32 0.0, %v2365
    %v2367 = vpop.f32.mrf.mxu0
    %2368 = vdwg.mxu0
    %v2369 = vadd.f32 %v2154, %v2295
    %v2370 = vxor.u32 %v2369, 2147483648
    %v2371 = vmul.f32 %v2370, 1.442695
    %v2372 = vpow.pop %v2371
    %v2373 = vadd.f32 %v2372, 1.0
    %v2374 = vrcp.pop %v2373
    %v2375 = vmul.f32 1.0, %v2374
    %v2376 = vadd.f32 %v2156, %v2297
    %v2377 = vxor.u32 %v2376, 2147483648
    %v2378 = vmul.f32 %v2377, 1.442695
    %v2379 = vpow.pop %v2378
    %v2380 = vadd.f32 %v2379, 1.0
    %v2381 = vrcp.pop %v2380
    %v2382 = vmul.f32 1.0, %v2381
    %v2383 = vadd.f32 %v2366, %v521
    %v2384 = vmul.f32 %v2375, %v2383
    %v2385 = vadd.f32 %v2225, %v2384
    %v2386 = vtanh.pop %v2385
    %v2387 = vsub.f32 1.0, %v2382
    %v2388 = vmul.f32 %v2387, %v2386
    %v2389 = vmul.f32 %v2382, %v1923
    %v2390 = vadd.f32 %v2388, %v2389
    %2391 = vmatprep.subr.mxu0 %v394
    %2392 = vmatpush1.msra.mxu0 %v393
    %2393 = vmatprep.subr.mxu0 %v391
    %2394 = vmatpush1.msra.mxu0 %v390
    %2395 = vmatprep.subr.mxu0 %v388
    %2396 = vmatpush1.msra.mxu0 %v387
    %2397 = vmatprep.subr.mxu0 %v385
    %2398 = vmatpush1.msra.mxu0 %v384
    %2399 = vmatprep.subr.mxu0 %v382
    %2400 = vmatpush1.msra.mxu0 %v381
    %2401 = vmatprep.subr.mxu0 %v379
    %2402 = vmatpush1.msra.mxu0 %v378
    %2403 = vmatprep.subr.mxu0 %v376
    %2404 = vmatpush1.msra.mxu0 %v375
    %2405 = vmatprep.subr.mxu0 %v373
    %2406 = vmatpush1.msra.mxu0 %v372
    %2407 = vmatprep.subr.mxu0 %v370
    %2408 = vmatpush1.msra.mxu0 %v369
    %2409 = vmatprep.subr.mxu0 %v367
    %2410 = vmatpush1.msra.mxu0 %v366
    %2411 = vmatprep.subr.mxu0 %v364
    %2412 = vmatpush1.msra.mxu0 %v363
    %2413 = vmatprep.subr.mxu0 %v361
    %2414 = vmatpush1.msra.mxu0 %v360
    %2415 = vmatprep.subr.mxu0 %v358
    %2416 = vmatpush1.msra.mxu0 %v357
    %2417 = vmatprep.subr.mxu0 %v355
    %2418 = vmatpush1.msra.mxu0 %v354
    %2419 = vmatprep.subr.mxu0 %v352
    %2420 = vmatpush1.msra.mxu0 %v351
    %2421 = vmatprep.subr.mxu0 %v349
    %2422 = vmatpush1.msra.mxu0 %v348
    %2423 = vmatprep.subr.mxu0 0.0
    %2424 = vmatpush2.msra.mxu0 0.0
    %2425 = vmatprep.subr.mxu0 0.0
    %2426 = vmatpush2.msra.mxu0 0.0
    %2427 = vmatprep.subr.mxu0 0.0
    %2428 = vmatpush2.msra.mxu0 0.0
    %2429 = vmatprep.subr.mxu0 0.0
    %2430 = vmatpush2.msra.mxu0 0.0
    %2431 = vmatprep.subr.mxu0 0.0
    %2432 = vmatpush2.msra.mxu0 0.0
    %2433 = vmatprep.subr.mxu0 0.0
    %2434 = vmatpush2.msra.mxu0 0.0
    %2435 = vmatprep.subr.mxu0 0.0
    %2436 = vmatpush2.msra.mxu0 0.0
    %2437 = vmatprep.subr.mxu0 0.0
    %2438 = vmatpush2.msra.mxu0 0.0
    %2439 = vmatprep.subr.mxu0 0.0
    %2440 = vmatpush2.msra.mxu0 0.0
    %2441 = vmatprep.subr.mxu0 0.0
    %2442 = vmatpush2.msra.mxu0 0.0
    %2443 = vmatprep.subr.mxu0 0.0
    %2444 = vmatpush2.msra.mxu0 0.0
    %2445 = vmatprep.subr.mxu0 0.0
    %2446 = vmatpush2.msra.mxu0 0.0
    %2447 = vmatprep.subr.mxu0 0.0
    %2448 = vmatpush2.msra.mxu0 0.0
    %2449 = vmatprep.subr.mxu0 0.0
    %2450 = vmatpush2.msra.mxu0 0.0
    %2451 = vmatprep.subr.mxu0 0.0
    %2452 = vmatpush2.msra.mxu0 0.0
    %2453 = vmatprep.subr.mxu0 0.0
    %2454 = vmatpush2.msra.mxu0 0.0
    %2455 = vmatprep.mubr.f32.mxu0 0.0
    %2456 = vmatmul.mubr.f32.gmra.mxu0 %v2086
    %v2457 = vpop.f32.mrf.mxu0
    %v2458 = vadd.f32 0.0, %v2457
    %v2459 = vpop.f32.mrf.mxu0
    %v2460 = vadd.f32 0.0, %v2459
    %2461 = vdwg.mxu0
    %2462 = vmatprep.subr.mxu0 0.0
    %2463 = vmatpush1.msra.mxu0 %v395
    %2464 = vmatprep.subr.mxu0 0.0
    %2465 = vmatpush1.msra.mxu0 %v392
    %2466 = vmatprep.subr.mxu0 0.0
    %2467 = vmatpush1.msra.mxu0 %v389
    %2468 = vmatprep.subr.mxu0 0.0
    %2469 = vmatpush1.msra.mxu0 %v386
    %2470 = vmatprep.subr.mxu0 0.0
    %2471 = vmatpush1.msra.mxu0 %v383
    %2472 = vmatprep.subr.mxu0 0.0
    %2473 = vmatpush1.msra.mxu0 %v380
    %2474 = vmatprep.subr.mxu0 0.0
    %2475 = vmatpush1.msra.mxu0 %v377
    %2476 = vmatprep.subr.mxu0 0.0
    %2477 = vmatpush1.msra.mxu0 %v374
    %2478 = vmatprep.subr.mxu0 0.0
    %2479 = vmatpush1.msra.mxu0 %v371
    %2480 = vmatprep.subr.mxu0 0.0
    %2481 = vmatpush1.msra.mxu0 %v368
    %2482 = vmatprep.subr.mxu0 0.0
    %2483 = vmatpush1.msra.mxu0 %v365
    %2484 = vmatprep.subr.mxu0 0.0
    %2485 = vmatpush1.msra.mxu0 %v362
    %2486 = vmatprep.subr.mxu0 0.0
    %2487 = vmatpush1.msra.mxu0 %v359
    %2488 = vmatprep.subr.mxu0 0.0
    %2489 = vmatpush1.msra.mxu0 %v356
    %2490 = vmatprep.subr.mxu0 0.0
    %2491 = vmatpush1.msra.mxu0 %v353
    %2492 = vmatprep.subr.mxu0 0.0
    %2493 = vmatpush1.msra.mxu0 %v350
    %2494 = vmatprep.subr.mxu0 0.0
    %2495 = vmatpush2.msra.mxu0 0.0
    %2496 = vmatprep.subr.mxu0 0.0
    %2497 = vmatpush2.msra.mxu0 0.0
    %2498 = vmatprep.subr.mxu0 0.0
    %2499 = vmatpush2.msra.mxu0 0.0
    %2500 = vmatprep.subr.mxu0 0.0
    %2501 = vmatpush2.msra.mxu0 0.0
    %2502 = vmatprep.subr.mxu0 0.0
    %2503 = vmatpush2.msra.mxu0 0.0
    %2504 = vmatprep.subr.mxu0 0.0
    %2505 = vmatpush2.msra.mxu0 0.0
    %2506 = vmatprep.subr.mxu0 0.0
    %2507 = vmatpush2.msra.mxu0 0.0
    %2508 = vmatprep.subr.mxu0 0.0
    %2509 = vmatpush2.msra.mxu0 0.0
    %2510 = vmatprep.subr.mxu0 0.0
    %2511 = vmatpush2.msra.mxu0 0.0
    %2512 = vmatprep.subr.mxu0 0.0
    %2513 = vmatpush2.msra.mxu0 0.0
    %2514 = vmatprep.subr.mxu0 0.0
    %2515 = vmatpush2.msra.mxu0 0.0
    %2516 = vmatprep.subr.mxu0 0.0
    %2517 = vmatpush2.msra.mxu0 0.0
    %2518 = vmatprep.subr.mxu0 0.0
    %2519 = vmatpush2.msra.mxu0 0.0
    %2520 = vmatprep.subr.mxu0 0.0
    %2521 = vmatpush2.msra.mxu0 0.0
    %2522 = vmatprep.subr.mxu0 0.0
    %2523 = vmatpush2.msra.mxu0 0.0
    %2524 = vmatprep.subr.mxu0 0.0
    %2525 = vmatpush2.msra.mxu0 0.0
    %2526 = vmatprep.mubr.f32.mxu0 0.0
    %2527 = vmatmul.mubr.f32.gmra.mxu0 %v2086
    %v2528 = vpop.f32.mrf.mxu0
    %v2529 = vadd.f32 0.0, %v2528
    %v2530 = vpop.f32.mrf.mxu0
    %2531 = vdwg.mxu0
    %v2532 = vadd.f32 %v221, %v2458
    %v2533 = vxor.u32 %v2532, 2147483648
    %v2534 = vmul.f32 %v2533, 1.442695
    %v2535 = vpow.pop %v2534
    %v2536 = vadd.f32 %v2535, 1.0
    %v2537 = vrcp.pop %v2536
    %v2538 = vmul.f32 1.0, %v2537
    %v2539 = vadd.f32 %v223, %v2460
    %v2540 = vxor.u32 %v2539, 2147483648
    %v2541 = vmul.f32 %v2540, 1.442695
    %v2542 = vpow.pop %v2541
    %v2543 = vadd.f32 %v2542, 1.0
    %v2544 = vrcp.pop %v2543
    %v2545 = vmul.f32 1.0, %v2544
    %v2546 = vadd.f32 %v2529, %v401
    %v2547 = vmul.f32 %v2538, %v2546
    %v2548 = vadd.f32 %v330, %v2547
    %v2549 = vtanh.pop %v2548
    %v2550 = vsub.f32 1.0, %v2545
    %v2551 = vmul.f32 %v2550, %v2549
    %v2552 = vmul.f32 %v2545, %v2086
    %v2553 = vadd.f32 %v2551, %v2552
    %2554 = vmatprep.subr.mxu0 %v449
    %2555 = vmatpush1.msra.mxu0 %v448
    %2556 = vmatprep.subr.mxu0 %v446
    %2557 = vmatpush1.msra.mxu0 %v445
    %2558 = vmatprep.subr.mxu0 %v443
    %2559 = vmatpush1.msra.mxu0 %v442
    %2560 = vmatprep.subr.mxu0 %v440
    %2561 = vmatpush1.msra.mxu0 %v439
    %2562 = vmatprep.subr.mxu0 %v437
    %2563 = vmatpush1.msra.mxu0 %v436
    %2564 = vmatprep.subr.mxu0 %v434
    %2565 = vmatpush1.msra.mxu0 %v433
    %2566 = vmatprep.subr.mxu0 %v431
    %2567 = vmatpush1.msra.mxu0 %v430
    %2568 = vmatprep.subr.mxu0 %v428
    %2569 = vmatpush1.msra.mxu0 %v427
    %2570 = vmatprep.subr.mxu0 %v425
    %2571 = vmatpush1.msra.mxu0 %v424
    %2572 = vmatprep.subr.mxu0 %v422
    %2573 = vmatpush1.msra.mxu0 %v421
    %2574 = vmatprep.subr.mxu0 %v419
    %2575 = vmatpush1.msra.mxu0 %v418
    %2576 = vmatprep.subr.mxu0 %v416
    %2577 = vmatpush1.msra.mxu0 %v415
    %2578 = vmatprep.subr.mxu0 %v413
    %2579 = vmatpush1.msra.mxu0 %v412
    %2580 = vmatprep.subr.mxu0 %v410
    %2581 = vmatpush1.msra.mxu0 %v409
    %2582 = vmatprep.subr.mxu0 %v407
    %2583 = vmatpush1.msra.mxu0 %v406
    %2584 = vmatprep.subr.mxu0 %v404
    %2585 = vmatpush1.msra.mxu0 %v403
    %2586 = vmatprep.subr.mxu0 0.0
    %2587 = vmatpush2.msra.mxu0 0.0
    %2588 = vmatprep.subr.mxu0 0.0
    %2589 = vmatpush2.msra.mxu0 0.0
    %2590 = vmatprep.subr.mxu0 0.0
    %2591 = vmatpush2.msra.mxu0 0.0
    %2592 = vmatprep.subr.mxu0 0.0
    %2593 = vmatpush2.msra.mxu0 0.0
    %2594 = vmatprep.subr.mxu0 0.0
    %2595 = vmatpush2.msra.mxu0 0.0
    %2596 = vmatprep.subr.mxu0 0.0
    %2597 = vmatpush2.msra.mxu0 0.0
    %2598 = vmatprep.subr.mxu0 0.0
    %2599 = vmatpush2.msra.mxu0 0.0
    %2600 = vmatprep.subr.mxu0 0.0
    %2601 = vmatpush2.msra.mxu0 0.0
    %2602 = vmatprep.subr.mxu0 0.0
    %2603 = vmatpush2.msra.mxu0 0.0
    %2604 = vmatprep.subr.mxu0 0.0
    %2605 = vmatpush2.msra.mxu0 0.0
    %2606 = vmatprep.subr.mxu0 0.0
    %2607 = vmatpush2.msra.mxu0 0.0
    %2608 = vmatprep.subr.mxu0 0.0
    %2609 = vmatpush2.msra.mxu0 0.0
    %2610 = vmatprep.subr.mxu0 0.0
    %2611 = vmatpush2.msra.mxu0 0.0
    %2612 = vmatprep.subr.mxu0 0.0
    %2613 = vmatpush2.msra.mxu0 0.0
    %2614 = vmatprep.subr.mxu0 0.0
    %2615 = vmatpush2.msra.mxu0 0.0
    %2616 = vmatprep.subr.mxu0 0.0
    %2617 = vmatpush2.msra.mxu0 0.0
    %2618 = vmatprep.mubr.f32.mxu0 0.0
    %2619 = vmatmul.mubr.f32.gmra.mxu0 %v2553
    %v2620 = vpop.f32.mrf.mxu0
    %v2621 = vadd.f32 %v456, %v2620
    %v2622 = vpop.f32.mrf.mxu0
    %v2623 = vadd.f32 %v460, %v2622
    %2624 = vdwg.mxu0
    %2625 = vmatprep.subr.mxu0 0.0
    %2626 = vmatpush1.msra.mxu0 %v450
    %2627 = vmatprep.subr.mxu0 0.0
    %2628 = vmatpush1.msra.mxu0 %v447
    %2629 = vmatprep.subr.mxu0 0.0
    %2630 = vmatpush1.msra.mxu0 %v444
    %2631 = vmatprep.subr.mxu0 0.0
    %2632 = vmatpush1.msra.mxu0 %v441
    %2633 = vmatprep.subr.mxu0 0.0
    %2634 = vmatpush1.msra.mxu0 %v438
    %2635 = vmatprep.subr.mxu0 0.0
    %2636 = vmatpush1.msra.mxu0 %v435
    %2637 = vmatprep.subr.mxu0 0.0
    %2638 = vmatpush1.msra.mxu0 %v432
    %2639 = vmatprep.subr.mxu0 0.0
    %2640 = vmatpush1.msra.mxu0 %v429
    %2641 = vmatprep.subr.mxu0 0.0
    %2642 = vmatpush1.msra.mxu0 %v426
    %2643 = vmatprep.subr.mxu0 0.0
    %2644 = vmatpush1.msra.mxu0 %v423
    %2645 = vmatprep.subr.mxu0 0.0
    %2646 = vmatpush1.msra.mxu0 %v420
    %2647 = vmatprep.subr.mxu0 0.0
    %2648 = vmatpush1.msra.mxu0 %v417
    %2649 = vmatprep.subr.mxu0 0.0
    %2650 = vmatpush1.msra.mxu0 %v414
    %2651 = vmatprep.subr.mxu0 0.0
    %2652 = vmatpush1.msra.mxu0 %v411
    %2653 = vmatprep.subr.mxu0 0.0
    %2654 = vmatpush1.msra.mxu0 %v408
    %2655 = vmatprep.subr.mxu0 0.0
    %2656 = vmatpush1.msra.mxu0 %v405
    %2657 = vmatprep.subr.mxu0 0.0
    %2658 = vmatpush2.msra.mxu0 0.0
    %2659 = vmatprep.subr.mxu0 0.0
    %2660 = vmatpush2.msra.mxu0 0.0
    %2661 = vmatprep.subr.mxu0 0.0
    %2662 = vmatpush2.msra.mxu0 0.0
    %2663 = vmatprep.subr.mxu0 0.0
    %2664 = vmatpush2.msra.mxu0 0.0
    %2665 = vmatprep.subr.mxu0 0.0
    %2666 = vmatpush2.msra.mxu0 0.0
    %2667 = vmatprep.subr.mxu0 0.0
    %2668 = vmatpush2.msra.mxu0 0.0
    %2669 = vmatprep.subr.mxu0 0.0
    %2670 = vmatpush2.msra.mxu0 0.0
    %2671 = vmatprep.subr.mxu0 0.0
    %2672 = vmatpush2.msra.mxu0 0.0
    %2673 = vmatprep.subr.mxu0 0.0
    %2674 = vmatpush2.msra.mxu0 0.0
    %2675 = vmatprep.subr.mxu0 0.0
    %2676 = vmatpush2.msra.mxu0 0.0
    %2677 = vmatprep.subr.mxu0 0.0
    %2678 = vmatpush2.msra.mxu0 0.0
    %2679 = vmatprep.subr.mxu0 0.0
    %2680 = vmatpush2.msra.mxu0 0.0
    %2681 = vmatprep.subr.mxu0 0.0
    %2682 = vmatpush2.msra.mxu0 0.0
    %2683 = vmatprep.subr.mxu0 0.0
    %2684 = vmatpush2.msra.mxu0 0.0
    %2685 = vmatprep.subr.mxu0 0.0
    %2686 = vmatpush2.msra.mxu0 0.0
    %2687 = vmatprep.subr.mxu0 0.0
    %2688 = vmatpush2.msra.mxu0 0.0
    %2689 = vmatprep.mubr.f32.mxu0 0.0
    %2690 = vmatmul.mubr.f32.gmra.mxu0 %v2553
    %v2691 = vpop.f32.mrf.mxu0
    %v2692 = vadd.f32 %v464, %v2691
    %v2693 = vpop.f32.mrf.mxu0
    %2694 = vdwg.mxu0
    %2695 = vmatprep.subr.mxu0 %v514
    %2696 = vmatpush1.msra.mxu0 %v513
    %2697 = vmatprep.subr.mxu0 %v511
    %2698 = vmatpush1.msra.mxu0 %v510
    %2699 = vmatprep.subr.mxu0 %v508
    %2700 = vmatpush1.msra.mxu0 %v507
    %2701 = vmatprep.subr.mxu0 %v505
    %2702 = vmatpush1.msra.mxu0 %v504
    %2703 = vmatprep.subr.mxu0 %v502
    %2704 = vmatpush1.msra.mxu0 %v501
    %2705 = vmatprep.subr.mxu0 %v499
    %2706 = vmatpush1.msra.mxu0 %v498
    %2707 = vmatprep.subr.mxu0 %v496
    %2708 = vmatpush1.msra.mxu0 %v495
    %2709 = vmatprep.subr.mxu0 %v493
    %2710 = vmatpush1.msra.mxu0 %v492
    %2711 = vmatprep.subr.mxu0 %v490
    %2712 = vmatpush1.msra.mxu0 %v489
    %2713 = vmatprep.subr.mxu0 %v487
    %2714 = vmatpush1.msra.mxu0 %v486
    %2715 = vmatprep.subr.mxu0 %v484
    %2716 = vmatpush1.msra.mxu0 %v483
    %2717 = vmatprep.subr.mxu0 %v481
    %2718 = vmatpush1.msra.mxu0 %v480
    %2719 = vmatprep.subr.mxu0 %v478
    %2720 = vmatpush1.msra.mxu0 %v477
    %2721 = vmatprep.subr.mxu0 %v475
    %2722 = vmatpush1.msra.mxu0 %v474
    %2723 = vmatprep.subr.mxu0 %v472
    %2724 = vmatpush1.msra.mxu0 %v471
    %2725 = vmatprep.subr.mxu0 %v469
    %2726 = vmatpush1.msra.mxu0 %v468
    %2727 = vmatprep.subr.mxu0 0.0
    %2728 = vmatpush2.msra.mxu0 0.0
    %2729 = vmatprep.subr.mxu0 0.0
    %2730 = vmatpush2.msra.mxu0 0.0
    %2731 = vmatprep.subr.mxu0 0.0
    %2732 = vmatpush2.msra.mxu0 0.0
    %2733 = vmatprep.subr.mxu0 0.0
    %2734 = vmatpush2.msra.mxu0 0.0
    %2735 = vmatprep.subr.mxu0 0.0
    %2736 = vmatpush2.msra.mxu0 0.0
    %2737 = vmatprep.subr.mxu0 0.0
    %2738 = vmatpush2.msra.mxu0 0.0
    %2739 = vmatprep.subr.mxu0 0.0
    %2740 = vmatpush2.msra.mxu0 0.0
    %2741 = vmatprep.subr.mxu0 0.0
    %2742 = vmatpush2.msra.mxu0 0.0
    %2743 = vmatprep.subr.mxu0 0.0
    %2744 = vmatpush2.msra.mxu0 0.0
    %2745 = vmatprep.subr.mxu0 0.0
    %2746 = vmatpush2.msra.mxu0 0.0
    %2747 = vmatprep.subr.mxu0 0.0
    %2748 = vmatpush2.msra.mxu0 0.0
    %2749 = vmatprep.subr.mxu0 0.0
    %2750 = vmatpush2.msra.mxu0 0.0
    %2751 = vmatprep.subr.mxu0 0.0
    %2752 = vmatpush2.msra.mxu0 0.0
    %2753 = vmatprep.subr.mxu0 0.0
    %2754 = vmatpush2.msra.mxu0 0.0
    %2755 = vmatprep.subr.mxu0 0.0
    %2756 = vmatpush2.msra.mxu0 0.0
    %2757 = vmatprep.subr.mxu0 0.0
    %2758 = vmatpush2.msra.mxu0 0.0
    %2759 = vmatprep.mubr.f32.mxu0 0.0
    %2760 = vmatmul.mubr.f32.gmra.mxu0 %v2390
    %v2761 = vpop.f32.mrf.mxu0
    %v2762 = vadd.f32 0.0, %v2761
    %v2763 = vpop.f32.mrf.mxu0
    %v2764 = vadd.f32 0.0, %v2763
    %2765 = vdwg.mxu0
    %2766 = vmatprep.subr.mxu0 0.0
    %2767 = vmatpush1.msra.mxu0 %v515
    %2768 = vmatprep.subr.mxu0 0.0
    %2769 = vmatpush1.msra.mxu0 %v512
    %2770 = vmatprep.subr.mxu0 0.0
    %2771 = vmatpush1.msra.mxu0 %v509
    %2772 = vmatprep.subr.mxu0 0.0
    %2773 = vmatpush1.msra.mxu0 %v506
    %2774 = vmatprep.subr.mxu0 0.0
    %2775 = vmatpush1.msra.mxu0 %v503
    %2776 = vmatprep.subr.mxu0 0.0
    %2777 = vmatpush1.msra.mxu0 %v500
    %2778 = vmatprep.subr.mxu0 0.0
    %2779 = vmatpush1.msra.mxu0 %v497
    %2780 = vmatprep.subr.mxu0 0.0
    %2781 = vmatpush1.msra.mxu0 %v494
    %2782 = vmatprep.subr.mxu0 0.0
    %2783 = vmatpush1.msra.mxu0 %v491
    %2784 = vmatprep.subr.mxu0 0.0
    %2785 = vmatpush1.msra.mxu0 %v488
    %2786 = vmatprep.subr.mxu0 0.0
    %2787 = vmatpush1.msra.mxu0 %v485
    %2788 = vmatprep.subr.mxu0 0.0
    %2789 = vmatpush1.msra.mxu0 %v482
    %2790 = vmatprep.subr.mxu0 0.0
    %2791 = vmatpush1.msra.mxu0 %v479
    %2792 = vmatprep.subr.mxu0 0.0
    %2793 = vmatpush1.msra.mxu0 %v476
    %2794 = vmatprep.subr.mxu0 0.0
    %2795 = vmatpush1.msra.mxu0 %v473
    %2796 = vmatprep.subr.mxu0 0.0
    %2797 = vmatpush1.msra.mxu0 %v470
    %2798 = vmatprep.subr.mxu0 0.0
    %2799 = vmatpush2.msra.mxu0 0.0
    %2800 = vmatprep.subr.mxu0 0.0
    %2801 = vmatpush2.msra.mxu0 0.0
    %2802 = vmatprep.subr.mxu0 0.0
    %2803 = vmatpush2.msra.mxu0 0.0
    %2804 = vmatprep.subr.mxu0 0.0
    %2805 = vmatpush2.msra.mxu0 0.0
    %2806 = vmatprep.subr.mxu0 0.0
    %2807 = vmatpush2.msra.mxu0 0.0
    %2808 = vmatprep.subr.mxu0 0.0
    %2809 = vmatpush2.msra.mxu0 0.0
    %2810 = vmatprep.subr.mxu0 0.0
    %2811 = vmatpush2.msra.mxu0 0.0
    %2812 = vmatprep.subr.mxu0 0.0
    %2813 = vmatpush2.msra.mxu0 0.0
    %2814 = vmatprep.subr.mxu0 0.0
    %2815 = vmatpush2.msra.mxu0 0.0
    %2816 = vmatprep.subr.mxu0 0.0
    %2817 = vmatpush2.msra.mxu0 0.0
    %2818 = vmatprep.subr.mxu0 0.0
    %2819 = vmatpush2.msra.mxu0 0.0
    %2820 = vmatprep.subr.mxu0 0.0
    %2821 = vmatpush2.msra.mxu0 0.0
    %2822 = vmatprep.subr.mxu0 0.0
    %2823 = vmatpush2.msra.mxu0 0.0
    %2824 = vmatprep.subr.mxu0 0.0
    %2825 = vmatpush2.msra.mxu0 0.0
    %2826 = vmatprep.subr.mxu0 0.0
    %2827 = vmatpush2.msra.mxu0 0.0
    %2828 = vmatprep.subr.mxu0 0.0
    %2829 = vmatpush2.msra.mxu0 0.0
    %2830 = vmatprep.mubr.f32.mxu0 0.0
    %2831 = vmatmul.mubr.f32.gmra.mxu0 %v2390
    %v2832 = vpop.f32.mrf.mxu0
    %v2833 = vadd.f32 0.0, %v2832
    %v2834 = vpop.f32.mrf.mxu0
    %2835 = vdwg.mxu0
    %v2836 = vadd.f32 %v2621, %v2762
    %v2837 = vxor.u32 %v2836, 2147483648
    %v2838 = vmul.f32 %v2837, 1.442695
    %v2839 = vpow.pop %v2838
    %v2840 = vadd.f32 %v2839, 1.0
    %v2841 = vrcp.pop %v2840
    %v2842 = vmul.f32 1.0, %v2841
    %v2843 = vadd.f32 %v2623, %v2764
    %v2844 = vxor.u32 %v2843, 2147483648
    %v2845 = vmul.f32 %v2844, 1.442695
    %v2846 = vpow.pop %v2845
    %v2847 = vadd.f32 %v2846, 1.0
    %v2848 = vrcp.pop %v2847
    %v2849 = vmul.f32 1.0, %v2848
    %v2850 = vadd.f32 %v2833, %v521
    %v2851 = vmul.f32 %v2842, %v2850
    %v2852 = vadd.f32 %v2692, %v2851
    %v2853 = vtanh.pop %v2852
    %v2854 = vsub.f32 1.0, %v2849
    %v2855 = vmul.f32 %v2854, %v2853
    %v2856 = vmul.f32 %v2849, %v2390
    %v2857 = vadd.f32 %v2855, %v2856
    %2858 = vmatprep.subr.mxu0 %v394
    %2859 = vmatpush1.msra.mxu0 %v393
    %2860 = vmatprep.subr.mxu0 %v391
    %2861 = vmatpush1.msra.mxu0 %v390
    %2862 = vmatprep.subr.mxu0 %v388
    %2863 = vmatpush1.msra.mxu0 %v387
    %2864 = vmatprep.subr.mxu0 %v385
    %2865 = vmatpush1.msra.mxu0 %v384
    %2866 = vmatprep.subr.mxu0 %v382
    %2867 = vmatpush1.msra.mxu0 %v381
    %2868 = vmatprep.subr.mxu0 %v379
    %2869 = vmatpush1.msra.mxu0 %v378
    %2870 = vmatprep.subr.mxu0 %v376
    %2871 = vmatpush1.msra.mxu0 %v375
    %2872 = vmatprep.subr.mxu0 %v373
    %2873 = vmatpush1.msra.mxu0 %v372
    %2874 = vmatprep.subr.mxu0 %v370
    %2875 = vmatpush1.msra.mxu0 %v369
    %2876 = vmatprep.subr.mxu0 %v367
    %2877 = vmatpush1.msra.mxu0 %v366
    %2878 = vmatprep.subr.mxu0 %v364
    %2879 = vmatpush1.msra.mxu0 %v363
    %2880 = vmatprep.subr.mxu0 %v361
    %2881 = vmatpush1.msra.mxu0 %v360
    %2882 = vmatprep.subr.mxu0 %v358
    %2883 = vmatpush1.msra.mxu0 %v357
    %2884 = vmatprep.subr.mxu0 %v355
    %2885 = vmatpush1.msra.mxu0 %v354
    %2886 = vmatprep.subr.mxu0 %v352
    %2887 = vmatpush1.msra.mxu0 %v351
    %2888 = vmatprep.subr.mxu0 %v349
    %2889 = vmatpush1.msra.mxu0 %v348
    %2890 = vmatprep.subr.mxu0 0.0
    %2891 = vmatpush2.msra.mxu0 0.0
    %2892 = vmatprep.subr.mxu0 0.0
    %2893 = vmatpush2.msra.mxu0 0.0
    %2894 = vmatprep.subr.mxu0 0.0
    %2895 = vmatpush2.msra.mxu0 0.0
    %2896 = vmatprep.subr.mxu0 0.0
    %2897 = vmatpush2.msra.mxu0 0.0
    %2898 = vmatprep.subr.mxu0 0.0
    %2899 = vmatpush2.msra.mxu0 0.0
    %2900 = vmatprep.subr.mxu0 0.0
    %2901 = vmatpush2.msra.mxu0 0.0
    %2902 = vmatprep.subr.mxu0 0.0
    %2903 = vmatpush2.msra.mxu0 0.0
    %2904 = vmatprep.subr.mxu0 0.0
    %2905 = vmatpush2.msra.mxu0 0.0
    %2906 = vmatprep.subr.mxu0 0.0
    %2907 = vmatpush2.msra.mxu0 0.0
    %2908 = vmatprep.subr.mxu0 0.0
    %2909 = vmatpush2.msra.mxu0 0.0
    %2910 = vmatprep.subr.mxu0 0.0
    %2911 = vmatpush2.msra.mxu0 0.0
    %2912 = vmatprep.subr.mxu0 0.0
    %2913 = vmatpush2.msra.mxu0 0.0
    %2914 = vmatprep.subr.mxu0 0.0
    %2915 = vmatpush2.msra.mxu0 0.0
    %2916 = vmatprep.subr.mxu0 0.0
    %2917 = vmatpush2.msra.mxu0 0.0
    %2918 = vmatprep.subr.mxu0 0.0
    %2919 = vmatpush2.msra.mxu0 0.0
    %2920 = vmatprep.subr.mxu0 0.0
    %2921 = vmatpush2.msra.mxu0 0.0
    %2922 = vmatprep.mubr.f32.mxu0 0.0
    %2923 = vmatmul.mubr.f32.gmra.mxu0 %v2553
    %v2924 = vpop.f32.mrf.mxu0
    %v2925 = vadd.f32 0.0, %v2924
    %v2926 = vpop.f32.mrf.mxu0
    %v2927 = vadd.f32 0.0, %v2926
    %2928 = vdwg.mxu0
    %2929 = vmatprep.subr.mxu0 0.0
    %2930 = vmatpush1.msra.mxu0 %v395
    %2931 = vmatprep.subr.mxu0 0.0
    %2932 = vmatpush1.msra.mxu0 %v392
    %2933 = vmatprep.subr.mxu0 0.0
    %2934 = vmatpush1.msra.mxu0 %v389
    %2935 = vmatprep.subr.mxu0 0.0
    %2936 = vmatpush1.msra.mxu0 %v386
    %2937 = vmatprep.subr.mxu0 0.0
    %2938 = vmatpush1.msra.mxu0 %v383
    %2939 = vmatprep.subr.mxu0 0.0
    %2940 = vmatpush1.msra.mxu0 %v380
    %2941 = vmatprep.subr.mxu0 0.0
    %2942 = vmatpush1.msra.mxu0 %v377
    %2943 = vmatprep.subr.mxu0 0.0
    %2944 = vmatpush1.msra.mxu0 %v374
    %2945 = vmatprep.subr.mxu0 0.0
    %2946 = vmatpush1.msra.mxu0 %v371
    %2947 = vmatprep.subr.mxu0 0.0
    %2948 = vmatpush1.msra.mxu0 %v368
    %2949 = vmatprep.subr.mxu0 0.0
    %2950 = vmatpush1.msra.mxu0 %v365
    %2951 = vmatprep.subr.mxu0 0.0
    %2952 = vmatpush1.msra.mxu0 %v362
    %2953 = vmatprep.subr.mxu0 0.0
    %2954 = vmatpush1.msra.mxu0 %v359
    %2955 = vmatprep.subr.mxu0 0.0
    %2956 = vmatpush1.msra.mxu0 %v356
    %2957 = vmatprep.subr.mxu0 0.0
    %2958 = vmatpush1.msra.mxu0 %v353
    %2959 = vmatprep.subr.mxu0 0.0
    %2960 = vmatpush1.msra.mxu0 %v350
    %2961 = vmatprep.subr.mxu0 0.0
    %2962 = vmatpush2.msra.mxu0 0.0
    %2963 = vmatprep.subr.mxu0 0.0
    %2964 = vmatpush2.msra.mxu0 0.0
    %2965 = vmatprep.subr.mxu0 0.0
    %2966 = vmatpush2.msra.mxu0 0.0
    %2967 = vmatprep.subr.mxu0 0.0
    %2968 = vmatpush2.msra.mxu0 0.0
    %2969 = vmatprep.subr.mxu0 0.0
    %2970 = vmatpush2.msra.mxu0 0.0
    %2971 = vmatprep.subr.mxu0 0.0
    %2972 = vmatpush2.msra.mxu0 0.0
    %2973 = vmatprep.subr.mxu0 0.0
    %2974 = vmatpush2.msra.mxu0 0.0
    %2975 = vmatprep.subr.mxu0 0.0
    %2976 = vmatpush2.msra.mxu0 0.0
    %2977 = vmatprep.subr.mxu0 0.0
    %2978 = vmatpush2.msra.mxu0 0.0
    %2979 = vmatprep.subr.mxu0 0.0
    %2980 = vmatpush2.msra.mxu0 0.0
    %2981 = vmatprep.subr.mxu0 0.0
    %2982 = vmatpush2.msra.mxu0 0.0
    %2983 = vmatprep.subr.mxu0 0.0
    %2984 = vmatpush2.msra.mxu0 0.0
    %2985 = vmatprep.subr.mxu0 0.0
    %2986 = vmatpush2.msra.mxu0 0.0
    %2987 = vmatprep.subr.mxu0 0.0
    %2988 = vmatpush2.msra.mxu0 0.0
    %2989 = vmatprep.subr.mxu0 0.0
    %2990 = vmatpush2.msra.mxu0 0.0
    %2991 = vmatprep.subr.mxu0 0.0
    %2992 = vmatpush2.msra.mxu0 0.0
    %2993 = vmatprep.mubr.f32.mxu0 0.0
    %2994 = vmatmul.mubr.f32.gmra.mxu0 %v2553
    %v2995 = vpop.f32.mrf.mxu0
    %v2996 = vadd.f32 0.0, %v2995
    %v2997 = vpop.f32.mrf.mxu0
    %2998 = vdwg.mxu0
    %v2999 = vadd.f32 %v227, %v2925
    %v3000 = vxor.u32 %v2999, 2147483648
    %v3001 = vmul.f32 %v3000, 1.442695
    %v3002 = vpow.pop %v3001
    %v3003 = vadd.f32 %v3002, 1.0
    %v3004 = vrcp.pop %v3003
    %v3005 = vmul.f32 1.0, %v3004
    %v3006 = vadd.f32 %v229, %v2927
    %v3007 = vxor.u32 %v3006, 2147483648
    %v3008 = vmul.f32 %v3007, 1.442695
    %v3009 = vpow.pop %v3008
    %v3010 = vadd.f32 %v3009, 1.0
    %v3011 = vrcp.pop %v3010
    %v3012 = vmul.f32 1.0, %v3011
    %v3013 = vadd.f32 %v2996, %v401
    %v3014 = vmul.f32 %v3005, %v3013
    %v3015 = vadd.f32 %v335, %v3014
    %v3016 = vtanh.pop %v3015
    %v3017 = vsub.f32 1.0, %v3012
    %v3018 = vmul.f32 %v3017, %v3016
    %v3019 = vmul.f32 %v3012, %v2553
    %v3020 = vadd.f32 %v3018, %v3019
    %3021 = vmatprep.subr.mxu0 %v449
    %3022 = vmatpush1.msra.mxu0 %v448
    %3023 = vmatprep.subr.mxu0 %v446
    %3024 = vmatpush1.msra.mxu0 %v445
    %3025 = vmatprep.subr.mxu0 %v443
    %3026 = vmatpush1.msra.mxu0 %v442
    %3027 = vmatprep.subr.mxu0 %v440
    %3028 = vmatpush1.msra.mxu0 %v439
    %3029 = vmatprep.subr.mxu0 %v437
    %3030 = vmatpush1.msra.mxu0 %v436
    %3031 = vmatprep.subr.mxu0 %v434
    %3032 = vmatpush1.msra.mxu0 %v433
    %3033 = vmatprep.subr.mxu0 %v431
    %3034 = vmatpush1.msra.mxu0 %v430
    %3035 = vmatprep.subr.mxu0 %v428
    %3036 = vmatpush1.msra.mxu0 %v427
    %3037 = vmatprep.subr.mxu0 %v425
    %3038 = vmatpush1.msra.mxu0 %v424
    %3039 = vmatprep.subr.mxu0 %v422
    %3040 = vmatpush1.msra.mxu0 %v421
    %3041 = vmatprep.subr.mxu0 %v419
    %3042 = vmatpush1.msra.mxu0 %v418
    %3043 = vmatprep.subr.mxu0 %v416
    %3044 = vmatpush1.msra.mxu0 %v415
    %3045 = vmatprep.subr.mxu0 %v413
    %3046 = vmatpush1.msra.mxu0 %v412
    %3047 = vmatprep.subr.mxu0 %v410
    %3048 = vmatpush1.msra.mxu0 %v409
    %3049 = vmatprep.subr.mxu0 %v407
    %3050 = vmatpush1.msra.mxu0 %v406
    %3051 = vmatprep.subr.mxu0 %v404
    %3052 = vmatpush1.msra.mxu0 %v403
    %3053 = vmatprep.subr.mxu0 0.0
    %3054 = vmatpush2.msra.mxu0 0.0
    %3055 = vmatprep.subr.mxu0 0.0
    %3056 = vmatpush2.msra.mxu0 0.0
    %3057 = vmatprep.subr.mxu0 0.0
    %3058 = vmatpush2.msra.mxu0 0.0
    %3059 = vmatprep.subr.mxu0 0.0
    %3060 = vmatpush2.msra.mxu0 0.0
    %3061 = vmatprep.subr.mxu0 0.0
    %3062 = vmatpush2.msra.mxu0 0.0
    %3063 = vmatprep.subr.mxu0 0.0
    %3064 = vmatpush2.msra.mxu0 0.0
    %3065 = vmatprep.subr.mxu0 0.0
    %3066 = vmatpush2.msra.mxu0 0.0
    %3067 = vmatprep.subr.mxu0 0.0
    %3068 = vmatpush2.msra.mxu0 0.0
    %3069 = vmatprep.subr.mxu0 0.0
    %3070 = vmatpush2.msra.mxu0 0.0
    %3071 = vmatprep.subr.mxu0 0.0
    %3072 = vmatpush2.msra.mxu0 0.0
    %3073 = vmatprep.subr.mxu0 0.0
    %3074 = vmatpush2.msra.mxu0 0.0
    %3075 = vmatprep.subr.mxu0 0.0
    %3076 = vmatpush2.msra.mxu0 0.0
    %3077 = vmatprep.subr.mxu0 0.0
    %3078 = vmatpush2.msra.mxu0 0.0
    %3079 = vmatprep.subr.mxu0 0.0
    %3080 = vmatpush2.msra.mxu0 0.0
    %3081 = vmatprep.subr.mxu0 0.0
    %3082 = vmatpush2.msra.mxu0 0.0
    %3083 = vmatprep.subr.mxu0 0.0
    %3084 = vmatpush2.msra.mxu0 0.0
    %3085 = vmatprep.mubr.f32.mxu0 0.0
    %3086 = vmatmul.mubr.f32.gmra.mxu0 %v3020
    %v3087 = vpop.f32.mrf.mxu0
    %v3088 = vadd.f32 %v456, %v3087
    %v3089 = vpop.f32.mrf.mxu0
    %v3090 = vadd.f32 %v460, %v3089
    %3091 = vdwg.mxu0
    %3092 = vmatprep.subr.mxu0 0.0
    %3093 = vmatpush1.msra.mxu0 %v450
    %3094 = vmatprep.subr.mxu0 0.0
    %3095 = vmatpush1.msra.mxu0 %v447
    %3096 = vmatprep.subr.mxu0 0.0
    %3097 = vmatpush1.msra.mxu0 %v444
    %3098 = vmatprep.subr.mxu0 0.0
    %3099 = vmatpush1.msra.mxu0 %v441
    %3100 = vmatprep.subr.mxu0 0.0
    %3101 = vmatpush1.msra.mxu0 %v438
    %3102 = vmatprep.subr.mxu0 0.0
    %3103 = vmatpush1.msra.mxu0 %v435
    %3104 = vmatprep.subr.mxu0 0.0
    %3105 = vmatpush1.msra.mxu0 %v432
    %3106 = vmatprep.subr.mxu0 0.0
    %3107 = vmatpush1.msra.mxu0 %v429
    %3108 = vmatprep.subr.mxu0 0.0
    %3109 = vmatpush1.msra.mxu0 %v426
    %3110 = vmatprep.subr.mxu0 0.0
    %3111 = vmatpush1.msra.mxu0 %v423
    %3112 = vmatprep.subr.mxu0 0.0
    %3113 = vmatpush1.msra.mxu0 %v420
    %3114 = vmatprep.subr.mxu0 0.0
    %3115 = vmatpush1.msra.mxu0 %v417
    %3116 = vmatprep.subr.mxu0 0.0
    %3117 = vmatpush1.msra.mxu0 %v414
    %3118 = vmatprep.subr.mxu0 0.0
    %3119 = vmatpush1.msra.mxu0 %v411
    %3120 = vmatprep.subr.mxu0 0.0
    %3121 = vmatpush1.msra.mxu0 %v408
    %3122 = vmatprep.subr.mxu0 0.0
    %3123 = vmatpush1.msra.mxu0 %v405
    %3124 = vmatprep.subr.mxu0 0.0
    %3125 = vmatpush2.msra.mxu0 0.0
    %3126 = vmatprep.subr.mxu0 0.0
    %3127 = vmatpush2.msra.mxu0 0.0
    %3128 = vmatprep.subr.mxu0 0.0
    %3129 = vmatpush2.msra.mxu0 0.0
    %3130 = vmatprep.subr.mxu0 0.0
    %3131 = vmatpush2.msra.mxu0 0.0
    %3132 = vmatprep.subr.mxu0 0.0
    %3133 = vmatpush2.msra.mxu0 0.0
    %3134 = vmatprep.subr.mxu0 0.0
    %3135 = vmatpush2.msra.mxu0 0.0
    %3136 = vmatprep.subr.mxu0 0.0
    %3137 = vmatpush2.msra.mxu0 0.0
    %3138 = vmatprep.subr.mxu0 0.0
    %3139 = vmatpush2.msra.mxu0 0.0
    %3140 = vmatprep.subr.mxu0 0.0
    %3141 = vmatpush2.msra.mxu0 0.0
    %3142 = vmatprep.subr.mxu0 0.0
    %3143 = vmatpush2.msra.mxu0 0.0
    %3144 = vmatprep.subr.mxu0 0.0
    %3145 = vmatpush2.msra.mxu0 0.0
    %3146 = vmatprep.subr.mxu0 0.0
    %3147 = vmatpush2.msra.mxu0 0.0
    %3148 = vmatprep.subr.mxu0 0.0
    %3149 = vmatpush2.msra.mxu0 0.0
    %3150 = vmatprep.subr.mxu0 0.0
    %3151 = vmatpush2.msra.mxu0 0.0
    %3152 = vmatprep.subr.mxu0 0.0
    %3153 = vmatpush2.msra.mxu0 0.0
    %3154 = vmatprep.subr.mxu0 0.0
    %3155 = vmatpush2.msra.mxu0 0.0
    %3156 = vmatprep.mubr.f32.mxu0 0.0
    %3157 = vmatmul.mubr.f32.gmra.mxu0 %v3020
    %v3158 = vpop.f32.mrf.mxu0
    %v3159 = vadd.f32 %v464, %v3158
    %v3160 = vpop.f32.mrf.mxu0
    %3161 = vdwg.mxu0
    %3162 = vmatprep.subr.mxu0 %v514
    %3163 = vmatpush1.msra.mxu0 %v513
    %3164 = vmatprep.subr.mxu0 %v511
    %3165 = vmatpush1.msra.mxu0 %v510
    %3166 = vmatprep.subr.mxu0 %v508
    %3167 = vmatpush1.msra.mxu0 %v507
    %3168 = vmatprep.subr.mxu0 %v505
    %3169 = vmatpush1.msra.mxu0 %v504
    %3170 = vmatprep.subr.mxu0 %v502
    %3171 = vmatpush1.msra.mxu0 %v501
    %3172 = vmatprep.subr.mxu0 %v499
    %3173 = vmatpush1.msra.mxu0 %v498
    %3174 = vmatprep.subr.mxu0 %v496
    %3175 = vmatpush1.msra.mxu0 %v495
    %3176 = vmatprep.subr.mxu0 %v493
    %3177 = vmatpush1.msra.mxu0 %v492
    %3178 = vmatprep.subr.mxu0 %v490
    %3179 = vmatpush1.msra.mxu0 %v489
    %3180 = vmatprep.subr.mxu0 %v487
    %3181 = vmatpush1.msra.mxu0 %v486
    %3182 = vmatprep.subr.mxu0 %v484
    %3183 = vmatpush1.msra.mxu0 %v483
    %3184 = vmatprep.subr.mxu0 %v481
    %3185 = vmatpush1.msra.mxu0 %v480
    %3186 = vmatprep.subr.mxu0 %v478
    %3187 = vmatpush1.msra.mxu0 %v477
    %3188 = vmatprep.subr.mxu0 %v475
    %3189 = vmatpush1.msra.mxu0 %v474
    %3190 = vmatprep.subr.mxu0 %v472
    %3191 = vmatpush1.msra.mxu0 %v471
    %3192 = vmatprep.subr.mxu0 %v469
    %3193 = vmatpush1.msra.mxu0 %v468
    %3194 = vmatprep.subr.mxu0 0.0
    %3195 = vmatpush2.msra.mxu0 0.0
    %3196 = vmatprep.subr.mxu0 0.0
    %3197 = vmatpush2.msra.mxu0 0.0
    %3198 = vmatprep.subr.mxu0 0.0
    %3199 = vmatpush2.msra.mxu0 0.0
    %3200 = vmatprep.subr.mxu0 0.0
    %3201 = vmatpush2.msra.mxu0 0.0
    %3202 = vmatprep.subr.mxu0 0.0
    %3203 = vmatpush2.msra.mxu0 0.0
    %3204 = vmatprep.subr.mxu0 0.0
    %3205 = vmatpush2.msra.mxu0 0.0
    %3206 = vmatprep.subr.mxu0 0.0
    %3207 = vmatpush2.msra.mxu0 0.0
    %3208 = vmatprep.subr.mxu0 0.0
    %3209 = vmatpush2.msra.mxu0 0.0
    %3210 = vmatprep.subr.mxu0 0.0
    %3211 = vmatpush2.msra.mxu0 0.0
    %3212 = vmatprep.subr.mxu0 0.0
    %3213 = vmatpush2.msra.mxu0 0.0
    %3214 = vmatprep.subr.mxu0 0.0
    %3215 = vmatpush2.msra.mxu0 0.0
    %3216 = vmatprep.subr.mxu0 0.0
    %3217 = vmatpush2.msra.mxu0 0.0
    %3218 = vmatprep.subr.mxu0 0.0
    %3219 = vmatpush2.msra.mxu0 0.0
    %3220 = vmatprep.subr.mxu0 0.0
    %3221 = vmatpush2.msra.mxu0 0.0
    %3222 = vmatprep.subr.mxu0 0.0
    %3223 = vmatpush2.msra.mxu0 0.0
    %3224 = vmatprep.subr.mxu0 0.0
    %3225 = vmatpush2.msra.mxu0 0.0
    %3226 = vmatprep.mubr.f32.mxu0 0.0
    %3227 = vmatmul.mubr.f32.gmra.mxu0 %v2857
    %v3228 = vpop.f32.mrf.mxu0
    %v3229 = vadd.f32 0.0, %v3228
    %v3230 = vpop.f32.mrf.mxu0
    %v3231 = vadd.f32 0.0, %v3230
    %3232 = vdwg.mxu0
    %3233 = vmatprep.subr.mxu0 0.0
    %3234 = vmatpush1.msra.mxu0 %v515
    %3235 = vmatprep.subr.mxu0 0.0
    %3236 = vmatpush1.msra.mxu0 %v512
    %3237 = vmatprep.subr.mxu0 0.0
    %3238 = vmatpush1.msra.mxu0 %v509
    %3239 = vmatprep.subr.mxu0 0.0
    %3240 = vmatpush1.msra.mxu0 %v506
    %3241 = vmatprep.subr.mxu0 0.0
    %3242 = vmatpush1.msra.mxu0 %v503
    %3243 = vmatprep.subr.mxu0 0.0
    %3244 = vmatpush1.msra.mxu0 %v500
    %3245 = vmatprep.subr.mxu0 0.0
    %3246 = vmatpush1.msra.mxu0 %v497
    %3247 = vmatprep.subr.mxu0 0.0
    %3248 = vmatpush1.msra.mxu0 %v494
    %3249 = vmatprep.subr.mxu0 0.0
    %3250 = vmatpush1.msra.mxu0 %v491
    %3251 = vmatprep.subr.mxu0 0.0
    %3252 = vmatpush1.msra.mxu0 %v488
    %3253 = vmatprep.subr.mxu0 0.0
    %3254 = vmatpush1.msra.mxu0 %v485
    %3255 = vmatprep.subr.mxu0 0.0
    %3256 = vmatpush1.msra.mxu0 %v482
    %3257 = vmatprep.subr.mxu0 0.0
    %3258 = vmatpush1.msra.mxu0 %v479
    %3259 = vmatprep.subr.mxu0 0.0
    %3260 = vmatpush1.msra.mxu0 %v476
    %3261 = vmatprep.subr.mxu0 0.0
    %3262 = vmatpush1.msra.mxu0 %v473
    %3263 = vmatprep.subr.mxu0 0.0
    %3264 = vmatpush1.msra.mxu0 %v470
    %3265 = vmatprep.subr.mxu0 0.0
    %3266 = vmatpush2.msra.mxu0 0.0
    %3267 = vmatprep.subr.mxu0 0.0
    %3268 = vmatpush2.msra.mxu0 0.0
    %3269 = vmatprep.subr.mxu0 0.0
    %3270 = vmatpush2.msra.mxu0 0.0
    %3271 = vmatprep.subr.mxu0 0.0
    %3272 = vmatpush2.msra.mxu0 0.0
    %3273 = vmatprep.subr.mxu0 0.0
    %3274 = vmatpush2.msra.mxu0 0.0
    %3275 = vmatprep.subr.mxu0 0.0
    %3276 = vmatpush2.msra.mxu0 0.0
    %3277 = vmatprep.subr.mxu0 0.0
    %3278 = vmatpush2.msra.mxu0 0.0
    %3279 = vmatprep.subr.mxu0 0.0
    %3280 = vmatpush2.msra.mxu0 0.0
    %3281 = vmatprep.subr.mxu0 0.0
    %3282 = vmatpush2.msra.mxu0 0.0
    %3283 = vmatprep.subr.mxu0 0.0
    %3284 = vmatpush2.msra.mxu0 0.0
    %3285 = vmatprep.subr.mxu0 0.0
    %3286 = vmatpush2.msra.mxu0 0.0
    %3287 = vmatprep.subr.mxu0 0.0
    %3288 = vmatpush2.msra.mxu0 0.0
    %3289 = vmatprep.subr.mxu0 0.0
    %3290 = vmatpush2.msra.mxu0 0.0
    %3291 = vmatprep.subr.mxu0 0.0
    %3292 = vmatpush2.msra.mxu0 0.0
    %3293 = vmatprep.subr.mxu0 0.0
    %3294 = vmatpush2.msra.mxu0 0.0
    %3295 = vmatprep.subr.mxu0 0.0
    %3296 = vmatpush2.msra.mxu0 0.0
    %3297 = vmatprep.mubr.f32.mxu0 0.0
    %3298 = vmatmul.mubr.f32.gmra.mxu0 %v2857
    %v3299 = vpop.f32.mrf.mxu0
    %v3300 = vadd.f32 0.0, %v3299
    %v3301 = vpop.f32.mrf.mxu0
    %3302 = vdwg.mxu0
    %v3303 = vadd.f32 %v3088, %v3229
    %v3304 = vxor.u32 %v3303, 2147483648
    %v3305 = vmul.f32 %v3304, 1.442695
    %v3306 = vpow.pop %v3305
    %v3307 = vadd.f32 %v3306, 1.0
    %v3308 = vrcp.pop %v3307
    %v3309 = vmul.f32 1.0, %v3308
    %v3310 = vadd.f32 %v3090, %v3231
    %v3311 = vxor.u32 %v3310, 2147483648
    %v3312 = vmul.f32 %v3311, 1.442695
    %v3313 = vpow.pop %v3312
    %v3314 = vadd.f32 %v3313, 1.0
    %v3315 = vrcp.pop %v3314
    %v3316 = vmul.f32 1.0, %v3315
    %v3317 = vadd.f32 %v3300, %v521
    %v3318 = vmul.f32 %v3309, %v3317
    %v3319 = vadd.f32 %v3159, %v3318
    %v3320 = vtanh.pop %v3319
    %v3321 = vsub.f32 1.0, %v3316
    %v3322 = vmul.f32 %v3321, %v3320
    %v3323 = vmul.f32 %v3316, %v2857
    %v3324 = vadd.f32 %v3322, %v3323
    %3325 = vmatprep.subr.mxu0 %v394
    %3326 = vmatpush1.msra.mxu0 %v393
    %3327 = vmatprep.subr.mxu0 %v391
    %3328 = vmatpush1.msra.mxu0 %v390
    %3329 = vmatprep.subr.mxu0 %v388
    %3330 = vmatpush1.msra.mxu0 %v387
    %3331 = vmatprep.subr.mxu0 %v385
    %3332 = vmatpush1.msra.mxu0 %v384
    %3333 = vmatprep.subr.mxu0 %v382
    %3334 = vmatpush1.msra.mxu0 %v381
    %3335 = vmatprep.subr.mxu0 %v379
    %3336 = vmatpush1.msra.mxu0 %v378
    %3337 = vmatprep.subr.mxu0 %v376
    %3338 = vmatpush1.msra.mxu0 %v375
    %3339 = vmatprep.subr.mxu0 %v373
    %3340 = vmatpush1.msra.mxu0 %v372
    %3341 = vmatprep.subr.mxu0 %v370
    %3342 = vmatpush1.msra.mxu0 %v369
    %3343 = vmatprep.subr.mxu0 %v367
    %3344 = vmatpush1.msra.mxu0 %v366
    %3345 = vmatprep.subr.mxu0 %v364
    %3346 = vmatpush1.msra.mxu0 %v363
    %3347 = vmatprep.subr.mxu0 %v361
    %3348 = vmatpush1.msra.mxu0 %v360
    %3349 = vmatprep.subr.mxu0 %v358
    %3350 = vmatpush1.msra.mxu0 %v357
    %3351 = vmatprep.subr.mxu0 %v355
    %3352 = vmatpush1.msra.mxu0 %v354
    %3353 = vmatprep.subr.mxu0 %v352
    %3354 = vmatpush1.msra.mxu0 %v351
    %3355 = vmatprep.subr.mxu0 %v349
    %3356 = vmatpush1.msra.mxu0 %v348
    %3357 = vmatprep.subr.mxu0 0.0
    %3358 = vmatpush2.msra.mxu0 0.0
    %3359 = vmatprep.subr.mxu0 0.0
    %3360 = vmatpush2.msra.mxu0 0.0
    %3361 = vmatprep.subr.mxu0 0.0
    %3362 = vmatpush2.msra.mxu0 0.0
    %3363 = vmatprep.subr.mxu0 0.0
    %3364 = vmatpush2.msra.mxu0 0.0
    %3365 = vmatprep.subr.mxu0 0.0
    %3366 = vmatpush2.msra.mxu0 0.0
    %3367 = vmatprep.subr.mxu0 0.0
    %3368 = vmatpush2.msra.mxu0 0.0
    %3369 = vmatprep.subr.mxu0 0.0
    %3370 = vmatpush2.msra.mxu0 0.0
    %3371 = vmatprep.subr.mxu0 0.0
    %3372 = vmatpush2.msra.mxu0 0.0
    %3373 = vmatprep.subr.mxu0 0.0
    %3374 = vmatpush2.msra.mxu0 0.0
    %3375 = vmatprep.subr.mxu0 0.0
    %3376 = vmatpush2.msra.mxu0 0.0
    %3377 = vmatprep.subr.mxu0 0.0
    %3378 = vmatpush2.msra.mxu0 0.0
    %3379 = vmatprep.subr.mxu0 0.0
    %3380 = vmatpush2.msra.mxu0 0.0
    %3381 = vmatprep.subr.mxu0 0.0
    %3382 = vmatpush2.msra.mxu0 0.0
    %3383 = vmatprep.subr.mxu0 0.0
    %3384 = vmatpush2.msra.mxu0 0.0
    %3385 = vmatprep.subr.mxu0 0.0
    %3386 = vmatpush2.msra.mxu0 0.0
    %3387 = vmatprep.subr.mxu0 0.0
    %3388 = vmatpush2.msra.mxu0 0.0
    %3389 = vmatprep.mubr.f32.mxu0 0.0
    %3390 = vmatmul.mubr.f32.gmra.mxu0 %v3020
    %v3391 = vpop.f32.mrf.mxu0
    %v3392 = vadd.f32 0.0, %v3391
    %v3393 = vpop.f32.mrf.mxu0
    %v3394 = vadd.f32 0.0, %v3393
    %3395 = vdwg.mxu0
    %3396 = vmatprep.subr.mxu0 0.0
    %3397 = vmatpush1.msra.mxu0 %v395
    %3398 = vmatprep.subr.mxu0 0.0
    %3399 = vmatpush1.msra.mxu0 %v392
    %3400 = vmatprep.subr.mxu0 0.0
    %3401 = vmatpush1.msra.mxu0 %v389
    %3402 = vmatprep.subr.mxu0 0.0
    %3403 = vmatpush1.msra.mxu0 %v386
    %3404 = vmatprep.subr.mxu0 0.0
    %3405 = vmatpush1.msra.mxu0 %v383
    %3406 = vmatprep.subr.mxu0 0.0
    %3407 = vmatpush1.msra.mxu0 %v380
    %3408 = vmatprep.subr.mxu0 0.0
    %3409 = vmatpush1.msra.mxu0 %v377
    %3410 = vmatprep.subr.mxu0 0.0
    %3411 = vmatpush1.msra.mxu0 %v374
    %3412 = vmatprep.subr.mxu0 0.0
    %3413 = vmatpush1.msra.mxu0 %v371
    %3414 = vmatprep.subr.mxu0 0.0
    %3415 = vmatpush1.msra.mxu0 %v368
    %3416 = vmatprep.subr.mxu0 0.0
    %3417 = vmatpush1.msra.mxu0 %v365
    %3418 = vmatprep.subr.mxu0 0.0
    %3419 = vmatpush1.msra.mxu0 %v362
    %3420 = vmatprep.subr.mxu0 0.0
    %3421 = vmatpush1.msra.mxu0 %v359
    %3422 = vmatprep.subr.mxu0 0.0
    %3423 = vmatpush1.msra.mxu0 %v356
    %3424 = vmatprep.subr.mxu0 0.0
    %3425 = vmatpush1.msra.mxu0 %v353
    %3426 = vmatprep.subr.mxu0 0.0
    %3427 = vmatpush1.msra.mxu0 %v350
    %3428 = vmatprep.subr.mxu0 0.0
    %3429 = vmatpush2.msra.mxu0 0.0
    %3430 = vmatprep.subr.mxu0 0.0
    %3431 = vmatpush2.msra.mxu0 0.0
    %3432 = vmatprep.subr.mxu0 0.0
    %3433 = vmatpush2.msra.mxu0 0.0
    %3434 = vmatprep.subr.mxu0 0.0
    %3435 = vmatpush2.msra.mxu0 0.0
    %3436 = vmatprep.subr.mxu0 0.0
    %3437 = vmatpush2.msra.mxu0 0.0
    %3438 = vmatprep.subr.mxu0 0.0
    %3439 = vmatpush2.msra.mxu0 0.0
    %3440 = vmatprep.subr.mxu0 0.0
    %3441 = vmatpush2.msra.mxu0 0.0
    %3442 = vmatprep.subr.mxu0 0.0
    %3443 = vmatpush2.msra.mxu0 0.0
    %3444 = vmatprep.subr.mxu0 0.0
    %3445 = vmatpush2.msra.mxu0 0.0
    %3446 = vmatprep.subr.mxu0 0.0
    %3447 = vmatpush2.msra.mxu0 0.0
    %3448 = vmatprep.subr.mxu0 0.0
    %3449 = vmatpush2.msra.mxu0 0.0
    %3450 = vmatprep.subr.mxu0 0.0
    %3451 = vmatpush2.msra.mxu0 0.0
    %3452 = vmatprep.subr.mxu0 0.0
    %3453 = vmatpush2.msra.mxu0 0.0
    %3454 = vmatprep.subr.mxu0 0.0
    %3455 = vmatpush2.msra.mxu0 0.0
    %3456 = vmatprep.subr.mxu0 0.0
    %3457 = vmatpush2.msra.mxu0 0.0
    %3458 = vmatprep.subr.mxu0 0.0
    %3459 = vmatpush2.msra.mxu0 0.0
    %3460 = vmatprep.mubr.f32.mxu0 0.0
    %3461 = vmatmul.mubr.f32.gmra.mxu0 %v3020
    %v3462 = vpop.f32.mrf.mxu0
    %v3463 = vadd.f32 0.0, %v3462
    %v3464 = vpop.f32.mrf.mxu0
    %3465 = vdwg.mxu0
    %v3466 = vadd.f32 %v233, %v3392
    %v3467 = vxor.u32 %v3466, 2147483648
    %v3468 = vmul.f32 %v3467, 1.442695
    %v3469 = vpow.pop %v3468
    %v3470 = vadd.f32 %v3469, 1.0
    %v3471 = vrcp.pop %v3470
    %v3472 = vmul.f32 1.0, %v3471
    %v3473 = vadd.f32 %v235, %v3394
    %v3474 = vxor.u32 %v3473, 2147483648
    %v3475 = vmul.f32 %v3474, 1.442695
    %v3476 = vpow.pop %v3475
    %v3477 = vadd.f32 %v3476, 1.0
    %v3478 = vrcp.pop %v3477
    %v3479 = vmul.f32 1.0, %v3478
    %v3480 = vadd.f32 %v3463, %v401
    %v3481 = vmul.f32 %v3472, %v3480
    %v3482 = vadd.f32 %v340, %v3481
    %v3483 = vtanh.pop %v3482
    %v3484 = vsub.f32 1.0, %v3479
    %v3485 = vmul.f32 %v3484, %v3483
    %v3486 = vmul.f32 %v3479, %v3020
    %v3487 = vadd.f32 %v3485, %v3486
    %3488 = vmatprep.subr.mxu0 %v449
    %3489 = vmatpush1.msra.mxu0 %v448
    %3490 = vmatprep.subr.mxu0 %v446
    %3491 = vmatpush1.msra.mxu0 %v445
    %3492 = vmatprep.subr.mxu0 %v443
    %3493 = vmatpush1.msra.mxu0 %v442
    %3494 = vmatprep.subr.mxu0 %v440
    %3495 = vmatpush1.msra.mxu0 %v439
    %3496 = vmatprep.subr.mxu0 %v437
    %3497 = vmatpush1.msra.mxu0 %v436
    %3498 = vmatprep.subr.mxu0 %v434
    %3499 = vmatpush1.msra.mxu0 %v433
    %3500 = vmatprep.subr.mxu0 %v431
    %3501 = vmatpush1.msra.mxu0 %v430
    %3502 = vmatprep.subr.mxu0 %v428
    %3503 = vmatpush1.msra.mxu0 %v427
    %3504 = vmatprep.subr.mxu0 %v425
    %3505 = vmatpush1.msra.mxu0 %v424
    %3506 = vmatprep.subr.mxu0 %v422
    %3507 = vmatpush1.msra.mxu0 %v421
    %3508 = vmatprep.subr.mxu0 %v419
    %3509 = vmatpush1.msra.mxu0 %v418
    %3510 = vmatprep.subr.mxu0 %v416
    %3511 = vmatpush1.msra.mxu0 %v415
    %3512 = vmatprep.subr.mxu0 %v413
    %3513 = vmatpush1.msra.mxu0 %v412
    %3514 = vmatprep.subr.mxu0 %v410
    %3515 = vmatpush1.msra.mxu0 %v409
    %3516 = vmatprep.subr.mxu0 %v407
    %3517 = vmatpush1.msra.mxu0 %v406
    %3518 = vmatprep.subr.mxu0 %v404
    %3519 = vmatpush1.msra.mxu0 %v403
    %3520 = vmatprep.subr.mxu0 0.0
    %3521 = vmatpush2.msra.mxu0 0.0
    %3522 = vmatprep.subr.mxu0 0.0
    %3523 = vmatpush2.msra.mxu0 0.0
    %3524 = vmatprep.subr.mxu0 0.0
    %3525 = vmatpush2.msra.mxu0 0.0
    %3526 = vmatprep.subr.mxu0 0.0
    %3527 = vmatpush2.msra.mxu0 0.0
    %3528 = vmatprep.subr.mxu0 0.0
    %3529 = vmatpush2.msra.mxu0 0.0
    %3530 = vmatprep.subr.mxu0 0.0
    %3531 = vmatpush2.msra.mxu0 0.0
    %3532 = vmatprep.subr.mxu0 0.0
    %3533 = vmatpush2.msra.mxu0 0.0
    %3534 = vmatprep.subr.mxu0 0.0
    %3535 = vmatpush2.msra.mxu0 0.0
    %3536 = vmatprep.subr.mxu0 0.0
    %3537 = vmatpush2.msra.mxu0 0.0
    %3538 = vmatprep.subr.mxu0 0.0
    %3539 = vmatpush2.msra.mxu0 0.0
    %3540 = vmatprep.subr.mxu0 0.0
    %3541 = vmatpush2.msra.mxu0 0.0
    %3542 = vmatprep.subr.mxu0 0.0
    %3543 = vmatpush2.msra.mxu0 0.0
    %3544 = vmatprep.subr.mxu0 0.0
    %3545 = vmatpush2.msra.mxu0 0.0
    %3546 = vmatprep.subr.mxu0 0.0
    %3547 = vmatpush2.msra.mxu0 0.0
    %3548 = vmatprep.subr.mxu0 0.0
    %3549 = vmatpush2.msra.mxu0 0.0
    %3550 = vmatprep.subr.mxu0 0.0
    %3551 = vmatpush2.msra.mxu0 0.0
    %3552 = vmatprep.mubr.f32.mxu0 0.0
    %3553 = vmatmul.mubr.f32.gmra.mxu0 %v3487
    %v3554 = vpop.f32.mrf.mxu0
    %v3555 = vadd.f32 %v456, %v3554
    %v3556 = vpop.f32.mrf.mxu0
    %v3557 = vadd.f32 %v460, %v3556
    %3558 = vdwg.mxu0
    %3559 = vmatprep.subr.mxu0 0.0
    %3560 = vmatpush1.msra.mxu0 %v450
    %3561 = vmatprep.subr.mxu0 0.0
    %3562 = vmatpush1.msra.mxu0 %v447
    %3563 = vmatprep.subr.mxu0 0.0
    %3564 = vmatpush1.msra.mxu0 %v444
    %3565 = vmatprep.subr.mxu0 0.0
    %3566 = vmatpush1.msra.mxu0 %v441
    %3567 = vmatprep.subr.mxu0 0.0
    %3568 = vmatpush1.msra.mxu0 %v438
    %3569 = vmatprep.subr.mxu0 0.0
    %3570 = vmatpush1.msra.mxu0 %v435
    %3571 = vmatprep.subr.mxu0 0.0
    %3572 = vmatpush1.msra.mxu0 %v432
    %3573 = vmatprep.subr.mxu0 0.0
    %3574 = vmatpush1.msra.mxu0 %v429
    %3575 = vmatprep.subr.mxu0 0.0
    %3576 = vmatpush1.msra.mxu0 %v426
    %3577 = vmatprep.subr.mxu0 0.0
    %3578 = vmatpush1.msra.mxu0 %v423
    %3579 = vmatprep.subr.mxu0 0.0
    %3580 = vmatpush1.msra.mxu0 %v420
    %3581 = vmatprep.subr.mxu0 0.0
    %3582 = vmatpush1.msra.mxu0 %v417
    %3583 = vmatprep.subr.mxu0 0.0
    %3584 = vmatpush1.msra.mxu0 %v414
    %3585 = vmatprep.subr.mxu0 0.0
    %3586 = vmatpush1.msra.mxu0 %v411
    %3587 = vmatprep.subr.mxu0 0.0
    %3588 = vmatpush1.msra.mxu0 %v408
    %3589 = vmatprep.subr.mxu0 0.0
    %3590 = vmatpush1.msra.mxu0 %v405
    %3591 = vmatprep.subr.mxu0 0.0
    %3592 = vmatpush2.msra.mxu0 0.0
    %3593 = vmatprep.subr.mxu0 0.0
    %3594 = vmatpush2.msra.mxu0 0.0
    %3595 = vmatprep.subr.mxu0 0.0
    %3596 = vmatpush2.msra.mxu0 0.0
    %3597 = vmatprep.subr.mxu0 0.0
    %3598 = vmatpush2.msra.mxu0 0.0
    %3599 = vmatprep.subr.mxu0 0.0
    %3600 = vmatpush2.msra.mxu0 0.0
    %3601 = vmatprep.subr.mxu0 0.0
    %3602 = vmatpush2.msra.mxu0 0.0
    %3603 = vmatprep.subr.mxu0 0.0
    %3604 = vmatpush2.msra.mxu0 0.0
    %3605 = vmatprep.subr.mxu0 0.0
    %3606 = vmatpush2.msra.mxu0 0.0
    %3607 = vmatprep.subr.mxu0 0.0
    %3608 = vmatpush2.msra.mxu0 0.0
    %3609 = vmatprep.subr.mxu0 0.0
    %3610 = vmatpush2.msra.mxu0 0.0
    %3611 = vmatprep.subr.mxu0 0.0
    %3612 = vmatpush2.msra.mxu0 0.0
    %3613 = vmatprep.subr.mxu0 0.0
    %3614 = vmatpush2.msra.mxu0 0.0
    %3615 = vmatprep.subr.mxu0 0.0
    %3616 = vmatpush2.msra.mxu0 0.0
    %3617 = vmatprep.subr.mxu0 0.0
    %3618 = vmatpush2.msra.mxu0 0.0
    %3619 = vmatprep.subr.mxu0 0.0
    %3620 = vmatpush2.msra.mxu0 0.0
    %3621 = vmatprep.subr.mxu0 0.0
    %3622 = vmatpush2.msra.mxu0 0.0
    %3623 = vmatprep.mubr.f32.mxu0 0.0
    %3624 = vmatmul.mubr.f32.gmra.mxu0 %v3487
    %v3625 = vpop.f32.mrf.mxu0
    %v3626 = vadd.f32 %v464, %v3625
    %v3627 = vpop.f32.mrf.mxu0
    %3628 = vdwg.mxu0
    %3629 = vmatprep.subr.mxu0 %v514
    %3630 = vmatpush1.msra.mxu0 %v513
    %3631 = vmatprep.subr.mxu0 %v511
    %3632 = vmatpush1.msra.mxu0 %v510
    %3633 = vmatprep.subr.mxu0 %v508
    %3634 = vmatpush1.msra.mxu0 %v507
    %3635 = vmatprep.subr.mxu0 %v505
    %3636 = vmatpush1.msra.mxu0 %v504
    %3637 = vmatprep.subr.mxu0 %v502
    %3638 = vmatpush1.msra.mxu0 %v501
    %3639 = vmatprep.subr.mxu0 %v499
    %3640 = vmatpush1.msra.mxu0 %v498
    %3641 = vmatprep.subr.mxu0 %v496
    %3642 = vmatpush1.msra.mxu0 %v495
    %3643 = vmatprep.subr.mxu0 %v493
    %3644 = vmatpush1.msra.mxu0 %v492
    %3645 = vmatprep.subr.mxu0 %v490
    %3646 = vmatpush1.msra.mxu0 %v489
    %3647 = vmatprep.subr.mxu0 %v487
    %3648 = vmatpush1.msra.mxu0 %v486
    %3649 = vmatprep.subr.mxu0 %v484
    %3650 = vmatpush1.msra.mxu0 %v483
    %3651 = vmatprep.subr.mxu0 %v481
    %3652 = vmatpush1.msra.mxu0 %v480
    %3653 = vmatprep.subr.mxu0 %v478
    %3654 = vmatpush1.msra.mxu0 %v477
    %3655 = vmatprep.subr.mxu0 %v475
    %3656 = vmatpush1.msra.mxu0 %v474
    %3657 = vmatprep.subr.mxu0 %v472
    %3658 = vmatpush1.msra.mxu0 %v471
    %3659 = vmatprep.subr.mxu0 %v469
    %3660 = vmatpush1.msra.mxu0 %v468
    %3661 = vmatprep.subr.mxu0 0.0
    %3662 = vmatpush2.msra.mxu0 0.0
    %3663 = vmatprep.subr.mxu0 0.0
    %3664 = vmatpush2.msra.mxu0 0.0
    %3665 = vmatprep.subr.mxu0 0.0
    %3666 = vmatpush2.msra.mxu0 0.0
    %3667 = vmatprep.subr.mxu0 0.0
    %3668 = vmatpush2.msra.mxu0 0.0
    %3669 = vmatprep.subr.mxu0 0.0
    %3670 = vmatpush2.msra.mxu0 0.0
    %3671 = vmatprep.subr.mxu0 0.0
    %3672 = vmatpush2.msra.mxu0 0.0
    %3673 = vmatprep.subr.mxu0 0.0
    %3674 = vmatpush2.msra.mxu0 0.0
    %3675 = vmatprep.subr.mxu0 0.0
    %3676 = vmatpush2.msra.mxu0 0.0
    %3677 = vmatprep.subr.mxu0 0.0
    %3678 = vmatpush2.msra.mxu0 0.0
    %3679 = vmatprep.subr.mxu0 0.0
    %3680 = vmatpush2.msra.mxu0 0.0
    %3681 = vmatprep.subr.mxu0 0.0
    %3682 = vmatpush2.msra.mxu0 0.0
    %3683 = vmatprep.subr.mxu0 0.0
    %3684 = vmatpush2.msra.mxu0 0.0
    %3685 = vmatprep.subr.mxu0 0.0
    %3686 = vmatpush2.msra.mxu0 0.0
    %3687 = vmatprep.subr.mxu0 0.0
    %3688 = vmatpush2.msra.mxu0 0.0
    %3689 = vmatprep.subr.mxu0 0.0
    %3690 = vmatpush2.msra.mxu0 0.0
    %3691 = vmatprep.subr.mxu0 0.0
    %3692 = vmatpush2.msra.mxu0 0.0
    %3693 = vmatprep.mubr.f32.mxu0 0.0
    %3694 = vmatmul.mubr.f32.gmra.mxu0 %v3324
    %v3695 = vpop.f32.mrf.mxu0
    %v3696 = vadd.f32 0.0, %v3695
    %v3697 = vpop.f32.mrf.mxu0
    %v3698 = vadd.f32 0.0, %v3697
    %3699 = vdwg.mxu0
    %3700 = vmatprep.subr.mxu0 0.0
    %3701 = vmatpush1.msra.mxu0 %v515
    %3702 = vmatprep.subr.mxu0 0.0
    %3703 = vmatpush1.msra.mxu0 %v512
    %3704 = vmatprep.subr.mxu0 0.0
    %3705 = vmatpush1.msra.mxu0 %v509
    %3706 = vmatprep.subr.mxu0 0.0
    %3707 = vmatpush1.msra.mxu0 %v506
    %3708 = vmatprep.subr.mxu0 0.0
    %3709 = vmatpush1.msra.mxu0 %v503
    %3710 = vmatprep.subr.mxu0 0.0
    %3711 = vmatpush1.msra.mxu0 %v500
    %3712 = vmatprep.subr.mxu0 0.0
    %3713 = vmatpush1.msra.mxu0 %v497
    %3714 = vmatprep.subr.mxu0 0.0
    %3715 = vmatpush1.msra.mxu0 %v494
    %3716 = vmatprep.subr.mxu0 0.0
    %3717 = vmatpush1.msra.mxu0 %v491
    %3718 = vmatprep.subr.mxu0 0.0
    %3719 = vmatpush1.msra.mxu0 %v488
    %3720 = vmatprep.subr.mxu0 0.0
    %3721 = vmatpush1.msra.mxu0 %v485
    %3722 = vmatprep.subr.mxu0 0.0
    %3723 = vmatpush1.msra.mxu0 %v482
    %3724 = vmatprep.subr.mxu0 0.0
    %3725 = vmatpush1.msra.mxu0 %v479
    %3726 = vmatprep.subr.mxu0 0.0
    %3727 = vmatpush1.msra.mxu0 %v476
    %3728 = vmatprep.subr.mxu0 0.0
    %3729 = vmatpush1.msra.mxu0 %v473
    %3730 = vmatprep.subr.mxu0 0.0
    %3731 = vmatpush1.msra.mxu0 %v470
    %3732 = vmatprep.subr.mxu0 0.0
    %3733 = vmatpush2.msra.mxu0 0.0
    %3734 = vmatprep.subr.mxu0 0.0
    %3735 = vmatpush2.msra.mxu0 0.0
    %3736 = vmatprep.subr.mxu0 0.0
    %3737 = vmatpush2.msra.mxu0 0.0
    %3738 = vmatprep.subr.mxu0 0.0
    %3739 = vmatpush2.msra.mxu0 0.0
    %3740 = vmatprep.subr.mxu0 0.0
    %3741 = vmatpush2.msra.mxu0 0.0
    %3742 = vmatprep.subr.mxu0 0.0
    %3743 = vmatpush2.msra.mxu0 0.0
    %3744 = vmatprep.subr.mxu0 0.0
    %3745 = vmatpush2.msra.mxu0 0.0
    %3746 = vmatprep.subr.mxu0 0.0
    %3747 = vmatpush2.msra.mxu0 0.0
    %3748 = vmatprep.subr.mxu0 0.0
    %3749 = vmatpush2.msra.mxu0 0.0
    %3750 = vmatprep.subr.mxu0 0.0
    %3751 = vmatpush2.msra.mxu0 0.0
    %3752 = vmatprep.subr.mxu0 0.0
    %3753 = vmatpush2.msra.mxu0 0.0
    %3754 = vmatprep.subr.mxu0 0.0
    %3755 = vmatpush2.msra.mxu0 0.0
    %3756 = vmatprep.subr.mxu0 0.0
    %3757 = vmatpush2.msra.mxu0 0.0
    %3758 = vmatprep.subr.mxu0 0.0
    %3759 = vmatpush2.msra.mxu0 0.0
    %3760 = vmatprep.subr.mxu0 0.0
    %3761 = vmatpush2.msra.mxu0 0.0
    %3762 = vmatprep.subr.mxu0 0.0
    %3763 = vmatpush2.msra.mxu0 0.0
    %3764 = vmatprep.mubr.f32.mxu0 0.0
    %3765 = vmatmul.mubr.f32.gmra.mxu0 %v3324
    %v3766 = vpop.f32.mrf.mxu0
    %v3767 = vadd.f32 0.0, %v3766
    %v3768 = vpop.f32.mrf.mxu0
    %3769 = vdwg.mxu0
    %v3770 = vadd.f32 %v3555, %v3696
    %v3771 = vxor.u32 %v3770, 2147483648
    %v3772 = vmul.f32 %v3771, 1.442695
    %v3773 = vpow.pop %v3772
    %v3774 = vadd.f32 %v3773, 1.0
    %v3775 = vrcp.pop %v3774
    %v3776 = vmul.f32 1.0, %v3775
    %v3777 = vadd.f32 %v3557, %v3698
    %v3778 = vxor.u32 %v3777, 2147483648
    %v3779 = vmul.f32 %v3778, 1.442695
    %v3780 = vpow.pop %v3779
    %v3781 = vadd.f32 %v3780, 1.0
    %v3782 = vrcp.pop %v3781
    %v3783 = vmul.f32 1.0, %v3782
    %v3784 = vadd.f32 %v3767, %v521
    %v3785 = vmul.f32 %v3776, %v3784
    %v3786 = vadd.f32 %v3626, %v3785
    %v3787 = vtanh.pop %v3786
    %v3788 = vsub.f32 1.0, %v3783
    %v3789 = vmul.f32 %v3788, %v3787
    %v3790 = vmul.f32 %v3783, %v3324
    %v3791 = vadd.f32 %v3789, %v3790
    %3792 = vmatprep.subr.mxu0 %v394
    %3793 = vmatpush1.msra.mxu0 %v393
    %3794 = vmatprep.subr.mxu0 %v391
    %3795 = vmatpush1.msra.mxu0 %v390
    %3796 = vmatprep.subr.mxu0 %v388
    %3797 = vmatpush1.msra.mxu0 %v387
    %3798 = vmatprep.subr.mxu0 %v385
    %3799 = vmatpush1.msra.mxu0 %v384
    %3800 = vmatprep.subr.mxu0 %v382
    %3801 = vmatpush1.msra.mxu0 %v381
    %3802 = vmatprep.subr.mxu0 %v379
    %3803 = vmatpush1.msra.mxu0 %v378
    %3804 = vmatprep.subr.mxu0 %v376
    %3805 = vmatpush1.msra.mxu0 %v375
    %3806 = vmatprep.subr.mxu0 %v373
    %3807 = vmatpush1.msra.mxu0 %v372
    %3808 = vmatprep.subr.mxu0 %v370
    %3809 = vmatpush1.msra.mxu0 %v369
    %3810 = vmatprep.subr.mxu0 %v367
    %3811 = vmatpush1.msra.mxu0 %v366
    %3812 = vmatprep.subr.mxu0 %v364
    %3813 = vmatpush1.msra.mxu0 %v363
    %3814 = vmatprep.subr.mxu0 %v361
    %3815 = vmatpush1.msra.mxu0 %v360
    %3816 = vmatprep.subr.mxu0 %v358
    %3817 = vmatpush1.msra.mxu0 %v357
    %3818 = vmatprep.subr.mxu0 %v355
    %3819 = vmatpush1.msra.mxu0 %v354
    %3820 = vmatprep.subr.mxu0 %v352
    %3821 = vmatpush1.msra.mxu0 %v351
    %3822 = vmatprep.subr.mxu0 %v349
    %3823 = vmatpush1.msra.mxu0 %v348
    %3824 = vmatprep.subr.mxu0 0.0
    %3825 = vmatpush2.msra.mxu0 0.0
    %3826 = vmatprep.subr.mxu0 0.0
    %3827 = vmatpush2.msra.mxu0 0.0
    %3828 = vmatprep.subr.mxu0 0.0
    %3829 = vmatpush2.msra.mxu0 0.0
    %3830 = vmatprep.subr.mxu0 0.0
    %3831 = vmatpush2.msra.mxu0 0.0
    %3832 = vmatprep.subr.mxu0 0.0
    %3833 = vmatpush2.msra.mxu0 0.0
    %3834 = vmatprep.subr.mxu0 0.0
    %3835 = vmatpush2.msra.mxu0 0.0
    %3836 = vmatprep.subr.mxu0 0.0
    %3837 = vmatpush2.msra.mxu0 0.0
    %3838 = vmatprep.subr.mxu0 0.0
    %3839 = vmatpush2.msra.mxu0 0.0
    %3840 = vmatprep.subr.mxu0 0.0
    %3841 = vmatpush2.msra.mxu0 0.0
    %3842 = vmatprep.subr.mxu0 0.0
    %3843 = vmatpush2.msra.mxu0 0.0
    %3844 = vmatprep.subr.mxu0 0.0
    %3845 = vmatpush2.msra.mxu0 0.0
    %3846 = vmatprep.subr.mxu0 0.0
    %3847 = vmatpush2.msra.mxu0 0.0
    %3848 = vmatprep.subr.mxu0 0.0
    %3849 = vmatpush2.msra.mxu0 0.0
    %3850 = vmatprep.subr.mxu0 0.0
    %3851 = vmatpush2.msra.mxu0 0.0
    %3852 = vmatprep.subr.mxu0 0.0
    %3853 = vmatpush2.msra.mxu0 0.0
    %3854 = vmatprep.subr.mxu0 0.0
    %3855 = vmatpush2.msra.mxu0 0.0
    %3856 = vmatprep.mubr.f32.mxu0 0.0
    %3857 = vmatmul.mubr.f32.gmra.mxu0 %v3487
    %v3858 = vpop.f32.mrf.mxu0
    %v3859 = vadd.f32 0.0, %v3858
    %v3860 = vpop.f32.mrf.mxu0
    %v3861 = vadd.f32 0.0, %v3860
    %3862 = vdwg.mxu0
    %3863 = vmatprep.subr.mxu0 0.0
    %3864 = vmatpush1.msra.mxu0 %v395
    %3865 = vmatprep.subr.mxu0 0.0
    %3866 = vmatpush1.msra.mxu0 %v392
    %3867 = vmatprep.subr.mxu0 0.0
    %3868 = vmatpush1.msra.mxu0 %v389
    %3869 = vmatprep.subr.mxu0 0.0
    %3870 = vmatpush1.msra.mxu0 %v386
    %3871 = vmatprep.subr.mxu0 0.0
    %3872 = vmatpush1.msra.mxu0 %v383
    %3873 = vmatprep.subr.mxu0 0.0
    %3874 = vmatpush1.msra.mxu0 %v380
    %3875 = vmatprep.subr.mxu0 0.0
    %3876 = vmatpush1.msra.mxu0 %v377
    %3877 = vmatprep.subr.mxu0 0.0
    %3878 = vmatpush1.msra.mxu0 %v374
    %3879 = vmatprep.subr.mxu0 0.0
    %3880 = vmatpush1.msra.mxu0 %v371
    %3881 = vmatprep.subr.mxu0 0.0
    %3882 = vmatpush1.msra.mxu0 %v368
    %3883 = vmatprep.subr.mxu0 0.0
    %3884 = vmatpush1.msra.mxu0 %v365
    %3885 = vmatprep.subr.mxu0 0.0
    %3886 = vmatpush1.msra.mxu0 %v362
    %3887 = vmatprep.subr.mxu0 0.0
    %3888 = vmatpush1.msra.mxu0 %v359
    %3889 = vmatprep.subr.mxu0 0.0
    %3890 = vmatpush1.msra.mxu0 %v356
    %3891 = vmatprep.subr.mxu0 0.0
    %3892 = vmatpush1.msra.mxu0 %v353
    %3893 = vmatprep.subr.mxu0 0.0
    %3894 = vmatpush1.msra.mxu0 %v350
    %3895 = vmatprep.subr.mxu0 0.0
    %3896 = vmatpush2.msra.mxu0 0.0
    %3897 = vmatprep.subr.mxu0 0.0
    %3898 = vmatpush2.msra.mxu0 0.0
    %3899 = vmatprep.subr.mxu0 0.0
    %3900 = vmatpush2.msra.mxu0 0.0
    %3901 = vmatprep.subr.mxu0 0.0
    %3902 = vmatpush2.msra.mxu0 0.0
    %3903 = vmatprep.subr.mxu0 0.0
    %3904 = vmatpush2.msra.mxu0 0.0
    %3905 = vmatprep.subr.mxu0 0.0
    %3906 = vmatpush2.msra.mxu0 0.0
    %3907 = vmatprep.subr.mxu0 0.0
    %3908 = vmatpush2.msra.mxu0 0.0
    %3909 = vmatprep.subr.mxu0 0.0
    %3910 = vmatpush2.msra.mxu0 0.0
    %3911 = vmatprep.subr.mxu0 0.0
    %3912 = vmatpush2.msra.mxu0 0.0
    %3913 = vmatprep.subr.mxu0 0.0
    %3914 = vmatpush2.msra.mxu0 0.0
    %3915 = vmatprep.subr.mxu0 0.0
    %3916 = vmatpush2.msra.mxu0 0.0
    %3917 = vmatprep.subr.mxu0 0.0
    %3918 = vmatpush2.msra.mxu0 0.0
    %3919 = vmatprep.subr.mxu0 0.0
    %3920 = vmatpush2.msra.mxu0 0.0
    %3921 = vmatprep.subr.mxu0 0.0
    %3922 = vmatpush2.msra.mxu0 0.0
    %3923 = vmatprep.subr.mxu0 0.0
    %3924 = vmatpush2.msra.mxu0 0.0
    %3925 = vmatprep.subr.mxu0 0.0
    %3926 = vmatpush2.msra.mxu0 0.0
    %3927 = vmatprep.mubr.f32.mxu0 0.0
    %3928 = vmatmul.mubr.f32.gmra.mxu0 %v3487
    %v3929 = vpop.f32.mrf.mxu0
    %v3930 = vadd.f32 0.0, %v3929
    %v3931 = vpop.f32.mrf.mxu0
    %3932 = vdwg.mxu0
    %v3933 = vadd.f32 %v239, %v3859
    %v3934 = vxor.u32 %v3933, 2147483648
    %v3935 = vmul.f32 %v3934, 1.442695
    %v3936 = vpow.pop %v3935
    %v3937 = vadd.f32 %v3936, 1.0
    %v3938 = vrcp.pop %v3937
    %v3939 = vmul.f32 1.0, %v3938
    %v3940 = vadd.f32 %v241, %v3861
    %v3941 = vxor.u32 %v3940, 2147483648
    %v3942 = vmul.f32 %v3941, 1.442695
    %v3943 = vpow.pop %v3942
    %v3944 = vadd.f32 %v3943, 1.0
    %v3945 = vrcp.pop %v3944
    %v3946 = vmul.f32 1.0, %v3945
    %v3947 = vadd.f32 %v3930, %v401
    %v3948 = vmul.f32 %v3939, %v3947
    %v3949 = vadd.f32 %v345, %v3948
    %v3950 = vtanh.pop %v3949
    %v3951 = vsub.f32 1.0, %v3946
    %v3952 = vmul.f32 %v3951, %v3950
    %v3953 = vmul.f32 %v3946, %v3487
    %v3954 = vadd.f32 %v3952, %v3953
    %3955 = vmatprep.subr.mxu0 %v449
    %3956 = vmatpush1.msra.mxu0 %v448
    %3957 = vmatprep.subr.mxu0 %v446
    %3958 = vmatpush1.msra.mxu0 %v445
    %3959 = vmatprep.subr.mxu0 %v443
    %3960 = vmatpush1.msra.mxu0 %v442
    %3961 = vmatprep.subr.mxu0 %v440
    %3962 = vmatpush1.msra.mxu0 %v439
    %3963 = vmatprep.subr.mxu0 %v437
    %3964 = vmatpush1.msra.mxu0 %v436
    %3965 = vmatprep.subr.mxu0 %v434
    %3966 = vmatpush1.msra.mxu0 %v433
    %3967 = vmatprep.subr.mxu0 %v431
    %3968 = vmatpush1.msra.mxu0 %v430
    %3969 = vmatprep.subr.mxu0 %v428
    %3970 = vmatpush1.msra.mxu0 %v427
    %3971 = vmatprep.subr.mxu0 %v425
    %3972 = vmatpush1.msra.mxu0 %v424
    %3973 = vmatprep.subr.mxu0 %v422
    %3974 = vmatpush1.msra.mxu0 %v421
    %3975 = vmatprep.subr.mxu0 %v419
    %3976 = vmatpush1.msra.mxu0 %v418
    %3977 = vmatprep.subr.mxu0 %v416
    %3978 = vmatpush1.msra.mxu0 %v415
    %3979 = vmatprep.subr.mxu0 %v413
    %3980 = vmatpush1.msra.mxu0 %v412
    %3981 = vmatprep.subr.mxu0 %v410
    %3982 = vmatpush1.msra.mxu0 %v409
    %3983 = vmatprep.subr.mxu0 %v407
    %3984 = vmatpush1.msra.mxu0 %v406
    %3985 = vmatprep.subr.mxu0 %v404
    %3986 = vmatpush1.msra.mxu0 %v403
    %3987 = vmatprep.subr.mxu0 0.0
    %3988 = vmatpush2.msra.mxu0 0.0
    %3989 = vmatprep.subr.mxu0 0.0
    %3990 = vmatpush2.msra.mxu0 0.0
    %3991 = vmatprep.subr.mxu0 0.0
    %3992 = vmatpush2.msra.mxu0 0.0
    %3993 = vmatprep.subr.mxu0 0.0
    %3994 = vmatpush2.msra.mxu0 0.0
    %3995 = vmatprep.subr.mxu0 0.0
    %3996 = vmatpush2.msra.mxu0 0.0
    %3997 = vmatprep.subr.mxu0 0.0
    %3998 = vmatpush2.msra.mxu0 0.0
    %3999 = vmatprep.subr.mxu0 0.0
    %4000 = vmatpush2.msra.mxu0 0.0
    %4001 = vmatprep.subr.mxu0 0.0
    %4002 = vmatpush2.msra.mxu0 0.0
    %4003 = vmatprep.subr.mxu0 0.0
    %4004 = vmatpush2.msra.mxu0 0.0
    %4005 = vmatprep.subr.mxu0 0.0
    %4006 = vmatpush2.msra.mxu0 0.0
    %4007 = vmatprep.subr.mxu0 0.0
    %4008 = vmatpush2.msra.mxu0 0.0
    %4009 = vmatprep.subr.mxu0 0.0
    %4010 = vmatpush2.msra.mxu0 0.0
    %4011 = vmatprep.subr.mxu0 0.0
    %4012 = vmatpush2.msra.mxu0 0.0
    %4013 = vmatprep.subr.mxu0 0.0
    %4014 = vmatpush2.msra.mxu0 0.0
    %4015 = vmatprep.subr.mxu0 0.0
    %4016 = vmatpush2.msra.mxu0 0.0
    %4017 = vmatprep.subr.mxu0 0.0
    %4018 = vmatpush2.msra.mxu0 0.0
    %4019 = vmatprep.mubr.f32.mxu0 0.0
    %4020 = vmatmul.mubr.f32.gmra.mxu0 %v3954
    %v4021 = vpop.f32.mrf.mxu0
    %v4022 = vadd.f32 %v456, %v4021
    %v4023 = vpop.f32.mrf.mxu0
    %v4024 = vadd.f32 %v460, %v4023
    %4025 = vdwg.mxu0
    %4026 = vmatprep.subr.mxu0 0.0
    %4027 = vmatpush1.msra.mxu0 %v450
    %4028 = vmatprep.subr.mxu0 0.0
    %4029 = vmatpush1.msra.mxu0 %v447
    %4030 = vmatprep.subr.mxu0 0.0
    %4031 = vmatpush1.msra.mxu0 %v444
    %4032 = vmatprep.subr.mxu0 0.0
    %4033 = vmatpush1.msra.mxu0 %v441
    %4034 = vmatprep.subr.mxu0 0.0
    %4035 = vmatpush1.msra.mxu0 %v438
    %4036 = vmatprep.subr.mxu0 0.0
    %4037 = vmatpush1.msra.mxu0 %v435
    %4038 = vmatprep.subr.mxu0 0.0
    %4039 = vmatpush1.msra.mxu0 %v432
    %4040 = vmatprep.subr.mxu0 0.0
    %4041 = vmatpush1.msra.mxu0 %v429
    %4042 = vmatprep.subr.mxu0 0.0
    %4043 = vmatpush1.msra.mxu0 %v426
    %4044 = vmatprep.subr.mxu0 0.0
    %4045 = vmatpush1.msra.mxu0 %v423
    %4046 = vmatprep.subr.mxu0 0.0
    %4047 = vmatpush1.msra.mxu0 %v420
    %4048 = vmatprep.subr.mxu0 0.0
    %4049 = vmatpush1.msra.mxu0 %v417
    %4050 = vmatprep.subr.mxu0 0.0
    %4051 = vmatpush1.msra.mxu0 %v414
    %4052 = vmatprep.subr.mxu0 0.0
    %4053 = vmatpush1.msra.mxu0 %v411
    %4054 = vmatprep.subr.mxu0 0.0
    %4055 = vmatpush1.msra.mxu0 %v408
    %4056 = vmatprep.subr.mxu0 0.0
    %4057 = vmatpush1.msra.mxu0 %v405
    %4058 = vmatprep.subr.mxu0 0.0
    %4059 = vmatpush2.msra.mxu0 0.0
    %4060 = vmatprep.subr.mxu0 0.0
    %4061 = vmatpush2.msra.mxu0 0.0
    %4062 = vmatprep.subr.mxu0 0.0
    %4063 = vmatpush2.msra.mxu0 0.0
    %4064 = vmatprep.subr.mxu0 0.0
    %4065 = vmatpush2.msra.mxu0 0.0
    %4066 = vmatprep.subr.mxu0 0.0
    %4067 = vmatpush2.msra.mxu0 0.0
    %4068 = vmatprep.subr.mxu0 0.0
    %4069 = vmatpush2.msra.mxu0 0.0
    %4070 = vmatprep.subr.mxu0 0.0
    %4071 = vmatpush2.msra.mxu0 0.0
    %4072 = vmatprep.subr.mxu0 0.0
    %4073 = vmatpush2.msra.mxu0 0.0
    %4074 = vmatprep.subr.mxu0 0.0
    %4075 = vmatpush2.msra.mxu0 0.0
    %4076 = vmatprep.subr.mxu0 0.0
    %4077 = vmatpush2.msra.mxu0 0.0
    %4078 = vmatprep.subr.mxu0 0.0
    %4079 = vmatpush2.msra.mxu0 0.0
    %4080 = vmatprep.subr.mxu0 0.0
    %4081 = vmatpush2.msra.mxu0 0.0
    %4082 = vmatprep.subr.mxu0 0.0
    %4083 = vmatpush2.msra.mxu0 0.0
    %4084 = vmatprep.subr.mxu0 0.0
    %4085 = vmatpush2.msra.mxu0 0.0
    %4086 = vmatprep.subr.mxu0 0.0
    %4087 = vmatpush2.msra.mxu0 0.0
    %4088 = vmatprep.subr.mxu0 0.0
    %4089 = vmatpush2.msra.mxu0 0.0
    %4090 = vmatprep.mubr.f32.mxu0 0.0
    %4091 = vmatmul.mubr.f32.gmra.mxu0 %v3954
    %v4092 = vpop.f32.mrf.mxu0
    %v4093 = vadd.f32 %v464, %v4092
    %v4094 = vpop.f32.mrf.mxu0
    %4095 = vdwg.mxu0
    %4096 = vmatprep.subr.mxu0 %v514
    %4097 = vmatpush1.msra.mxu0 %v513
    %4098 = vmatprep.subr.mxu0 %v511
    %4099 = vmatpush1.msra.mxu0 %v510
    %4100 = vmatprep.subr.mxu0 %v508
    %4101 = vmatpush1.msra.mxu0 %v507
    %4102 = vmatprep.subr.mxu0 %v505
    %4103 = vmatpush1.msra.mxu0 %v504
    %4104 = vmatprep.subr.mxu0 %v502
    %4105 = vmatpush1.msra.mxu0 %v501
    %4106 = vmatprep.subr.mxu0 %v499
    %4107 = vmatpush1.msra.mxu0 %v498
    %4108 = vmatprep.subr.mxu0 %v496
    %4109 = vmatpush1.msra.mxu0 %v495
    %4110 = vmatprep.subr.mxu0 %v493
    %4111 = vmatpush1.msra.mxu0 %v492
    %4112 = vmatprep.subr.mxu0 %v490
    %4113 = vmatpush1.msra.mxu0 %v489
    %4114 = vmatprep.subr.mxu0 %v487
    %4115 = vmatpush1.msra.mxu0 %v486
    %4116 = vmatprep.subr.mxu0 %v484
    %4117 = vmatpush1.msra.mxu0 %v483
    %4118 = vmatprep.subr.mxu0 %v481
    %4119 = vmatpush1.msra.mxu0 %v480
    %4120 = vmatprep.subr.mxu0 %v478
    %4121 = vmatpush1.msra.mxu0 %v477
    %4122 = vmatprep.subr.mxu0 %v475
    %4123 = vmatpush1.msra.mxu0 %v474
    %4124 = vmatprep.subr.mxu0 %v472
    %4125 = vmatpush1.msra.mxu0 %v471
    %4126 = vmatprep.subr.mxu0 %v469
    %4127 = vmatpush1.msra.mxu0 %v468
    %4128 = vmatprep.subr.mxu0 0.0
    %4129 = vmatpush2.msra.mxu0 0.0
    %4130 = vmatprep.subr.mxu0 0.0
    %4131 = vmatpush2.msra.mxu0 0.0
    %4132 = vmatprep.subr.mxu0 0.0
    %4133 = vmatpush2.msra.mxu0 0.0
    %4134 = vmatprep.subr.mxu0 0.0
    %4135 = vmatpush2.msra.mxu0 0.0
    %4136 = vmatprep.subr.mxu0 0.0
    %4137 = vmatpush2.msra.mxu0 0.0
    %4138 = vmatprep.subr.mxu0 0.0
    %4139 = vmatpush2.msra.mxu0 0.0
    %4140 = vmatprep.subr.mxu0 0.0
    %4141 = vmatpush2.msra.mxu0 0.0
    %4142 = vmatprep.subr.mxu0 0.0
    %4143 = vmatpush2.msra.mxu0 0.0
    %4144 = vmatprep.subr.mxu0 0.0
    %4145 = vmatpush2.msra.mxu0 0.0
    %4146 = vmatprep.subr.mxu0 0.0
    %4147 = vmatpush2.msra.mxu0 0.0
    %4148 = vmatprep.subr.mxu0 0.0
    %4149 = vmatpush2.msra.mxu0 0.0
    %4150 = vmatprep.subr.mxu0 0.0
    %4151 = vmatpush2.msra.mxu0 0.0
    %4152 = vmatprep.subr.mxu0 0.0
    %4153 = vmatpush2.msra.mxu0 0.0
    %4154 = vmatprep.subr.mxu0 0.0
    %4155 = vmatpush2.msra.mxu0 0.0
    %4156 = vmatprep.subr.mxu0 0.0
    %4157 = vmatpush2.msra.mxu0 0.0
    %4158 = vmatprep.subr.mxu0 0.0
    %4159 = vmatpush2.msra.mxu0 0.0
    %4160 = vmatprep.mubr.f32.mxu0 0.0
    %4161 = vmatmul.mubr.f32.gmra.mxu0 %v3791
    %v4162 = vpop.f32.mrf.mxu0
    %v4163 = vadd.f32 0.0, %v4162
    %v4164 = vpop.f32.mrf.mxu0
    %v4165 = vadd.f32 0.0, %v4164
    %4166 = vdwg.mxu0
    %4167 = vmatprep.subr.mxu0 0.0
    %4168 = vmatpush1.msra.mxu0 %v515
    %4169 = vmatprep.subr.mxu0 0.0
    %4170 = vmatpush1.msra.mxu0 %v512
    %4171 = vmatprep.subr.mxu0 0.0
    %4172 = vmatpush1.msra.mxu0 %v509
    %4173 = vmatprep.subr.mxu0 0.0
    %4174 = vmatpush1.msra.mxu0 %v506
    %4175 = vmatprep.subr.mxu0 0.0
    %4176 = vmatpush1.msra.mxu0 %v503
    %4177 = vmatprep.subr.mxu0 0.0
    %4178 = vmatpush1.msra.mxu0 %v500
    %4179 = vmatprep.subr.mxu0 0.0
    %4180 = vmatpush1.msra.mxu0 %v497
    %4181 = vmatprep.subr.mxu0 0.0
    %4182 = vmatpush1.msra.mxu0 %v494
    %4183 = vmatprep.subr.mxu0 0.0
    %4184 = vmatpush1.msra.mxu0 %v491
    %4185 = vmatprep.subr.mxu0 0.0
    %4186 = vmatpush1.msra.mxu0 %v488
    %4187 = vmatprep.subr.mxu0 0.0
    %4188 = vmatpush1.msra.mxu0 %v485
    %4189 = vmatprep.subr.mxu0 0.0
    %4190 = vmatpush1.msra.mxu0 %v482
    %4191 = vmatprep.subr.mxu0 0.0
    %4192 = vmatpush1.msra.mxu0 %v479
    %4193 = vmatprep.subr.mxu0 0.0
    %4194 = vmatpush1.msra.mxu0 %v476
    %4195 = vmatprep.subr.mxu0 0.0
    %4196 = vmatpush1.msra.mxu0 %v473
    %4197 = vmatprep.subr.mxu0 0.0
    %4198 = vmatpush1.msra.mxu0 %v470
    %4199 = vmatprep.subr.mxu0 0.0
    %4200 = vmatpush2.msra.mxu0 0.0
    %4201 = vmatprep.subr.mxu0 0.0
    %4202 = vmatpush2.msra.mxu0 0.0
    %4203 = vmatprep.subr.mxu0 0.0
    %4204 = vmatpush2.msra.mxu0 0.0
    %4205 = vmatprep.subr.mxu0 0.0
    %4206 = vmatpush2.msra.mxu0 0.0
    %4207 = vmatprep.subr.mxu0 0.0
    %4208 = vmatpush2.msra.mxu0 0.0
    %4209 = vmatprep.subr.mxu0 0.0
    %4210 = vmatpush2.msra.mxu0 0.0
    %4211 = vmatprep.subr.mxu0 0.0
    %4212 = vmatpush2.msra.mxu0 0.0
    %4213 = vmatprep.subr.mxu0 0.0
    %4214 = vmatpush2.msra.mxu0 0.0
    %4215 = vmatprep.subr.mxu0 0.0
    %4216 = vmatpush2.msra.mxu0 0.0
    %4217 = vmatprep.subr.mxu0 0.0
    %4218 = vmatpush2.msra.mxu0 0.0
    %4219 = vmatprep.subr.mxu0 0.0
    %4220 = vmatpush2.msra.mxu0 0.0
    %4221 = vmatprep.subr.mxu0 0.0
    %4222 = vmatpush2.msra.mxu0 0.0
    %4223 = vmatprep.subr.mxu0 0.0
    %4224 = vmatpush2.msra.mxu0 0.0
    %4225 = vmatprep.subr.mxu0 0.0
    %4226 = vmatpush2.msra.mxu0 0.0
    %4227 = vmatprep.subr.mxu0 0.0
    %4228 = vmatpush2.msra.mxu0 0.0
    %4229 = vmatprep.subr.mxu0 0.0
    %4230 = vmatpush2.msra.mxu0 0.0
    %4231 = vmatprep.mubr.f32.mxu0 0.0
    %4232 = vmatmul.mubr.f32.gmra.mxu0 %v3791
    %v4233 = vpop.f32.mrf.mxu0
    %v4234 = vadd.f32 0.0, %v4233
    %v4235 = vpop.f32.mrf.mxu0
    %4236 = vdwg.mxu0
    %v4237 = vadd.f32 %v4022, %v4163
    %v4238 = vxor.u32 %v4237, 2147483648
    %v4239 = vmul.f32 %v4238, 1.442695
    %v4240 = vpow.pop %v4239
    %v4241 = vadd.f32 %v4240, 1.0
    %v4242 = vrcp.pop %v4241
    %v4243 = vmul.f32 1.0, %v4242
    %v4244 = vadd.f32 %v4024, %v4165
    %v4245 = vxor.u32 %v4244, 2147483648
    %v4246 = vmul.f32 %v4245, 1.442695
    %v4247 = vpow.pop %v4246
    %v4248 = vadd.f32 %v4247, 1.0
    %v4249 = vrcp.pop %v4248
    %v4250 = vmul.f32 1.0, %v4249
    %v4251 = vadd.f32 %v4234, %v521
    %v4252 = vmul.f32 %v4243, %v4251
    %v4253 = vadd.f32 %v4093, %v4252
    %v4254 = vtanh.pop %v4253
    %v4255 = vsub.f32 1.0, %v4250
    %v4256 = vmul.f32 %v4255, %v4254
    %v4257 = vmul.f32 %v4250, %v3791
    %v4258 = vadd.f32 %v4256, %v4257
    %4259 = vst [vmem:[#allocation8] sm:$0xff] %v3954
    %4260 = vst [vmem:[#allocation8 + $0x8] sm:$0xff] %v4258
    // Predicated region
    $region50: #{tpu_custom_call.1} parent=1 // pred_check
      _
    $region51: #{tpu_custom_call.1} parent=1 // pred_check_branch
      %4262 = sbr.rel (0) target = $region53
    $region52: #{tpu_custom_call.1} parent=1 // pred_region
      %s4264 = ssub.s32 256, 256
      %4265 = vsyncadd [#allocation4], %s4264
      %s4266 = sshll.u32 [#allocation8], 4
      %s4267 = int_to_ptr.vmem [resolvable:$true] %s4266
      %4272 = dma.vmem_to_hbm [thread:$0]  %s4267, 256, %s9, [#allocation4], 128, 128, 8
    $region53: #{tpu_custom_call.1} parent=1 // pred_fallthru
      _
    // Predicated region
    $region54: #{tpu_custom_call.1} parent=1 // pred_check
      _
    $region55: #{tpu_custom_call.1} parent=1 // pred_check_branch
      %4274 = sbr.rel (0) target = $region57
    $region56: #{tpu_custom_call.1} parent=1 // pred_region
      %4275 = dma.done [#allocation4], 256
    $region57: #{tpu_custom_call.1} parent=1 // pred_fallthru
      _
    %4276 = vsyncpa [#allocation3], 1
    %4277 = vsyncpa [#allocation6], 1
    %4278 = vsyncpa [#allocation4], 1

</llo_original>
